<compile_context>
chip_gen: v5e
topology: v5e:2x2
jax: 0.10.0
libtpu: 0.0.40
codegen_flags: <defaults>
</compile_context>

<pallas_src>
import jax
import jax.numpy as jnp
from jax import lax
from jax.experimental import pallas as pl
from jax.experimental.pallas import tpu as pltpu


def _sigmoid(x):
  # exp and the approximate reciprocal both run on the EUP, keeping the hot
  # sigmoid off the VALU slots.
  return pl.reciprocal(1.0 + jnp.exp(-x), approx=True)


def _shift_next_x(a):
  # out[:, x] = a[:, x+1] for x < X-1; last plane replicates the edge so that
  # (out - a) is exactly zero there.  Leading-dim concat: no lane/sublane work.
  return jnp.concatenate([a[:, 1:], a[:, -1:]], axis=1)


def _shift_next_x_zero(a):
  # out[:, x] = a[:, x+1] for x < X-1; last plane is zero.
  return jnp.concatenate([a[:, 1:], jnp.zeros_like(a[:, :1])], axis=1)


def _shift_prev_x_zero(a):
  # out[:, x] = a[:, x-1] for x >= 1; first plane is zero.
  return jnp.concatenate([jnp.zeros_like(a[:, :1]), a[:, :-1]], axis=1)


def _binary_meanpass3d_kernel(
    # inputs (left in HBM via memory_space=pl.ANY; copied once below, so the
    # auto-pipeline does not allocate 2x double buffers for them)
    d_hbm, rx_hbm, ry_hbm, rz_hbm,
    # output (full-array VMEM block)
    out_ref,
    # VMEM scratch: resident copies of the inputs
    d_ref, rx_ref, ry_ref, rz_ref,
    # VMEM scratch: pre-shifted / pre-masked regularizer coefficients
    rxb_ref, rya_ref, ryb_ref, rza_ref, rzb_ref,
    # VMEM scratch: solver state
    u_ref, ps_ref, pt_ref, px_ref, py_ref, pz_ref, div_ref,
    # SMEM scratch: [auglag_converged, meanpass_converged]
    flags_ref):
  f32 = jnp.float32
  eps_al = f32(0.001)
  tau = f32(0.1)
  icc = f32(0.25)
  cc = f32(1.0) / icc
  damper = f32(0.5)
  eps_mp = f32(0.01)

  N, X, Y, Z = u_ref.shape
  inner_its = X + Y + Z
  kshape = (N, X, Y, Z)

  # One-time, single-buffered copies HBM -> VMEM.
  pltpu.sync_copy(d_hbm, d_ref)
  pltpu.sync_copy(rx_hbm, rx_ref)
  pltpu.sync_copy(ry_hbm, ry_ref)
  pltpu.sync_copy(rz_hbm, rz_ref)

  data = d_ref[...]
  rx = rx_ref[...]
  ry = ry_ref[...]
  rz = rz_ref[...]

  # Boundary masks along the sublane (Y) and lane (Z) axes, hoisted once.
  y_idx = lax.broadcasted_iota(jnp.int32, kshape, 2)
  z_idx = lax.broadcasted_iota(jnp.int32, kshape, 3)
  not_last_y = (y_idx < Y - 1).astype(f32)
  not_first_y = (y_idx > 0).astype(f32)
  not_last_z = (z_idx < Z - 1).astype(f32)
  not_first_z = (z_idx > 0).astype(f32)

  # Pre-shifted / pre-masked regularizer coefficients for the hot
  # marginal-energy sweeps (computed once; roll wrap values are zeroed by the
  # folded masks, so no per-iteration masking is needed in the hot loop).
  rxb_ref[...] = _shift_prev_x_zero(rx)
  rya_ref[...] = ry * not_last_y
  ryb_ref[...] = pltpu.roll(ry, 1, axis=2) * not_first_y
  rza_ref[...] = rz * not_last_z
  rzb_ref[...] = pltpu.roll(rz, 1, axis=3) * not_first_z

  cs = jnp.maximum(data, 0.0)      # torch.clamp(data, min=0)
  ct = -jnp.minimum(data, 0.0)     # -torch.clamp(data, max=0)

  zero = jnp.zeros(kshape, f32)
  ps_ref[...] = zero
  pt_ref[...] = zero
  px_ref[...] = zero
  py_ref[...] = zero
  pz_ref[...] = zero
  div_ref[...] = zero
  u_ref[...] = _sigmoid(data)

  flags_ref[0] = jnp.int32(0)
  flags_ref[1] = jnp.int32(0)

  # ------------------------------------------------------------------
  # BinaryAuglag3dFun: 100 max-flow iterations with early break (masked by a
  # convergence flag so semantics match torch's `break` exactly).  All
  # neighbour shifts are value-level; each state array gets one full,
  # unmasked store per iteration.
  # ------------------------------------------------------------------
  @pl.loop(0, 100)
  def _(it):
    @pl.when(flags_ref[0] == 0)
    def _():
      u = u_ref[...]
      ps = ps_ref[...]
      pt = pt_ref[...]
      div = div_ref[...]
      px = px_ref[...]
      py = py_ref[...]
      pz = pz_ref[...]

      g = tau * (div + pt - ps - u * icc)

      # Flow updates.  The last plane along each axis is left untouched and
      # then clamped, exactly like the reference.
      px = px + (_shift_next_x(g) - g)
      px = jnp.maximum(jnp.minimum(px, rx), -rx)
      py = py + not_last_y * (pltpu.roll(g, Y - 1, axis=2) - g)
      py = jnp.maximum(jnp.minimum(py, ry), -ry)
      pz = pz + not_last_z * (pltpu.roll(g, Z - 1, axis=3) - g)
      pz = jnp.maximum(jnp.minimum(pz, rz), -rz)

      # Divergence (first plane along each axis keeps px+py+pz unchanged).
      div = (px + py + pz
             - _shift_prev_x_zero(px)
             - not_first_y * pltpu.roll(py, 1, axis=2)
             - not_first_z * pltpu.roll(pz, 1, axis=3))

      # Source / sink capacities and multiplier update.
      ps = jnp.minimum(icc + pt + div - u * icc, cs)
      pt = jnp.minimum(ps - div + u * icc, ct)
      erru = cc * (div - ps + pt)
      u = u - erru

      px_ref[...] = px
      py_ref[...] = py
      pz_ref[...] = pz
      div_ref[...] = div
      ps_ref[...] = ps
      pt_ref[...] = pt
      u_ref[...] = u

      # Single fused reduction (== max(erru) < eps and min(erru) > -eps).
      # Evaluated every iteration to preserve the reference's exact break
      # point (checking every K iterations would run extra updates).
      flags_ref[0] = (jnp.max(jnp.abs(erru)) < eps_al).astype(jnp.int32)
      # TODO(synk): the PyTorch code raises an exception on NaN in `u`; there
      # is no exception mechanism inside a Pallas kernel, so that check is
      # omitted (NaNs simply prevent convergence of the flag).

  # m = clamp(u, 0, 1); u_ref now holds the label estimate m.
  u_ref[...] = jnp.clip(u_ref[...], 0.0, 1.0)

  def marginal_energy(m):
    # Single fused expression over the whole volume: 2*m-1 computed once, six
    # shifted neighbour terms with pre-folded coefficients, no partial stores.
    m2 = 2.0 * m - 1.0
    return (d_ref[...]
            + rx_ref[...] * _shift_next_x_zero(m2)
            + rxb_ref[...] * _shift_prev_x_zero(m2)
            + rya_ref[...] * pltpu.roll(m2, Y - 1, axis=2)
            + ryb_ref[...] * pltpu.roll(m2, 1, axis=2)
            + rza_ref[...] * pltpu.roll(m2, Z - 1, axis=3)
            + rzb_ref[...] * pltpu.roll(m2, 1, axis=3))

  # ------------------------------------------------------------------
  # Mean-field refinement: up to 100 outer sweeps of `inner_its` damped
  # sigmoid updates, with early break on convergence.
  # ------------------------------------------------------------------
  @pl.loop(0, 100)
  def _(j):
    @pl.when(flags_ref[1] == 0)
    def _():
      @pl.loop(0, inner_its)
      def _(i):
        m_old = u_ref[...]
        new_m = _sigmoid(marginal_energy(m_old))
        u_ref[...] = damper * m_old + (1.0 - damper) * new_m

        # torch computes diff = max|new_m - m_after_damping|, which equals
        # damper * max|new_m - m_old|.  Only reduce on the last inner step.
        @pl.when(i == inner_its - 1)
        def _():
          diff = damper * jnp.max(jnp.abs(new_m - m_old))
          flags_ref[1] = (diff < eps_mp).astype(jnp.int32)

  # Final `inner_its` damped updates (always executed in the reference).
  @pl.loop(0, inner_its)
  def _(i):
    m_old = u_ref[...]
    u_ref[...] = damper * m_old + (1.0 - damper) * _sigmoid(marginal_energy(m_old))

  # Output is the marginal energy of the final labeling.
  out_ref[...] = marginal_energy(u_ref[...])


def binary_meanpass3d(d, rx, ry, rz):
  """Forward pass of BinaryMeanpass3d. Inputs/outputs are NCDHW (B,C,X,Y,Z)."""
  assert d.shape == rx.shape == ry.shape == rz.shape
  B, C, X, Y, Z = d.shape
  N = B * C
  kshape = (N, X, Y, Z)

  def to_k(a):
    # Fold B*C into the leading dim: pure reshape, Z lands on the lane axis.
    return a.astype(jnp.float32).reshape(kshape)

  buf_bytes = N * X * Y * Z * 4
  # ~16 resident scratch buffers + in/out + live temporaries, with headroom.
  # TODO(synk): volumes whose resident footprint exceeds VMEM (notably v7x's
  # 64 MiB) would need an X-slab streaming variant with halo exchange.
  vmem_limit = int(min(max(26 * buf_bytes + (4 << 20), 32 << 20), 112 << 20))

  out = pl.pallas_call(
      _binary_meanpass3d_kernel,
      out_shape=jax.ShapeDtypeStruct(kshape, jnp.float32),
      grid=(1,),
      in_specs=[pl.BlockSpec(memory_space=pl.ANY)] * 4,
      out_specs=pl.BlockSpec(kshape, lambda i: (0, 0, 0, 0)),
      scratch_shapes=(
          [pltpu.VMEM(kshape, jnp.float32) for _ in range(16)]
          + [pltpu.SMEM((2,), jnp.int32)]),
      compiler_params=pltpu.CompilerParams(
          # Single grid step: the aug-lag / mean-field convergence tests are
          # global max-reductions over the whole (B*C, X, Y, Z) volume, so the
          # problem is intentionally not split across TensorCores (matches the
          # reference break semantics exactly).
          dimension_semantics=("arbitrary",),
          vmem_limit_bytes=vmem_limit),
  )(to_k(d), to_k(rx), to_k(ry), to_k(rz))
  return out.reshape(B, C, X, Y, Z)


if __name__ == "__main__":
  key = jax.random.PRNGKey(0)
  k1, k2, k3, k4 = jax.random.split(key, 4)
  # Small but lane-dense example: Z = 128 fills the TPU lane dimension.
  B, C, X, Y, Z = 2, 1, 8, 8, 128
  d = jax.random.normal(k1, (B, C, X, Y, Z), dtype=jnp.float32)
  rx = jax.random.uniform(k2, (B, C, X, Y, Z), dtype=jnp.float32) * 0.5
  ry = jax.random.uniform(k3, (B, C, X, Y, Z), dtype=jnp.float32) * 0.5
  rz = jax.random.uniform(k4, (B, C, X, Y, Z), dtype=jnp.float32) * 0.5

  out = binary_meanpass3d(d, rx, ry, rz)
  out = jax.block_until_ready(out)
  assert out.shape == (B, C, X, Y, Z)
  assert bool(jnp.all(jnp.isfinite(out)))
  print("KERNEL_OK")
</pallas_src>

<mosaic_0001>
module attributes {stable_mosaic.version = 11 : i64} {
  func.func @_binary_meanpass3d_kernel(%arg0: i32, %arg1: memref<2x8x8x128xf32, #tpu.memory_space<any>>, %arg2: memref<2x8x8x128xf32, #tpu.memory_space<any>>, %arg3: memref<2x8x8x128xf32, #tpu.memory_space<any>>, %arg4: memref<2x8x8x128xf32, #tpu.memory_space<any>>, %arg5: memref<2x8x8x128xf32, #tpu.memory_space<vmem>>, %arg6: memref<2x8x8x128xf32, #tpu.memory_space<vmem>>, %arg7: memref<2x8x8x128xf32, #tpu.memory_space<vmem>>, %arg8: memref<2x8x8x128xf32, #tpu.memory_space<vmem>>, %arg9: memref<2x8x8x128xf32, #tpu.memory_space<vmem>>, %arg10: memref<2x8x8x128xf32, #tpu.memory_space<vmem>>, %arg11: memref<2x8x8x128xf32, #tpu.memory_space<vmem>>, %arg12: memref<2x8x8x128xf32, #tpu.memory_space<vmem>>, %arg13: memref<2x8x8x128xf32, #tpu.memory_space<vmem>>, %arg14: memref<2x8x8x128xf32, #tpu.memory_space<vmem>>, %arg15: memref<2x8x8x128xf32, #tpu.memory_space<vmem>>, %arg16: memref<2x8x8x128xf32, #tpu.memory_space<vmem>>, %arg17: memref<2x8x8x128xf32, #tpu.memory_space<vmem>>, %arg18: memref<2x8x8x128xf32, #tpu.memory_space<vmem>>, %arg19: memref<2x8x8x128xf32, #tpu.memory_space<vmem>>, %arg20: memref<2x8x8x128xf32, #tpu.memory_space<vmem>>, %arg21: memref<2x8x8x128xf32, #tpu.memory_space<vmem>>, %arg22: memref<2xi32, #tpu.memory_space<smem>>) attributes {dimension_semantics = [#tpu.dimension_semantics<arbitrary>], iteration_bounds = array<i64: 1>, scalar_prefetch = 0 : i64, scratch_operands = 17 : i64, tpu.core_type = #tpu.core_type<tc>, window_params = [{}, {}, {}, {}, {pipeline_mode = #tpu.pipeline_mode<synchronous>, transform_indices = @transform_4, window_bounds = array<i64: 2, 8, 8, 128>}]} {
    %cst = arith.constant 1.000000e+00 : f32
    %cst_0 = arith.constant 2.500000e-01 : f32
    %0 = arith.divf %cst, %cst_0 : f32
    "tpu.region"() ({
      %103 = tpu.sem_alloc : memref<!tpu.dma_semaphore, #tpu.memory_space<semaphore_mem>>
      tpu.enqueue_dma source(%arg1 : memref<2x8x8x128xf32, #tpu.memory_space<any>>) target(%arg6 : memref<2x8x8x128xf32, #tpu.memory_space<vmem>>) target_semaphore(%103 : memref<!tpu.dma_semaphore, #tpu.memory_space<semaphore_mem>>)
      tpu.wait_dma2 semaphore(%103 : memref<!tpu.dma_semaphore, #tpu.memory_space<semaphore_mem>>) src(%arg1 : memref<2x8x8x128xf32, #tpu.memory_space<any>>) dst(%arg6 : memref<2x8x8x128xf32, #tpu.memory_space<vmem>>)
      tpu.yield
    }) : () -> ()
    "tpu.region"() ({
      %103 = tpu.sem_alloc : memref<!tpu.dma_semaphore, #tpu.memory_space<semaphore_mem>>
      tpu.enqueue_dma source(%arg2 : memref<2x8x8x128xf32, #tpu.memory_space<any>>) target(%arg7 : memref<2x8x8x128xf32, #tpu.memory_space<vmem>>) target_semaphore(%103 : memref<!tpu.dma_semaphore, #tpu.memory_space<semaphore_mem>>)
      tpu.wait_dma2 semaphore(%103 : memref<!tpu.dma_semaphore, #tpu.memory_space<semaphore_mem>>) src(%arg2 : memref<2x8x8x128xf32, #tpu.memory_space<any>>) dst(%arg7 : memref<2x8x8x128xf32, #tpu.memory_space<vmem>>)
      tpu.yield
    }) : () -> ()
    "tpu.region"() ({
      %103 = tpu.sem_alloc : memref<!tpu.dma_semaphore, #tpu.memory_space<semaphore_mem>>
      tpu.enqueue_dma source(%arg3 : memref<2x8x8x128xf32, #tpu.memory_space<any>>) target(%arg8 : memref<2x8x8x128xf32, #tpu.memory_space<vmem>>) target_semaphore(%103 : memref<!tpu.dma_semaphore, #tpu.memory_space<semaphore_mem>>)
      tpu.wait_dma2 semaphore(%103 : memref<!tpu.dma_semaphore, #tpu.memory_space<semaphore_mem>>) src(%arg3 : memref<2x8x8x128xf32, #tpu.memory_space<any>>) dst(%arg8 : memref<2x8x8x128xf32, #tpu.memory_space<vmem>>)
      tpu.yield
    }) : () -> ()
    "tpu.region"() ({
      %103 = tpu.sem_alloc : memref<!tpu.dma_semaphore, #tpu.memory_space<semaphore_mem>>
      tpu.enqueue_dma source(%arg4 : memref<2x8x8x128xf32, #tpu.memory_space<any>>) target(%arg9 : memref<2x8x8x128xf32, #tpu.memory_space<vmem>>) target_semaphore(%103 : memref<!tpu.dma_semaphore, #tpu.memory_space<semaphore_mem>>)
      tpu.wait_dma2 semaphore(%103 : memref<!tpu.dma_semaphore, #tpu.memory_space<semaphore_mem>>) src(%arg4 : memref<2x8x8x128xf32, #tpu.memory_space<any>>) dst(%arg9 : memref<2x8x8x128xf32, #tpu.memory_space<vmem>>)
      tpu.yield
    }) : () -> ()
    %c0 = arith.constant 0 : index
    %c0_1 = arith.constant 0 : index
    %c0_2 = arith.constant 0 : index
    %c0_3 = arith.constant 0 : index
    %1 = vector.load %arg6[%c0, %c0_1, %c0_2, %c0_3] : memref<2x8x8x128xf32, #tpu.memory_space<vmem>>, vector<2x8x8x128xf32>
    %c0_4 = arith.constant 0 : index
    %c0_5 = arith.constant 0 : index
    %c0_6 = arith.constant 0 : index
    %c0_7 = arith.constant 0 : index
    %2 = vector.load %arg7[%c0_4, %c0_5, %c0_6, %c0_7] : memref<2x8x8x128xf32, #tpu.memory_space<vmem>>, vector<2x8x8x128xf32>
    %c0_8 = arith.constant 0 : index
    %c0_9 = arith.constant 0 : index
    %c0_10 = arith.constant 0 : index
    %c0_11 = arith.constant 0 : index
    %3 = vector.load %arg8[%c0_8, %c0_9, %c0_10, %c0_11] : memref<2x8x8x128xf32, #tpu.memory_space<vmem>>, vector<2x8x8x128xf32>
    %c0_12 = arith.constant 0 : index
    %c0_13 = arith.constant 0 : index
    %c0_14 = arith.constant 0 : index
    %c0_15 = arith.constant 0 : index
    %4 = vector.load %arg9[%c0_12, %c0_13, %c0_14, %c0_15] : memref<2x8x8x128xf32, #tpu.memory_space<vmem>>, vector<2x8x8x128xf32>
    %5 = tpu.iota {dimensions = array<i32: 2>} : vector<2x8x8x128xi32>
    %6 = tpu.iota {dimensions = array<i32: 3>} : vector<2x8x8x128xi32>
    %c7_i32 = arith.constant 7 : i32
    %7 = vector.broadcast %c7_i32 : i32 to vector<2x8x8x128xi32>
    %8 = arith.cmpi slt, %5, %7 : vector<2x8x8x128xi32>
    %9 = arith.extui %8 : vector<2x8x8x128xi1> to vector<2x8x8x128xi32>
    %10 = arith.sitofp %9 : vector<2x8x8x128xi32> to vector<2x8x8x128xf32>
    %c0_i32 = arith.constant 0 : i32
    %11 = vector.broadcast %c0_i32 : i32 to vector<2x8x8x128xi32>
    %12 = arith.cmpi sgt, %5, %11 : vector<2x8x8x128xi32>
    %13 = arith.extui %12 : vector<2x8x8x128xi1> to vector<2x8x8x128xi32>
    %14 = arith.sitofp %13 : vector<2x8x8x128xi32> to vector<2x8x8x128xf32>
    %c127_i32 = arith.constant 127 : i32
    %15 = vector.broadcast %c127_i32 : i32 to vector<2x8x8x128xi32>
    %16 = arith.cmpi slt, %6, %15 : vector<2x8x8x128xi32>
    %17 = arith.extui %16 : vector<2x8x8x128xi1> to vector<2x8x8x128xi32>
    %18 = arith.sitofp %17 : vector<2x8x8x128xi32> to vector<2x8x8x128xf32>
    %c0_i32_16 = arith.constant 0 : i32
    %19 = vector.broadcast %c0_i32_16 : i32 to vector<2x8x8x128xi32>
    %20 = arith.cmpi sgt, %6, %19 : vector<2x8x8x128xi32>
    %21 = arith.extui %20 : vector<2x8x8x128xi1> to vector<2x8x8x128xi32>
    %22 = arith.sitofp %21 : vector<2x8x8x128xi32> to vector<2x8x8x128xf32>
    %cst_17 = arith.constant 0.000000e+00 : f32
    %23 = vector.broadcast %cst_17 : f32 to vector<2x1x8x128xf32>
    %24 = vector.extract_strided_slice %2 {offsets = [0, 0, 0, 0], sizes = [2, 7, 8, 128], strides = [1, 1, 1, 1]} : vector<2x8x8x128xf32> to vector<2x7x8x128xf32>
    %25 = tpu.concatenate %23, %24 in 1 : vector<2x1x8x128xf32>, vector<2x7x8x128xf32> -> vector<2x8x8x128xf32>
    %c0_18 = arith.constant 0 : index
    %c0_19 = arith.constant 0 : index
    %c0_20 = arith.constant 0 : index
    %c0_21 = arith.constant 0 : index
    %26 = vector.load %arg10[%c0_18, %c0_19, %c0_20, %c0_21] : memref<2x8x8x128xf32, #tpu.memory_space<vmem>>, vector<2x8x8x128xf32>
    tpu.vector_store %arg10[%c0_18, %c0_19, %c0_20, %c0_21], %25 {strides = array<i32>} : memref<2x8x8x128xf32, #tpu.memory_space<vmem>>, vector<2x8x8x128xf32>,
    %27 = arith.mulf %3, %10 : vector<2x8x8x128xf32>
    %c0_22 = arith.constant 0 : index
    %c0_23 = arith.constant 0 : index
    %c0_24 = arith.constant 0 : index
    %c0_25 = arith.constant 0 : index
    %28 = vector.load %arg11[%c0_22, %c0_23, %c0_24, %c0_25] : memref<2x8x8x128xf32, #tpu.memory_space<vmem>>, vector<2x8x8x128xf32>
    tpu.vector_store %arg11[%c0_22, %c0_23, %c0_24, %c0_25], %27 {strides = array<i32>} : memref<2x8x8x128xf32, #tpu.memory_space<vmem>>, vector<2x8x8x128xf32>,
    %c1_i32 = arith.constant 1 : i32
    %29 = tpu.dynamic_rotate %3 by %c1_i32 dim 2 : vector<2x8x8x128xf32>, i32 -> vector<2x8x8x128xf32>
    %30 = arith.mulf %29, %14 : vector<2x8x8x128xf32>
    %c0_26 = arith.constant 0 : index
    %c0_27 = arith.constant 0 : index
    %c0_28 = arith.constant 0 : index
    %c0_29 = arith.constant 0 : index
    %31 = vector.load %arg12[%c0_26, %c0_27, %c0_28, %c0_29] : memref<2x8x8x128xf32, #tpu.memory_space<vmem>>, vector<2x8x8x128xf32>
    tpu.vector_store %arg12[%c0_26, %c0_27, %c0_28, %c0_29], %30 {strides = array<i32>} : memref<2x8x8x128xf32, #tpu.memory_space<vmem>>, vector<2x8x8x128xf32>,
    %32 = arith.mulf %4, %18 : vector<2x8x8x128xf32>
    %c0_30 = arith.constant 0 : index
    %c0_31 = arith.constant 0 : index
    %c0_32 = arith.constant 0 : index
    %c0_33 = arith.constant 0 : index
    %33 = vector.load %arg13[%c0_30, %c0_31, %c0_32, %c0_33] : memref<2x8x8x128xf32, #tpu.memory_space<vmem>>, vector<2x8x8x128xf32>
    tpu.vector_store %arg13[%c0_30, %c0_31, %c0_32, %c0_33], %32 {strides = array<i32>} : memref<2x8x8x128xf32, #tpu.memory_space<vmem>>, vector<2x8x8x128xf32>,
    %c1_i32_34 = arith.constant 1 : i32
    %34 = tpu.dynamic_rotate %4 by %c1_i32_34 dim 3 : vector<2x8x8x128xf32>, i32 -> vector<2x8x8x128xf32>
    %35 = arith.mulf %34, %22 : vector<2x8x8x128xf32>
    %c0_35 = arith.constant 0 : index
    %c0_36 = arith.constant 0 : index
    %c0_37 = arith.constant 0 : index
    %c0_38 = arith.constant 0 : index
    %36 = vector.load %arg14[%c0_35, %c0_36, %c0_37, %c0_38] : memref<2x8x8x128xf32, #tpu.memory_space<vmem>>, vector<2x8x8x128xf32>
    tpu.vector_store %arg14[%c0_35, %c0_36, %c0_37, %c0_38], %35 {strides = array<i32>} : memref<2x8x8x128xf32, #tpu.memory_space<vmem>>, vector<2x8x8x128xf32>,
    %cst_39 = arith.constant 0.000000e+00 : f32
    %37 = vector.broadcast %cst_39 : f32 to vector<2x8x8x128xf32>
    %38 = arith.maximumf %1, %37 : vector<2x8x8x128xf32>
    %cst_40 = arith.constant 0.000000e+00 : f32
    %39 = vector.broadcast %cst_40 : f32 to vector<2x8x8x128xf32>
    %40 = arith.minimumf %1, %39 : vector<2x8x8x128xf32>
    %cst_41 = arith.constant 0.000000e+00 : f32
    %41 = vector.broadcast %cst_41 : f32 to vector<2x8x8x128xf32>
    %42 = arith.subf %41, %40 : vector<2x8x8x128xf32>
    %cst_42 = arith.constant 0.000000e+00 : f32
    %43 = vector.broadcast %cst_42 : f32 to vector<2x8x8x128xf32>
    %c0_43 = arith.constant 0 : index
    %c0_44 = arith.constant 0 : index
    %c0_45 = arith.constant 0 : index
    %c0_46 = arith.constant 0 : index
    %44 = vector.load %arg16[%c0_43, %c0_44, %c0_45, %c0_46] : memref<2x8x8x128xf32, #tpu.memory_space<vmem>>, vector<2x8x8x128xf32>
    tpu.vector_store %arg16[%c0_43, %c0_44, %c0_45, %c0_46], %43 {strides = array<i32>} : memref<2x8x8x128xf32, #tpu.memory_space<vmem>>, vector<2x8x8x128xf32>,
    %c0_47 = arith.constant 0 : index
    %c0_48 = arith.constant 0 : index
    %c0_49 = arith.constant 0 : index
    %c0_50 = arith.constant 0 : index
    %45 = vector.load %arg17[%c0_47, %c0_48, %c0_49, %c0_50] : memref<2x8x8x128xf32, #tpu.memory_space<vmem>>, vector<2x8x8x128xf32>
    tpu.vector_store %arg17[%c0_47, %c0_48, %c0_49, %c0_50], %43 {strides = array<i32>} : memref<2x8x8x128xf32, #tpu.memory_space<vmem>>, vector<2x8x8x128xf32>,
    %c0_51 = arith.constant 0 : index
    %c0_52 = arith.constant 0 : index
    %c0_53 = arith.constant 0 : index
    %c0_54 = arith.constant 0 : index
    %46 = vector.load %arg18[%c0_51, %c0_52, %c0_53, %c0_54] : memref<2x8x8x128xf32, #tpu.memory_space<vmem>>, vector<2x8x8x128xf32>
    tpu.vector_store %arg18[%c0_51, %c0_52, %c0_53, %c0_54], %43 {strides = array<i32>} : memref<2x8x8x128xf32, #tpu.memory_space<vmem>>, vector<2x8x8x128xf32>,
    %c0_55 = arith.constant 0 : index
    %c0_56 = arith.constant 0 : index
    %c0_57 = arith.constant 0 : index
    %c0_58 = arith.constant 0 : index
    %47 = vector.load %arg19[%c0_55, %c0_56, %c0_57, %c0_58] : memref<2x8x8x128xf32, #tpu.memory_space<vmem>>, vector<2x8x8x128xf32>
    tpu.vector_store %arg19[%c0_55, %c0_56, %c0_57, %c0_58], %43 {strides = array<i32>} : memref<2x8x8x128xf32, #tpu.memory_space<vmem>>, vector<2x8x8x128xf32>,
    %c0_59 = arith.constant 0 : index
    %c0_60 = arith.constant 0 : index
    %c0_61 = arith.constant 0 : index
    %c0_62 = arith.constant 0 : index
    %48 = vector.load %arg20[%c0_59, %c0_60, %c0_61, %c0_62] : memref<2x8x8x128xf32, #tpu.memory_space<vmem>>, vector<2x8x8x128xf32>
    tpu.vector_store %arg20[%c0_59, %c0_60, %c0_61, %c0_62], %43 {strides = array<i32>} : memref<2x8x8x128xf32, #tpu.memory_space<vmem>>, vector<2x8x8x128xf32>,
    %c0_63 = arith.constant 0 : index
    %c0_64 = arith.constant 0 : index
    %c0_65 = arith.constant 0 : index
    %c0_66 = arith.constant 0 : index
    %49 = vector.load %arg21[%c0_63, %c0_64, %c0_65, %c0_66] : memref<2x8x8x128xf32, #tpu.memory_space<vmem>>, vector<2x8x8x128xf32>
    tpu.vector_store %arg21[%c0_63, %c0_64, %c0_65, %c0_66], %43 {strides = array<i32>} : memref<2x8x8x128xf32, #tpu.memory_space<vmem>>, vector<2x8x8x128xf32>,
    %cst_67 = arith.constant 0.000000e+00 : f32
    %50 = vector.broadcast %cst_67 : f32 to vector<2x8x8x128xf32>
    %51 = arith.subf %50, %1 : vector<2x8x8x128xf32>
    %52 = math.exp %51 : vector<2x8x8x128xf32>
    %cst_68 = arith.constant 1.000000e+00 : f32
    %53 = vector.broadcast %cst_68 : f32 to vector<2x8x8x128xf32>
    %54 = arith.addf %53, %52 : vector<2x8x8x128xf32>
    %55 = tpu.reciprocal %54 {approx = true} : vector<2x8x8x128xf32> -> vector<2x8x8x128xf32>
    %c0_69 = arith.constant 0 : index
    %c0_70 = arith.constant 0 : index
    %c0_71 = arith.constant 0 : index
    %c0_72 = arith.constant 0 : index
    %56 = vector.load %arg15[%c0_69, %c0_70, %c0_71, %c0_72] : memref<2x8x8x128xf32, #tpu.memory_space<vmem>>, vector<2x8x8x128xf32>
    tpu.vector_store %arg15[%c0_69, %c0_70, %c0_71, %c0_72], %55 {strides = array<i32>} : memref<2x8x8x128xf32, #tpu.memory_space<vmem>>, vector<2x8x8x128xf32>,
    %c0_i32_73 = arith.constant 0 : i32
    %c0_74 = arith.constant 0 : index
    %57 = memref.load %arg22[%c0_74] : memref<2xi32, #tpu.memory_space<smem>>
    memref.store %c0_i32_73, %arg22[%c0_74] : memref<2xi32, #tpu.memory_space<smem>>
    %c0_i32_75 = arith.constant 0 : i32
    %c1 = arith.constant 1 : index
    %58 = memref.load %arg22[%c1] : memref<2xi32, #tpu.memory_space<smem>>
    memref.store %c0_i32_75, %arg22[%c1] : memref<2xi32, #tpu.memory_space<smem>>
    %cst_76 = arith.constant 2.500000e-01 : f32
    %cst_77 = arith.constant 1.000000e-01 : f32
    %cst_78 = arith.constant 1.000000e-03 : f32
    %c0_i32_79 = arith.constant 0 : i32
    %c100_i32 = arith.constant 100 : i32
    %59 = arith.addi %c0_i32_79, %c100_i32 : i32
    %c1_i32_80 = arith.constant 1 : i32
    scf.for %arg23 = %c0_i32_79 to %59 step %c1_i32_80  : i32 {
      %c0_143 = arith.constant 0 : index
      %103 = memref.load %arg22[%c0_143] : memref<2xi32, #tpu.memory_space<smem>>
      %c0_i32_144 = arith.constant 0 : i32
      %104 = arith.cmpi eq, %103, %c0_i32_144 : i32
      %105 = arith.extui %104 : i1 to i32
      %c0_i32_145 = arith.constant 0 : i32
      %106 = arith.cmpi ne, %105, %c0_i32_145 : i32
      scf.if %106 {
        %c0_146 = arith.constant 0 : index
        %c0_147 = arith.constant 0 : index
        %c0_148 = arith.constant 0 : index
        %c0_149 = arith.constant 0 : index
        %107 = vector.load %arg15[%c0_146, %c0_147, %c0_148, %c0_149] : memref<2x8x8x128xf32, #tpu.memory_space<vmem>>, vector<2x8x8x128xf32>
        %c0_150 = arith.constant 0 : index
        %c0_151 = arith.constant 0 : index
        %c0_152 = arith.constant 0 : index
        %c0_153 = arith.constant 0 : index
        %108 = vector.load %arg16[%c0_150, %c0_151, %c0_152, %c0_153] : memref<2x8x8x128xf32, #tpu.memory_space<vmem>>, vector<2x8x8x128xf32>
        %c0_154 = arith.constant 0 : index
        %c0_155 = arith.constant 0 : index
        %c0_156 = arith.constant 0 : index
        %c0_157 = arith.constant 0 : index
        %109 = vector.load %arg17[%c0_154, %c0_155, %c0_156, %c0_157] : memref<2x8x8x128xf32, #tpu.memory_space<vmem>>, vector<2x8x8x128xf32>
        %c0_158 = arith.constant 0 : index
        %c0_159 = arith.constant 0 : index
        %c0_160 = arith.constant 0 : index
        %c0_161 = arith.constant 0 : index
        %110 = vector.load %arg21[%c0_158, %c0_159, %c0_160, %c0_161] : memref<2x8x8x128xf32, #tpu.memory_space<vmem>>, vector<2x8x8x128xf32>
        %c0_162 = arith.constant 0 : index
        %c0_163 = arith.constant 0 : index
        %c0_164 = arith.constant 0 : index
        %c0_165 = arith.constant 0 : index
        %111 = vector.load %arg18[%c0_162, %c0_163, %c0_164, %c0_165] : memref<2x8x8x128xf32, #tpu.memory_space<vmem>>, vector<2x8x8x128xf32>
        %c0_166 = arith.constant 0 : index
        %c0_167 = arith.constant 0 : index
        %c0_168 = arith.constant 0 : index
        %c0_169 = arith.constant 0 : index
        %112 = vector.load %arg19[%c0_166, %c0_167, %c0_168, %c0_169] : memref<2x8x8x128xf32, #tpu.memory_space<vmem>>, vector<2x8x8x128xf32>
        %c0_170 = arith.constant 0 : index
        %c0_171 = arith.constant 0 : index
        %c0_172 = arith.constant 0 : index
        %c0_173 = arith.constant 0 : index
        %113 = vector.load %arg20[%c0_170, %c0_171, %c0_172, %c0_173] : memref<2x8x8x128xf32, #tpu.memory_space<vmem>>, vector<2x8x8x128xf32>
        %114 = arith.addf %110, %109 : vector<2x8x8x128xf32>
        %115 = arith.subf %114, %108 : vector<2x8x8x128xf32>
        %116 = vector.broadcast %cst_76 : f32 to vector<2x8x8x128xf32>
        %117 = arith.mulf %107, %116 : vector<2x8x8x128xf32>
        %118 = arith.subf %115, %117 : vector<2x8x8x128xf32>
        %119 = vector.broadcast %cst_77 : f32 to vector<2x8x8x128xf32>
        %120 = arith.mulf %119, %118 : vector<2x8x8x128xf32>
        %121 = vector.extract_strided_slice %120 {offsets = [0, 1, 0, 0], sizes = [2, 7, 8, 128], strides = [1, 1, 1, 1]} : vector<2x8x8x128xf32> to vector<2x7x8x128xf32>
        %122 = vector.extract_strided_slice %120 {offsets = [0, 7, 0, 0], sizes = [2, 1, 8, 128], strides = [1, 1, 1, 1]} : vector<2x8x8x128xf32> to vector<2x1x8x128xf32>
        %123 = tpu.concatenate %121, %122 in 1 : vector<2x7x8x128xf32>, vector<2x1x8x128xf32> -> vector<2x8x8x128xf32>
        %124 = arith.subf %123, %120 : vector<2x8x8x128xf32>
        %125 = arith.addf %111, %124 : vector<2x8x8x128xf32>
        %126 = arith.minimumf %125, %2 : vector<2x8x8x128xf32>
        %cst_174 = arith.constant 0.000000e+00 : f32
        %127 = vector.broadcast %cst_174 : f32 to vector<2x8x8x128xf32>
        %128 = arith.subf %127, %2 : vector<2x8x8x128xf32>
        %129 = arith.maximumf %126, %128 : vector<2x8x8x128xf32>
        %c7_i32_175 = arith.constant 7 : i32
        %130 = tpu.dynamic_rotate %120 by %c7_i32_175 dim 2 : vector<2x8x8x128xf32>, i32 -> vector<2x8x8x128xf32>
        %131 = arith.subf %130, %120 : vector<2x8x8x128xf32>
        %132 = arith.mulf %10, %131 : vector<2x8x8x128xf32>
        %133 = arith.addf %112, %132 : vector<2x8x8x128xf32>
        %134 = arith.minimumf %133, %3 : vector<2x8x8x128xf32>
        %cst_176 = arith.constant 0.000000e+00 : f32
        %135 = vector.broadcast %cst_176 : f32 to vector<2x8x8x128xf32>
        %136 = arith.subf %135, %3 : vector<2x8x8x128xf32>
        %137 = arith.maximumf %134, %136 : vector<2x8x8x128xf32>
        %c127_i32_177 = arith.constant 127 : i32
        %138 = tpu.dynamic_rotate %120 by %c127_i32_177 dim 3 : vector<2x8x8x128xf32>, i32 -> vector<2x8x8x128xf32>
        %139 = arith.subf %138, %120 : vector<2x8x8x128xf32>
        %140 = arith.mulf %18, %139 : vector<2x8x8x128xf32>
        %141 = arith.addf %113, %140 : vector<2x8x8x128xf32>
        %142 = arith.minimumf %141, %4 : vector<2x8x8x128xf32>
        %cst_178 = arith.constant 0.000000e+00 : f32
        %143 = vector.broadcast %cst_178 : f32 to vector<2x8x8x128xf32>
        %144 = arith.subf %143, %4 : vector<2x8x8x128xf32>
        %145 = arith.maximumf %142, %144 : vector<2x8x8x128xf32>
        %146 = arith.addf %129, %137 : vector<2x8x8x128xf32>
        %147 = arith.addf %146, %145 : vector<2x8x8x128xf32>
        %cst_179 = arith.constant 0.000000e+00 : f32
        %148 = vector.broadcast %cst_179 : f32 to vector<2x1x8x128xf32>
        %149 = vector.extract_strided_slice %129 {offsets = [0, 0, 0, 0], sizes = [2, 7, 8, 128], strides = [1, 1, 1, 1]} : vector<2x8x8x128xf32> to vector<2x7x8x128xf32>
        %150 = tpu.concatenate %148, %149 in 1 : vector<2x1x8x128xf32>, vector<2x7x8x128xf32> -> vector<2x8x8x128xf32>
        %151 = arith.subf %147, %150 : vector<2x8x8x128xf32>
        %c1_i32_180 = arith.constant 1 : i32
        %152 = tpu.dynamic_rotate %137 by %c1_i32_180 dim 2 : vector<2x8x8x128xf32>, i32 -> vector<2x8x8x128xf32>
        %153 = arith.mulf %14, %152 : vector<2x8x8x128xf32>
        %154 = arith.subf %151, %153 : vector<2x8x8x128xf32>
        %c1_i32_181 = arith.constant 1 : i32
        %155 = tpu.dynamic_rotate %145 by %c1_i32_181 dim 3 : vector<2x8x8x128xf32>, i32 -> vector<2x8x8x128xf32>
        %156 = arith.mulf %22, %155 : vector<2x8x8x128xf32>
        %157 = arith.subf %154, %156 : vector<2x8x8x128xf32>
        %158 = vector.broadcast %cst_76 : f32 to vector<2x8x8x128xf32>
        %159 = arith.addf %158, %109 : vector<2x8x8x128xf32>
        %160 = arith.addf %159, %157 : vector<2x8x8x128xf32>
        %161 = vector.broadcast %cst_76 : f32 to vector<2x8x8x128xf32>
        %162 = arith.mulf %107, %161 : vector<2x8x8x128xf32>
        %163 = arith.subf %160, %162 : vector<2x8x8x128xf32>
        %164 = arith.minimumf %163, %38 : vector<2x8x8x128xf32>
        %165 = arith.subf %164, %157 : vector<2x8x8x128xf32>
        %166 = vector.broadcast %cst_76 : f32 to vector<2x8x8x128xf32>
        %167 = arith.mulf %107, %166 : vector<2x8x8x128xf32>
        %168 = arith.addf %165, %167 : vector<2x8x8x128xf32>
        %169 = arith.minimumf %168, %42 : vector<2x8x8x128xf32>
        %170 = arith.subf %157, %164 : vector<2x8x8x128xf32>
        %171 = arith.addf %170, %169 : vector<2x8x8x128xf32>
        %172 = vector.broadcast %0 : f32 to vector<2x8x8x128xf32>
        %173 = arith.mulf %172, %171 : vector<2x8x8x128xf32>
        %174 = arith.subf %107, %173 : vector<2x8x8x128xf32>
        %c0_182 = arith.constant 0 : index
        %c0_183 = arith.constant 0 : index
        %c0_184 = arith.constant 0 : index
        %c0_185 = arith.constant 0 : index
        %175 = vector.load %arg18[%c0_182, %c0_183, %c0_184, %c0_185] : memref<2x8x8x128xf32, #tpu.memory_space<vmem>>, vector<2x8x8x128xf32>
        tpu.vector_store %arg18[%c0_182, %c0_183, %c0_184, %c0_185], %129 {strides = array<i32>} : memref<2x8x8x128xf32, #tpu.memory_space<vmem>>, vector<2x8x8x128xf32>,
        %c0_186 = arith.constant 0 : index
        %c0_187 = arith.constant 0 : index
        %c0_188 = arith.constant 0 : index
        %c0_189 = arith.constant 0 : index
        %176 = vector.load %arg19[%c0_186, %c0_187, %c0_188, %c0_189] : memref<2x8x8x128xf32, #tpu.memory_space<vmem>>, vector<2x8x8x128xf32>
        tpu.vector_store %arg19[%c0_186, %c0_187, %c0_188, %c0_189], %137 {strides = array<i32>} : memref<2x8x8x128xf32, #tpu.memory_space<vmem>>, vector<2x8x8x128xf32>,
        %c0_190 = arith.constant 0 : index
        %c0_191 = arith.constant 0 : index
        %c0_192 = arith.constant 0 : index
        %c0_193 = arith.constant 0 : index
        %177 = vector.load %arg20[%c0_190, %c0_191, %c0_192, %c0_193] : memref<2x8x8x128xf32, #tpu.memory_space<vmem>>, vector<2x8x8x128xf32>
        tpu.vector_store %arg20[%c0_190, %c0_191, %c0_192, %c0_193], %145 {strides = array<i32>} : memref<2x8x8x128xf32, #tpu.memory_space<vmem>>, vector<2x8x8x128xf32>,
        %c0_194 = arith.constant 0 : index
        %c0_195 = arith.constant 0 : index
        %c0_196 = arith.constant 0 : index
        %c0_197 = arith.constant 0 : index
        %178 = vector.load %arg21[%c0_194, %c0_195, %c0_196, %c0_197] : memref<2x8x8x128xf32, #tpu.memory_space<vmem>>, vector<2x8x8x128xf32>
        tpu.vector_store %arg21[%c0_194, %c0_195, %c0_196, %c0_197], %157 {strides = array<i32>} : memref<2x8x8x128xf32, #tpu.memory_space<vmem>>, vector<2x8x8x128xf32>,
        %c0_198 = arith.constant 0 : index
        %c0_199 = arith.constant 0 : index
        %c0_200 = arith.constant 0 : index
        %c0_201 = arith.constant 0 : index
        %179 = vector.load %arg16[%c0_198, %c0_199, %c0_200, %c0_201] : memref<2x8x8x128xf32, #tpu.memory_space<vmem>>, vector<2x8x8x128xf32>
        tpu.vector_store %arg16[%c0_198, %c0_199, %c0_200, %c0_201], %164 {strides = array<i32>} : memref<2x8x8x128xf32, #tpu.memory_space<vmem>>, vector<2x8x8x128xf32>,
        %c0_202 = arith.constant 0 : index
        %c0_203 = arith.constant 0 : index
        %c0_204 = arith.constant 0 : index
        %c0_205 = arith.constant 0 : index
        %180 = vector.load %arg17[%c0_202, %c0_203, %c0_204, %c0_205] : memref<2x8x8x128xf32, #tpu.memory_space<vmem>>, vector<2x8x8x128xf32>
        tpu.vector_store %arg17[%c0_202, %c0_203, %c0_204, %c0_205], %169 {strides = array<i32>} : memref<2x8x8x128xf32, #tpu.memory_space<vmem>>, vector<2x8x8x128xf32>,
        %c0_206 = arith.constant 0 : index
        %c0_207 = arith.constant 0 : index
        %c0_208 = arith.constant 0 : index
        %c0_209 = arith.constant 0 : index
        %181 = vector.load %arg15[%c0_206, %c0_207, %c0_208, %c0_209] : memref<2x8x8x128xf32, #tpu.memory_space<vmem>>, vector<2x8x8x128xf32>
        tpu.vector_store %arg15[%c0_206, %c0_207, %c0_208, %c0_209], %174 {strides = array<i32>} : memref<2x8x8x128xf32, #tpu.memory_space<vmem>>, vector<2x8x8x128xf32>,
        %182 = math.absf %173 : vector<2x8x8x128xf32>
        %183 = vector.shape_cast %182 : vector<2x8x8x128xf32> to vector<1x2x8x8x128xf32>
        %cst_210 = arith.constant dense<0xFF800000> : vector<1xf32>
        %184 = vector.multi_reduction <maximumf>, %183, %cst_210 [1, 2, 3, 4] : vector<1x2x8x8x128xf32> to vector<1xf32>
        %185 = vector.shape_cast %184 : vector<1xf32> to vector<1x1x1x1x1xf32>
        %186 = vector.extract %185[0, 0, 0, 0, 0] : f32 from vector<1x1x1x1x1xf32>
        %187 = arith.cmpf olt, %186, %cst_78 : f32
        %188 = arith.extui %187 : i1 to i32
        %c0_211 = arith.constant 0 : index
        %189 = memref.load %arg22[%c0_211] : memref<2xi32, #tpu.memory_space<smem>>
        memref.store %188, %arg22[%c0_211] : memref<2xi32, #tpu.memory_space<smem>>
      } else {
      }
    }
    %c0_81 = arith.constant 0 : index
    %c0_82 = arith.constant 0 : index
    %c0_83 = arith.constant 0 : index
    %c0_84 = arith.constant 0 : index
    %60 = vector.load %arg15[%c0_81, %c0_82, %c0_83, %c0_84] : memref<2x8x8x128xf32, #tpu.memory_space<vmem>>, vector<2x8x8x128xf32>
    %cst_85 = arith.constant 0.000000e+00 : f32
    %cst_86 = arith.constant 1.000000e+00 : f32
    %61 = vector.broadcast %cst_85 : f32 to vector<2x8x8x128xf32>
    %62 = arith.maximumf %61, %60 : vector<2x8x8x128xf32>
    %63 = vector.broadcast %cst_86 : f32 to vector<2x8x8x128xf32>
    %64 = arith.minimumf %63, %62 : vector<2x8x8x128xf32>
    %c0_87 = arith.constant 0 : index
    %c0_88 = arith.constant 0 : index
    %c0_89 = arith.constant 0 : index
    %c0_90 = arith.constant 0 : index
    %65 = vector.load %arg15[%c0_87, %c0_88, %c0_89, %c0_90] : memref<2x8x8x128xf32, #tpu.memory_space<vmem>>, vector<2x8x8x128xf32>
    tpu.vector_store %arg15[%c0_87, %c0_88, %c0_89, %c0_90], %64 {strides = array<i32>} : memref<2x8x8x128xf32, #tpu.memory_space<vmem>>, vector<2x8x8x128xf32>,
    %cst_91 = arith.constant 5.000000e-01 : f32
    %cst_92 = arith.constant 0.00999999977 : f32
    %c0_i32_93 = arith.constant 0 : i32
    %c100_i32_94 = arith.constant 100 : i32
    %66 = arith.addi %c0_i32_93, %c100_i32_94 : i32
    %c1_i32_95 = arith.constant 1 : i32
    scf.for %arg23 = %c0_i32_93 to %66 step %c1_i32_95  : i32 {
      %c1_143 = arith.constant 1 : index
      %103 = memref.load %arg22[%c1_143] : memref<2xi32, #tpu.memory_space<smem>>
      %c0_i32_144 = arith.constant 0 : i32
      %104 = arith.cmpi eq, %103, %c0_i32_144 : i32
      %105 = arith.extui %104 : i1 to i32
      %c0_i32_145 = arith.constant 0 : i32
      %106 = arith.cmpi ne, %105, %c0_i32_145 : i32
      scf.if %106 {
        %c0_i32_146 = arith.constant 0 : i32
        %c144_i32_147 = arith.constant 144 : i32
        %107 = arith.addi %c0_i32_146, %c144_i32_147 : i32
        %c1_i32_148 = arith.constant 1 : i32
        scf.for %arg24 = %c0_i32_146 to %107 step %c1_i32_148  : i32 {
          %c1_i32_150 = arith.constant 1 : i32
          %108 = arith.muli %arg24, %c1_i32_150 : i32
          %c0_i32_151 = arith.constant 0 : i32
          %109 = arith.addi %c0_i32_151, %108 : i32
          %c0_152 = arith.constant 0 : index
          %c0_153 = arith.constant 0 : index
          %c0_154 = arith.constant 0 : index
          %c0_155 = arith.constant 0 : index
          %110 = vector.load %arg15[%c0_152, %c0_153, %c0_154, %c0_155] : memref<2x8x8x128xf32, #tpu.memory_space<vmem>>, vector<2x8x8x128xf32>
          %cst_156 = arith.constant 2.000000e+00 : f32
          %111 = vector.broadcast %cst_156 : f32 to vector<2x8x8x128xf32>
          %112 = arith.mulf %111, %110 : vector<2x8x8x128xf32>
          %cst_157 = arith.constant 1.000000e+00 : f32
          %113 = vector.broadcast %cst_157 : f32 to vector<2x8x8x128xf32>
          %114 = arith.subf %112, %113 : vector<2x8x8x128xf32>
          %c0_158 = arith.constant 0 : index
          %c0_159 = arith.constant 0 : index
          %c0_160 = arith.constant 0 : index
          %c0_161 = arith.constant 0 : index
          %115 = vector.load %arg6[%c0_158, %c0_159, %c0_160, %c0_161] : memref<2x8x8x128xf32, #tpu.memory_space<vmem>>, vector<2x8x8x128xf32>
          %c0_162 = arith.constant 0 : index
          %c0_163 = arith.constant 0 : index
          %c0_164 = arith.constant 0 : index
          %c0_165 = arith.constant 0 : index
          %116 = vector.load %arg7[%c0_162, %c0_163, %c0_164, %c0_165] : memref<2x8x8x128xf32, #tpu.memory_space<vmem>>, vector<2x8x8x128xf32>
          %117 = vector.extract_strided_slice %114 {offsets = [0, 1, 0, 0], sizes = [2, 7, 8, 128], strides = [1, 1, 1, 1]} : vector<2x8x8x128xf32> to vector<2x7x8x128xf32>
          %cst_166 = arith.constant 0.000000e+00 : f32
          %118 = vector.broadcast %cst_166 : f32 to vector<2x1x8x128xf32>
          %119 = tpu.concatenate %117, %118 in 1 : vector<2x7x8x128xf32>, vector<2x1x8x128xf32> -> vector<2x8x8x128xf32>
          %120 = arith.mulf %116, %119 : vector<2x8x8x128xf32>
          %121 = arith.addf %115, %120 : vector<2x8x8x128xf32>
          %c0_167 = arith.constant 0 : index
          %c0_168 = arith.constant 0 : index
          %c0_169 = arith.constant 0 : index
          %c0_170 = arith.constant 0 : index
          %122 = vector.load %arg10[%c0_167, %c0_168, %c0_169, %c0_170] : memref<2x8x8x128xf32, #tpu.memory_space<vmem>>, vector<2x8x8x128xf32>
          %cst_171 = arith.constant 0.000000e+00 : f32
          %123 = vector.broadcast %cst_171 : f32 to vector<2x1x8x128xf32>
          %124 = vector.extract_strided_slice %114 {offsets = [0, 0, 0, 0], sizes = [2, 7, 8, 128], strides = [1, 1, 1, 1]} : vector<2x8x8x128xf32> to vector<2x7x8x128xf32>
          %125 = tpu.concatenate %123, %124 in 1 : vector<2x1x8x128xf32>, vector<2x7x8x128xf32> -> vector<2x8x8x128xf32>
          %126 = arith.mulf %122, %125 : vector<2x8x8x128xf32>
          %127 = arith.addf %121, %126 : vector<2x8x8x128xf32>
          %c0_172 = arith.constant 0 : index
          %c0_173 = arith.constant 0 : index
          %c0_174 = arith.constant 0 : index
          %c0_175 = arith.constant 0 : index
          %128 = vector.load %arg11[%c0_172, %c0_173, %c0_174, %c0_175] : memref<2x8x8x128xf32, #tpu.memory_space<vmem>>, vector<2x8x8x128xf32>
          %c7_i32_176 = arith.constant 7 : i32
          %129 = tpu.dynamic_rotate %114 by %c7_i32_176 dim 2 : vector<2x8x8x128xf32>, i32 -> vector<2x8x8x128xf32>
          %130 = arith.mulf %128, %129 : vector<2x8x8x128xf32>
          %131 = arith.addf %127, %130 : vector<2x8x8x128xf32>
          %c0_177 = arith.constant 0 : index
          %c0_178 = arith.constant 0 : index
          %c0_179 = arith.constant 0 : index
          %c0_180 = arith.constant 0 : index
          %132 = vector.load %arg12[%c0_177, %c0_178, %c0_179, %c0_180] : memref<2x8x8x128xf32, #tpu.memory_space<vmem>>, vector<2x8x8x128xf32>
          %c1_i32_181 = arith.constant 1 : i32
          %133 = tpu.dynamic_rotate %114 by %c1_i32_181 dim 2 : vector<2x8x8x128xf32>, i32 -> vector<2x8x8x128xf32>
          %134 = arith.mulf %132, %133 : vector<2x8x8x128xf32>
          %135 = arith.addf %131, %134 : vector<2x8x8x128xf32>
          %c0_182 = arith.constant 0 : index
          %c0_183 = arith.constant 0 : index
          %c0_184 = arith.constant 0 : index
          %c0_185 = arith.constant 0 : index
          %136 = vector.load %arg13[%c0_182, %c0_183, %c0_184, %c0_185] : memref<2x8x8x128xf32, #tpu.memory_space<vmem>>, vector<2x8x8x128xf32>
          %c127_i32_186 = arith.constant 127 : i32
          %137 = tpu.dynamic_rotate %114 by %c127_i32_186 dim 3 : vector<2x8x8x128xf32>, i32 -> vector<2x8x8x128xf32>
          %138 = arith.mulf %136, %137 : vector<2x8x8x128xf32>
          %139 = arith.addf %135, %138 : vector<2x8x8x128xf32>
          %c0_187 = arith.constant 0 : index
          %c0_188 = arith.constant 0 : index
          %c0_189 = arith.constant 0 : index
          %c0_190 = arith.constant 0 : index
          %140 = vector.load %arg14[%c0_187, %c0_188, %c0_189, %c0_190] : memref<2x8x8x128xf32, #tpu.memory_space<vmem>>, vector<2x8x8x128xf32>
          %c1_i32_191 = arith.constant 1 : i32
          %141 = tpu.dynamic_rotate %114 by %c1_i32_191 dim 3 : vector<2x8x8x128xf32>, i32 -> vector<2x8x8x128xf32>
          %142 = arith.mulf %140, %141 : vector<2x8x8x128xf32>
          %143 = arith.addf %139, %142 : vector<2x8x8x128xf32>
          %cst_192 = arith.constant 0.000000e+00 : f32
          %144 = vector.broadcast %cst_192 : f32 to vector<2x8x8x128xf32>
          %145 = arith.subf %144, %143 : vector<2x8x8x128xf32>
          %146 = math.exp %145 : vector<2x8x8x128xf32>
          %cst_193 = arith.constant 1.000000e+00 : f32
          %147 = vector.broadcast %cst_193 : f32 to vector<2x8x8x128xf32>
          %148 = arith.addf %147, %146 : vector<2x8x8x128xf32>
          %149 = tpu.reciprocal %148 {approx = true} : vector<2x8x8x128xf32> -> vector<2x8x8x128xf32>
          %150 = vector.broadcast %cst_91 : f32 to vector<2x8x8x128xf32>
          %151 = arith.mulf %150, %110 : vector<2x8x8x128xf32>
          %cst_194 = arith.constant 1.000000e+00 : f32
          %152 = arith.subf %cst_194, %cst_91 : f32
          %153 = vector.broadcast %152 : f32 to vector<2x8x8x128xf32>
          %154 = arith.mulf %153, %149 : vector<2x8x8x128xf32>
          %155 = arith.addf %151, %154 : vector<2x8x8x128xf32>
          %c0_195 = arith.constant 0 : index
          %c0_196 = arith.constant 0 : index
          %c0_197 = arith.constant 0 : index
          %c0_198 = arith.constant 0 : index
          %156 = vector.load %arg15[%c0_195, %c0_196, %c0_197, %c0_198] : memref<2x8x8x128xf32, #tpu.memory_space<vmem>>, vector<2x8x8x128xf32>
          tpu.vector_store %arg15[%c0_195, %c0_196, %c0_197, %c0_198], %155 {strides = array<i32>} : memref<2x8x8x128xf32, #tpu.memory_space<vmem>>, vector<2x8x8x128xf32>,
          %c143_i32 = arith.constant 143 : i32
          %157 = arith.cmpi eq, %109, %c143_i32 : i32
          %158 = arith.extui %157 : i1 to i32
          %c0_i32_199 = arith.constant 0 : i32
          %159 = arith.cmpi ne, %158, %c0_i32_199 : i32
          scf.if %159 {
            %160 = arith.subf %149, %110 : vector<2x8x8x128xf32>
            %161 = math.absf %160 : vector<2x8x8x128xf32>
            %162 = vector.shape_cast %161 : vector<2x8x8x128xf32> to vector<1x2x8x8x128xf32>
            %cst_200 = arith.constant dense<0xFF800000> : vector<1xf32>
            %163 = vector.multi_reduction <maximumf>, %162, %cst_200 [1, 2, 3, 4] : vector<1x2x8x8x128xf32> to vector<1xf32>
            %164 = vector.shape_cast %163 : vector<1xf32> to vector<1x1x1x1x1xf32>
            %165 = vector.extract %164[0, 0, 0, 0, 0] : f32 from vector<1x1x1x1x1xf32>
            %166 = arith.mulf %cst_91, %165 : f32
            %167 = arith.cmpf olt, %166, %cst_92 : f32
            %168 = arith.extui %167 : i1 to i32
            %c1_201 = arith.constant 1 : index
            %169 = memref.load %arg22[%c1_201] : memref<2xi32, #tpu.memory_space<smem>>
            memref.store %168, %arg22[%c1_201] : memref<2xi32, #tpu.memory_space<smem>>
          } else {
          }
        }
        %c144_i32_149 = arith.constant 144 : i32
      } else {
      }
    }
    %cst_96 = arith.constant 5.000000e-01 : f32
    %c0_i32_97 = arith.constant 0 : i32
    %c144_i32 = arith.constant 144 : i32
    %67 = arith.addi %c0_i32_97, %c144_i32 : i32
    %c1_i32_98 = arith.constant 1 : i32
    scf.for %arg23 = %c0_i32_97 to %67 step %c1_i32_98  : i32 {
      %c0_143 = arith.constant 0 : index
      %c0_144 = arith.constant 0 : index
      %c0_145 = arith.constant 0 : index
      %c0_146 = arith.constant 0 : index
      %103 = vector.load %arg15[%c0_143, %c0_144, %c0_145, %c0_146] : memref<2x8x8x128xf32, #tpu.memory_space<vmem>>, vector<2x8x8x128xf32>
      %104 = vector.broadcast %cst_96 : f32 to vector<2x8x8x128xf32>
      %105 = arith.mulf %104, %103 : vector<2x8x8x128xf32>
      %cst_147 = arith.constant 1.000000e+00 : f32
      %106 = arith.subf %cst_147, %cst_96 : f32
      %cst_148 = arith.constant 2.000000e+00 : f32
      %107 = vector.broadcast %cst_148 : f32 to vector<2x8x8x128xf32>
      %108 = arith.mulf %107, %103 : vector<2x8x8x128xf32>
      %cst_149 = arith.constant 1.000000e+00 : f32
      %109 = vector.broadcast %cst_149 : f32 to vector<2x8x8x128xf32>
      %110 = arith.subf %108, %109 : vector<2x8x8x128xf32>
      %c0_150 = arith.constant 0 : index
      %c0_151 = arith.constant 0 : index
      %c0_152 = arith.constant 0 : index
      %c0_153 = arith.constant 0 : index
      %111 = vector.load %arg6[%c0_150, %c0_151, %c0_152, %c0_153] : memref<2x8x8x128xf32, #tpu.memory_space<vmem>>, vector<2x8x8x128xf32>
      %c0_154 = arith.constant 0 : index
      %c0_155 = arith.constant 0 : index
      %c0_156 = arith.constant 0 : index
      %c0_157 = arith.constant 0 : index
      %112 = vector.load %arg7[%c0_154, %c0_155, %c0_156, %c0_157] : memref<2x8x8x128xf32, #tpu.memory_space<vmem>>, vector<2x8x8x128xf32>
      %113 = vector.extract_strided_slice %110 {offsets = [0, 1, 0, 0], sizes = [2, 7, 8, 128], strides = [1, 1, 1, 1]} : vector<2x8x8x128xf32> to vector<2x7x8x128xf32>
      %cst_158 = arith.constant 0.000000e+00 : f32
      %114 = vector.broadcast %cst_158 : f32 to vector<2x1x8x128xf32>
      %115 = tpu.concatenate %113, %114 in 1 : vector<2x7x8x128xf32>, vector<2x1x8x128xf32> -> vector<2x8x8x128xf32>
      %116 = arith.mulf %112, %115 : vector<2x8x8x128xf32>
      %117 = arith.addf %111, %116 : vector<2x8x8x128xf32>
      %c0_159 = arith.constant 0 : index
      %c0_160 = arith.constant 0 : index
      %c0_161 = arith.constant 0 : index
      %c0_162 = arith.constant 0 : index
      %118 = vector.load %arg10[%c0_159, %c0_160, %c0_161, %c0_162] : memref<2x8x8x128xf32, #tpu.memory_space<vmem>>, vector<2x8x8x128xf32>
      %cst_163 = arith.constant 0.000000e+00 : f32
      %119 = vector.broadcast %cst_163 : f32 to vector<2x1x8x128xf32>
      %120 = vector.extract_strided_slice %110 {offsets = [0, 0, 0, 0], sizes = [2, 7, 8, 128], strides = [1, 1, 1, 1]} : vector<2x8x8x128xf32> to vector<2x7x8x128xf32>
      %121 = tpu.concatenate %119, %120 in 1 : vector<2x1x8x128xf32>, vector<2x7x8x128xf32> -> vector<2x8x8x128xf32>
      %122 = arith.mulf %118, %121 : vector<2x8x8x128xf32>
      %123 = arith.addf %117, %122 : vector<2x8x8x128xf32>
      %c0_164 = arith.constant 0 : index
      %c0_165 = arith.constant 0 : index
      %c0_166 = arith.constant 0 : index
      %c0_167 = arith.constant 0 : index
      %124 = vector.load %arg11[%c0_164, %c0_165, %c0_166, %c0_167] : memref<2x8x8x128xf32, #tpu.memory_space<vmem>>, vector<2x8x8x128xf32>
      %c7_i32_168 = arith.constant 7 : i32
      %125 = tpu.dynamic_rotate %110 by %c7_i32_168 dim 2 : vector<2x8x8x128xf32>, i32 -> vector<2x8x8x128xf32>
      %126 = arith.mulf %124, %125 : vector<2x8x8x128xf32>
      %127 = arith.addf %123, %126 : vector<2x8x8x128xf32>
      %c0_169 = arith.constant 0 : index
      %c0_170 = arith.constant 0 : index
      %c0_171 = arith.constant 0 : index
      %c0_172 = arith.constant 0 : index
      %128 = vector.load %arg12[%c0_169, %c0_170, %c0_171, %c0_172] : memref<2x8x8x128xf32, #tpu.memory_space<vmem>>, vector<2x8x8x128xf32>
      %c1_i32_173 = arith.constant 1 : i32
      %129 = tpu.dynamic_rotate %110 by %c1_i32_173 dim 2 : vector<2x8x8x128xf32>, i32 -> vector<2x8x8x128xf32>
      %130 = arith.mulf %128, %129 : vector<2x8x8x128xf32>
      %131 = arith.addf %127, %130 : vector<2x8x8x128xf32>
      %c0_174 = arith.constant 0 : index
      %c0_175 = arith.constant 0 : index
      %c0_176 = arith.constant 0 : index
      %c0_177 = arith.constant 0 : index
      %132 = vector.load %arg13[%c0_174, %c0_175, %c0_176, %c0_177] : memref<2x8x8x128xf32, #tpu.memory_space<vmem>>, vector<2x8x8x128xf32>
      %c127_i32_178 = arith.constant 127 : i32
      %133 = tpu.dynamic_rotate %110 by %c127_i32_178 dim 3 : vector<2x8x8x128xf32>, i32 -> vector<2x8x8x128xf32>
      %134 = arith.mulf %132, %133 : vector<2x8x8x128xf32>
      %135 = arith.addf %131, %134 : vector<2x8x8x128xf32>
      %c0_179 = arith.constant 0 : index
      %c0_180 = arith.constant 0 : index
      %c0_181 = arith.constant 0 : index
      %c0_182 = arith.constant 0 : index
      %136 = vector.load %arg14[%c0_179, %c0_180, %c0_181, %c0_182] : memref<2x8x8x128xf32, #tpu.memory_space<vmem>>, vector<2x8x8x128xf32>
      %c1_i32_183 = arith.constant 1 : i32
      %137 = tpu.dynamic_rotate %110 by %c1_i32_183 dim 3 : vector<2x8x8x128xf32>, i32 -> vector<2x8x8x128xf32>
      %138 = arith.mulf %136, %137 : vector<2x8x8x128xf32>
      %139 = arith.addf %135, %138 : vector<2x8x8x128xf32>
      %cst_184 = arith.constant 0.000000e+00 : f32
      %140 = vector.broadcast %cst_184 : f32 to vector<2x8x8x128xf32>
      %141 = arith.subf %140, %139 : vector<2x8x8x128xf32>
      %142 = math.exp %141 : vector<2x8x8x128xf32>
      %cst_185 = arith.constant 1.000000e+00 : f32
      %143 = vector.broadcast %cst_185 : f32 to vector<2x8x8x128xf32>
      %144 = arith.addf %143, %142 : vector<2x8x8x128xf32>
      %145 = tpu.reciprocal %144 {approx = true} : vector<2x8x8x128xf32> -> vector<2x8x8x128xf32>
      %146 = vector.broadcast %106 : f32 to vector<2x8x8x128xf32>
      %147 = arith.mulf %146, %145 : vector<2x8x8x128xf32>
      %148 = arith.addf %105, %147 : vector<2x8x8x128xf32>
      %c0_186 = arith.constant 0 : index
      %c0_187 = arith.constant 0 : index
      %c0_188 = arith.constant 0 : index
      %c0_189 = arith.constant 0 : index
      %149 = vector.load %arg15[%c0_186, %c0_187, %c0_188, %c0_189] : memref<2x8x8x128xf32, #tpu.memory_space<vmem>>, vector<2x8x8x128xf32>
      tpu.vector_store %arg15[%c0_186, %c0_187, %c0_188, %c0_189], %148 {strides = array<i32>} : memref<2x8x8x128xf32, #tpu.memory_space<vmem>>, vector<2x8x8x128xf32>,
    }
    %c0_99 = arith.constant 0 : index
    %c0_100 = arith.constant 0 : index
    %c0_101 = arith.constant 0 : index
    %c0_102 = arith.constant 0 : index
    %68 = vector.load %arg15[%c0_99, %c0_100, %c0_101, %c0_102] : memref<2x8x8x128xf32, #tpu.memory_space<vmem>>, vector<2x8x8x128xf32>
    %cst_103 = arith.constant 2.000000e+00 : f32
    %69 = vector.broadcast %cst_103 : f32 to vector<2x8x8x128xf32>
    %70 = arith.mulf %69, %68 : vector<2x8x8x128xf32>
    %cst_104 = arith.constant 1.000000e+00 : f32
    %71 = vector.broadcast %cst_104 : f32 to vector<2x8x8x128xf32>
    %72 = arith.subf %70, %71 : vector<2x8x8x128xf32>
    %c0_105 = arith.constant 0 : index
    %c0_106 = arith.constant 0 : index
    %c0_107 = arith.constant 0 : index
    %c0_108 = arith.constant 0 : index
    %73 = vector.load %arg6[%c0_105, %c0_106, %c0_107, %c0_108] : memref<2x8x8x128xf32, #tpu.memory_space<vmem>>, vector<2x8x8x128xf32>
    %c0_109 = arith.constant 0 : index
    %c0_110 = arith.constant 0 : index
    %c0_111 = arith.constant 0 : index
    %c0_112 = arith.constant 0 : index
    %74 = vector.load %arg7[%c0_109, %c0_110, %c0_111, %c0_112] : memref<2x8x8x128xf32, #tpu.memory_space<vmem>>, vector<2x8x8x128xf32>
    %75 = vector.extract_strided_slice %72 {offsets = [0, 1, 0, 0], sizes = [2, 7, 8, 128], strides = [1, 1, 1, 1]} : vector<2x8x8x128xf32> to vector<2x7x8x128xf32>
    %cst_113 = arith.constant 0.000000e+00 : f32
    %76 = vector.broadcast %cst_113 : f32 to vector<2x1x8x128xf32>
    %77 = tpu.concatenate %75, %76 in 1 : vector<2x7x8x128xf32>, vector<2x1x8x128xf32> -> vector<2x8x8x128xf32>
    %78 = arith.mulf %74, %77 : vector<2x8x8x128xf32>
    %79 = arith.addf %73, %78 : vector<2x8x8x128xf32>
    %c0_114 = arith.constant 0 : index
    %c0_115 = arith.constant 0 : index
    %c0_116 = arith.constant 0 : index
    %c0_117 = arith.constant 0 : index
    %80 = vector.load %arg10[%c0_114, %c0_115, %c0_116, %c0_117] : memref<2x8x8x128xf32, #tpu.memory_space<vmem>>, vector<2x8x8x128xf32>
    %cst_118 = arith.constant 0.000000e+00 : f32
    %81 = vector.broadcast %cst_118 : f32 to vector<2x1x8x128xf32>
    %82 = vector.extract_strided_slice %72 {offsets = [0, 0, 0, 0], sizes = [2, 7, 8, 128], strides = [1, 1, 1, 1]} : vector<2x8x8x128xf32> to vector<2x7x8x128xf32>
    %83 = tpu.concatenate %81, %82 in 1 : vector<2x1x8x128xf32>, vector<2x7x8x128xf32> -> vector<2x8x8x128xf32>
    %84 = arith.mulf %80, %83 : vector<2x8x8x128xf32>
    %85 = arith.addf %79, %84 : vector<2x8x8x128xf32>
    %c0_119 = arith.constant 0 : index
    %c0_120 = arith.constant 0 : index
    %c0_121 = arith.constant 0 : index
    %c0_122 = arith.constant 0 : index
    %86 = vector.load %arg11[%c0_119, %c0_120, %c0_121, %c0_122] : memref<2x8x8x128xf32, #tpu.memory_space<vmem>>, vector<2x8x8x128xf32>
    %c7_i32_123 = arith.constant 7 : i32
    %87 = tpu.dynamic_rotate %72 by %c7_i32_123 dim 2 : vector<2x8x8x128xf32>, i32 -> vector<2x8x8x128xf32>
    %88 = arith.mulf %86, %87 : vector<2x8x8x128xf32>
    %89 = arith.addf %85, %88 : vector<2x8x8x128xf32>
    %c0_124 = arith.constant 0 : index
    %c0_125 = arith.constant 0 : index
    %c0_126 = arith.constant 0 : index
    %c0_127 = arith.constant 0 : index
    %90 = vector.load %arg12[%c0_124, %c0_125, %c0_126, %c0_127] : memref<2x8x8x128xf32, #tpu.memory_space<vmem>>, vector<2x8x8x128xf32>
    %c1_i32_128 = arith.constant 1 : i32
    %91 = tpu.dynamic_rotate %72 by %c1_i32_128 dim 2 : vector<2x8x8x128xf32>, i32 -> vector<2x8x8x128xf32>
    %92 = arith.mulf %90, %91 : vector<2x8x8x128xf32>
    %93 = arith.addf %89, %92 : vector<2x8x8x128xf32>
    %c0_129 = arith.constant 0 : index
    %c0_130 = arith.constant 0 : index
    %c0_131 = arith.constant 0 : index
    %c0_132 = arith.constant 0 : index
    %94 = vector.load %arg13[%c0_129, %c0_130, %c0_131, %c0_132] : memref<2x8x8x128xf32, #tpu.memory_space<vmem>>, vector<2x8x8x128xf32>
    %c127_i32_133 = arith.constant 127 : i32
    %95 = tpu.dynamic_rotate %72 by %c127_i32_133 dim 3 : vector<2x8x8x128xf32>, i32 -> vector<2x8x8x128xf32>
    %96 = arith.mulf %94, %95 : vector<2x8x8x128xf32>
    %97 = arith.addf %93, %96 : vector<2x8x8x128xf32>
    %c0_134 = arith.constant 0 : index
    %c0_135 = arith.constant 0 : index
    %c0_136 = arith.constant 0 : index
    %c0_137 = arith.constant 0 : index
    %98 = vector.load %arg14[%c0_134, %c0_135, %c0_136, %c0_137] : memref<2x8x8x128xf32, #tpu.memory_space<vmem>>, vector<2x8x8x128xf32>
    %c1_i32_138 = arith.constant 1 : i32
    %99 = tpu.dynamic_rotate %72 by %c1_i32_138 dim 3 : vector<2x8x8x128xf32>, i32 -> vector<2x8x8x128xf32>
    %100 = arith.mulf %98, %99 : vector<2x8x8x128xf32>
    %101 = arith.addf %97, %100 : vector<2x8x8x128xf32>
    %c0_139 = arith.constant 0 : index
    %c0_140 = arith.constant 0 : index
    %c0_141 = arith.constant 0 : index
    %c0_142 = arith.constant 0 : index
    %102 = vector.load %arg5[%c0_139, %c0_140, %c0_141, %c0_142] : memref<2x8x8x128xf32, #tpu.memory_space<vmem>>, vector<2x8x8x128xf32>
    tpu.vector_store %arg5[%c0_139, %c0_140, %c0_141, %c0_142], %101 {strides = array<i32>} : memref<2x8x8x128xf32, #tpu.memory_space<vmem>>, vector<2x8x8x128xf32>,
    return
  }
  func.func @transform_4(%arg0: i32) -> (i32, i32, i32, i32) {
    %c0_i32 = arith.constant 0 : i32
    %c0_i32_0 = arith.constant 0 : i32
    %c0_i32_1 = arith.constant 0 : i32
    %c0_i32_2 = arith.constant 0 : i32
    %c0_i32_3 = arith.constant 0 : i32
    return %c0_i32, %c0_i32_0, %c0_i32_1, %c0_i32_2 : i32, i32, i32, i32
  }
}

</mosaic_0001>

<llo_original>
// kernel: tpu_custom_call.1
$region0: #{tpu_custom_call.1}
  #allocation0 [shape = 'u32[]', space=smem, size = 0x4, offset = 0x4, fixed_abs, tag = 'smem constant byte address 0x4 - core index']
  #allocation1 [shape = 'u32[72,128]{1,0:T(1,128)}', space=vmem, size = 0x9000, scoped, tag = 'internal scratch']
  #allocation2 [shape = 'f32[2,8,8,128]{3,2,1,0:T(8,128)}', space=vmem, size = 0x10000, scoped, tag = 'scratch operand']
  #allocation3 [shape = 'f32[2,8,8,128]{3,2,1,0:T(8,128)}', space=vmem, size = 0x10000, scoped, tag = 'scratch operand']
  #allocation4 [shape = 'f32[2,8,8,128]{3,2,1,0:T(8,128)}', space=vmem, size = 0x10000, scoped, tag = 'scratch operand']
  #allocation5 [shape = 'f32[2,8,8,128]{3,2,1,0:T(8,128)}', space=vmem, size = 0x10000, scoped, tag = 'scratch operand']
  #allocation6 [shape = 'f32[2,8,8,128]{3,2,1,0:T(8,128)}', space=vmem, size = 0x10000, scoped, tag = 'scratch operand']
  #allocation7 [shape = 'f32[2,8,8,128]{3,2,1,0:T(8,128)}', space=vmem, size = 0x10000, scoped, tag = 'scratch operand']
  #allocation8 [shape = 'f32[2,8,8,128]{3,2,1,0:T(8,128)}', space=vmem, size = 0x10000, scoped, tag = 'scratch operand']
  #allocation9 [shape = 'f32[2,8,8,128]{3,2,1,0:T(8,128)}', space=vmem, size = 0x10000, scoped, tag = 'scratch operand']
  #allocation10 [shape = 'f32[2,8,8,128]{3,2,1,0:T(8,128)}', space=vmem, size = 0x10000, scoped, tag = 'scratch operand']
  #allocation11 [shape = 'f32[2,8,8,128]{3,2,1,0:T(8,128)}', space=vmem, size = 0x10000, scoped, tag = 'scratch operand']
  #allocation12 [shape = 'f32[2,8,8,128]{3,2,1,0:T(8,128)}', space=vmem, size = 0x10000, scoped, tag = 'scratch operand']
  #allocation13 [shape = 'f32[2,8,8,128]{3,2,1,0:T(8,128)}', space=vmem, size = 0x10000, scoped, tag = 'scratch operand']
  #allocation14 [shape = 'f32[2,8,8,128]{3,2,1,0:T(8,128)}', space=vmem, size = 0x10000, scoped, tag = 'scratch operand']
  #allocation15 [shape = 'f32[2,8,8,128]{3,2,1,0:T(8,128)}', space=vmem, size = 0x10000, scoped, tag = 'scratch operand']
  #allocation16 [shape = 'f32[2,8,8,128]{3,2,1,0:T(8,128)}', space=vmem, size = 0x10000, scoped, tag = 'scratch operand']
  #allocation17 [shape = 'f32[2,8,8,128]{3,2,1,0:T(8,128)}', space=vmem, size = 0x10000, scoped, tag = 'scratch operand']
  #allocation18 [shape = 's32[2]{0:T(128)}', space=smem, size = 0x200, scoped, tag = 'scratch operand']
  #allocation22 [shape = 's32[]', space=sflag, size = 0x4, offset = 0, fixed_abs, tag = 'sflag constant byte address 0x0 - dummy sync flag']
  #allocation23 [shape = 's32[]', space=sflag, size = 0x4, offset = 0, fixed_abs, tag = 'sflag constant byte address 0x0 - dummy sync flag']
  #allocation24 [shape = 'u32[]', space=smem, size = 0x4, offset = 0x44, fixed_abs, tag = 'smem constant byte address 0x44 - assertion arg 0']
  #allocation25 [shape = 'u32[]', space=smem, size = 0x4, offset = 0x48, fixed_abs, tag = 'smem constant byte address 0x48 - assertion arg 1']
  #allocation27 [shape = 's32[]', space=sflag, size = 0x4, offset = 0, fixed_abs, tag = 'sflag constant byte address 0x0 - dummy sync flag']
  #allocation28 [shape = 's32[]', space=sflag, size = 0x4, offset = 0, fixed_abs, tag = 'sflag constant byte address 0x0 - dummy sync flag']
  #allocation30 [shape = 's32[]', space=sflag, size = 0x4, offset = 0, fixed_abs, tag = 'sflag constant byte address 0x0 - dummy sync flag']
  #allocation31 [shape = 's32[]', space=sflag, size = 0x4, offset = 0, fixed_abs, tag = 'sflag constant byte address 0x0 - dummy sync flag']
  #allocation33 [shape = 's32[]', space=sflag, size = 0x4, offset = 0, fixed_abs, tag = 'sflag constant byte address 0x0 - dummy sync flag']
  #allocation34 [shape = 's32[]', space=sflag, size = 0x4, offset = 0, fixed_abs, tag = 'sflag constant byte address 0x0 - dummy sync flag']
  %s0 = inlined_call_operand.hbm [shape: f32[2,8,8,128], index: 0, kind: input, shape index: {}]
  %s1 = inlined_call_operand.hbm [shape: f32[2,8,8,128], index: 1, kind: input, shape index: {}]
  %s2 = inlined_call_operand.hbm [shape: f32[2,8,8,128], index: 2, kind: input, shape index: {}]
  %s3 = inlined_call_operand.hbm [shape: f32[2,8,8,128], index: 3, kind: input, shape index: {}]
  %s4 = inlined_call_operand.hbm [shape: f32[2,8,8,128], index: 4, kind: output, shape index: {}]
  %s5 = sld [smem:[#allocation0]]
  $region70: #{tpu_custom_call.1} parent=0
    _
  %s7 = ssub.s32 1, %s5
  %s8 = scalar_select 0, %s7, %s5
  $region1: #{tpu_custom_call.1} parent=0
    #allocation19 [shape = 'u8[65536]{0}', space=vmem, size = 0x10000, scoped, tag = 'output window, operand 0, single buffered']
    #allocation20 [shape = 's32[1]{0}', space=sflag, size = 0x4, scoped, tag = 'scoped memory for tpu_custom_call.1']
    %9 = vsyncpa [#allocation20], 0
    $region2: #{tpu_custom_call.1} parent=1
      #allocation21 [shape = 's32[1]{0}', space=sflag, size = 0x4, scoped, tag = 'scoped memory for tpu_custom_call.1']
      // Predicated region
      $region3: #{tpu_custom_call.1} parent=2 // pred_check
        _
      $region4: #{tpu_custom_call.1} parent=2 // pred_check_branch
        %11 = sbr.rel target = $region6
      $region5: #{tpu_custom_call.1} parent=2 // pred_region
        %12 = sst [smem:[#allocation24]] [#allocation23]
        %13 = sst [smem:[#allocation25]] [#allocation22]
      $region6: #{tpu_custom_call.1} parent=2 // pred_fallthru
        _
      %15 = shalt.err (0)
      %s17 = sshll.u32 %s0, 4
      %s18 = int_to_ptr.hbm [resolvable:$true] %s17
      %s19 = sshll.u32 [#allocation2], 4
      %s20 = int_to_ptr.vmem [resolvable:$true] %s19
      %22 = dma.hbm_to_vmem [thread:$0]  %s18, 2048, %s20, [#allocation21]
      %s23 = smul.u32 2, 8
      %s24 = smul.u32 %s23, 8
      %s25 = smul.u32 %s24, 1
      %s26 = sshll.u32 %s25, 4
      %27 = dma.done [#allocation21], %s26
    $region7: #{tpu_custom_call.1} parent=1
      #allocation26 [shape = 's32[1]{0}', space=sflag, size = 0x4, scoped, tag = 'scoped memory for tpu_custom_call.1']
      // Predicated region
      $region8: #{tpu_custom_call.1} parent=7 // pred_check
        _
      $region9: #{tpu_custom_call.1} parent=7 // pred_check_branch
        %29 = sbr.rel target = $region11
      $region10: #{tpu_custom_call.1} parent=7 // pred_region
        %30 = sst [smem:[#allocation24]] [#allocation28]
        %31 = sst [smem:[#allocation25]] [#allocation27]
      $region11: #{tpu_custom_call.1} parent=7 // pred_fallthru
        _
      %33 = shalt.err (0)
      %s35 = sshll.u32 %s1, 4
      %s36 = int_to_ptr.hbm [resolvable:$true] %s35
      %s37 = sshll.u32 [#allocation3], 4
      %s38 = int_to_ptr.vmem [resolvable:$true] %s37
      %40 = dma.hbm_to_vmem [thread:$0]  %s36, 2048, %s38, [#allocation26]
      %s41 = smul.u32 2, 8
      %s42 = smul.u32 %s41, 8
      %s43 = smul.u32 %s42, 1
      %s44 = sshll.u32 %s43, 4
      %45 = dma.done [#allocation26], %s44
    $region12: #{tpu_custom_call.1} parent=1
      #allocation29 [shape = 's32[1]{0}', space=sflag, size = 0x4, scoped, tag = 'scoped memory for tpu_custom_call.1']
      // Predicated region
      $region13: #{tpu_custom_call.1} parent=12 // pred_check
        _
      $region14: #{tpu_custom_call.1} parent=12 // pred_check_branch
        %47 = sbr.rel target = $region16
      $region15: #{tpu_custom_call.1} parent=12 // pred_region
        %48 = sst [smem:[#allocation24]] [#allocation31]
        %49 = sst [smem:[#allocation25]] [#allocation30]
      $region16: #{tpu_custom_call.1} parent=12 // pred_fallthru
        _
      %51 = shalt.err (0)
      %s53 = sshll.u32 %s2, 4
      %s54 = int_to_ptr.hbm [resolvable:$true] %s53
      %s55 = sshll.u32 [#allocation4], 4
      %s56 = int_to_ptr.vmem [resolvable:$true] %s55
      %58 = dma.hbm_to_vmem [thread:$0]  %s54, 2048, %s56, [#allocation29]
      %s59 = smul.u32 2, 8
      %s60 = smul.u32 %s59, 8
      %s61 = smul.u32 %s60, 1
      %s62 = sshll.u32 %s61, 4
      %63 = dma.done [#allocation29], %s62
    $region17: #{tpu_custom_call.1} parent=1
      #allocation32 [shape = 's32[1]{0}', space=sflag, size = 0x4, scoped, tag = 'scoped memory for tpu_custom_call.1']
      // Predicated region
      $region18: #{tpu_custom_call.1} parent=17 // pred_check
        _
      $region19: #{tpu_custom_call.1} parent=17 // pred_check_branch
        %65 = sbr.rel target = $region21
      $region20: #{tpu_custom_call.1} parent=17 // pred_region
        %66 = sst [smem:[#allocation24]] [#allocation34]
        %67 = sst [smem:[#allocation25]] [#allocation33]
      $region21: #{tpu_custom_call.1} parent=17 // pred_fallthru
        _
      %69 = shalt.err (0)
      %s71 = sshll.u32 %s3, 4
      %s72 = int_to_ptr.hbm [resolvable:$true] %s71
      %s73 = sshll.u32 [#allocation5], 4
      %s74 = int_to_ptr.vmem [resolvable:$true] %s73
      %76 = dma.hbm_to_vmem [thread:$0]  %s72, 2048, %s74, [#allocation32]
      %s77 = smul.u32 2, 8
      %s78 = smul.u32 %s77, 8
      %s79 = smul.u32 %s78, 1
      %s80 = sshll.u32 %s79, 4
      %81 = dma.done [#allocation32], %s80
    %v82 = vld [vmem:[#allocation2] sm:$0xff]
    %v83 = vld [vmem:[#allocation2 + $0x8] sm:$0xff]
    %v84 = vld [vmem:[#allocation2 + $0x10] sm:$0xff]
    %v85 = vld [vmem:[#allocation2 + $0x18] sm:$0xff]
    %v86 = vld [vmem:[#allocation2 + $0x20] sm:$0xff]
    %v87 = vld [vmem:[#allocation2 + $0x28] sm:$0xff]
    %v88 = vld [vmem:[#allocation2 + $0x30] sm:$0xff]
    %v89 = vld [vmem:[#allocation2 + $0x38] sm:$0xff]
    %v90 = vld [vmem:[#allocation2 + $0x40] sm:$0xff]
    %v91 = vld [vmem:[#allocation2 + $0x48] sm:$0xff]
    %v92 = vld [vmem:[#allocation2 + $0x50] sm:$0xff]
    %v93 = vld [vmem:[#allocation2 + $0x58] sm:$0xff]
    %v94 = vld [vmem:[#allocation2 + $0x60] sm:$0xff]
    %v95 = vld [vmem:[#allocation2 + $0x68] sm:$0xff]
    %v96 = vld [vmem:[#allocation2 + $0x70] sm:$0xff]
    %v97 = vld [vmem:[#allocation2 + $0x78] sm:$0xff]
    %v98 = vld [vmem:[#allocation3] sm:$0xff]
    %v99 = vld [vmem:[#allocation3 + $0x8] sm:$0xff]
    %v100 = vld [vmem:[#allocation3 + $0x10] sm:$0xff]
    %v101 = vld [vmem:[#allocation3 + $0x18] sm:$0xff]
    %v102 = vld [vmem:[#allocation3 + $0x20] sm:$0xff]
    %v103 = vld [vmem:[#allocation3 + $0x28] sm:$0xff]
    %v104 = vld [vmem:[#allocation3 + $0x30] sm:$0xff]
    %v105 = vld [vmem:[#allocation3 + $0x38] sm:$0xff]
    %v106 = vld [vmem:[#allocation3 + $0x40] sm:$0xff]
    %v107 = vld [vmem:[#allocation3 + $0x48] sm:$0xff]
    %v108 = vld [vmem:[#allocation3 + $0x50] sm:$0xff]
    %v109 = vld [vmem:[#allocation3 + $0x58] sm:$0xff]
    %v110 = vld [vmem:[#allocation3 + $0x60] sm:$0xff]
    %v111 = vld [vmem:[#allocation3 + $0x68] sm:$0xff]
    %v112 = vld [vmem:[#allocation3 + $0x70] sm:$0xff]
    %v113 = vld [vmem:[#allocation3 + $0x78] sm:$0xff]
    %v114 = vld [vmem:[#allocation4] sm:$0xff]
    %v115 = vld [vmem:[#allocation4 + $0x8] sm:$0xff]
    %v116 = vld [vmem:[#allocation4 + $0x10] sm:$0xff]
    %v117 = vld [vmem:[#allocation4 + $0x18] sm:$0xff]
    %v118 = vld [vmem:[#allocation4 + $0x20] sm:$0xff]
    %v119 = vld [vmem:[#allocation4 + $0x28] sm:$0xff]
    %v120 = vld [vmem:[#allocation4 + $0x30] sm:$0xff]
    %v121 = vld [vmem:[#allocation4 + $0x38] sm:$0xff]
    %v122 = vld [vmem:[#allocation4 + $0x40] sm:$0xff]
    %v123 = vld [vmem:[#allocation4 + $0x48] sm:$0xff]
    %v124 = vld [vmem:[#allocation4 + $0x50] sm:$0xff]
    %v125 = vld [vmem:[#allocation4 + $0x58] sm:$0xff]
    %v126 = vld [vmem:[#allocation4 + $0x60] sm:$0xff]
    %v127 = vld [vmem:[#allocation4 + $0x68] sm:$0xff]
    %v128 = vld [vmem:[#allocation4 + $0x70] sm:$0xff]
    %v129 = vld [vmem:[#allocation4 + $0x78] sm:$0xff]
    %v130 = vld [vmem:[#allocation5] sm:$0xff]
    %v131 = vld [vmem:[#allocation5 + $0x8] sm:$0xff]
    %v132 = vld [vmem:[#allocation5 + $0x10] sm:$0xff]
    %v133 = vld [vmem:[#allocation5 + $0x18] sm:$0xff]
    %v134 = vld [vmem:[#allocation5 + $0x20] sm:$0xff]
    %v135 = vld [vmem:[#allocation5 + $0x28] sm:$0xff]
    %v136 = vld [vmem:[#allocation5 + $0x30] sm:$0xff]
    %v137 = vld [vmem:[#allocation5 + $0x38] sm:$0xff]
    %v138 = vld [vmem:[#allocation5 + $0x40] sm:$0xff]
    %v139 = vld [vmem:[#allocation5 + $0x48] sm:$0xff]
    %v140 = vld [vmem:[#allocation5 + $0x50] sm:$0xff]
    %v141 = vld [vmem:[#allocation5 + $0x58] sm:$0xff]
    %v142 = vld [vmem:[#allocation5 + $0x60] sm:$0xff]
    %v143 = vld [vmem:[#allocation5 + $0x68] sm:$0xff]
    %v144 = vld [vmem:[#allocation5 + $0x70] sm:$0xff]
    %v145 = vld [vmem:[#allocation5 + $0x78] sm:$0xff]
    %v146 = vlaneseq
    %v147 = vshrl.u32 %v146, 7
    %v148 = vlaneseq
    %v149 = vand.u32 %v148, 127
    %vm150 = vcmp.lt.s32.totalorder %v147, 7
    %v151 = vsel %vm150, 1, 0
    %v152 = vcvt.s32.f32 %v151
    %vm153 = vcmp.gt.s32.totalorder %v147, 0
    %v154 = vsel %vm153, 1, 0
    %v155 = vcvt.s32.f32 %v154
    %vm156 = vcmp.lt.s32.totalorder %v149, 127
    %v157 = vsel %vm156, 1, 0
    %v158 = vcvt.s32.f32 %v157
    %vm159 = vcmp.gt.s32.totalorder %v149, 0
    %v160 = vsel %vm159, 1, 0
    %v161 = vcvt.s32.f32 %v160
    %162 = vst [vmem:[#allocation6] sm:$0xff] 0.0
    %163 = vst [vmem:[#allocation6 + $0x8] sm:$0xff] %v98
    %164 = vst [vmem:[#allocation6 + $0x10] sm:$0xff] %v99
    %165 = vst [vmem:[#allocation6 + $0x18] sm:$0xff] %v100
    %166 = vst [vmem:[#allocation6 + $0x20] sm:$0xff] %v101
    %167 = vst [vmem:[#allocation6 + $0x28] sm:$0xff] %v102
    %168 = vst [vmem:[#allocation6 + $0x30] sm:$0xff] %v103
    %169 = vst [vmem:[#allocation6 + $0x38] sm:$0xff] %v104
    %170 = vst [vmem:[#allocation6 + $0x40] sm:$0xff] 0.0
    %171 = vst [vmem:[#allocation6 + $0x48] sm:$0xff] %v106
    %172 = vst [vmem:[#allocation6 + $0x50] sm:$0xff] %v107
    %173 = vst [vmem:[#allocation6 + $0x58] sm:$0xff] %v108
    %174 = vst [vmem:[#allocation6 + $0x60] sm:$0xff] %v109
    %175 = vst [vmem:[#allocation6 + $0x68] sm:$0xff] %v110
    %176 = vst [vmem:[#allocation6 + $0x70] sm:$0xff] %v111
    %177 = vst [vmem:[#allocation6 + $0x78] sm:$0xff] %v112
    %v178 = vmul.f32 %v114, %v152
    %v179 = vmul.f32 %v115, %v152
    %v180 = vmul.f32 %v116, %v152
    %v181 = vmul.f32 %v117, %v152
    %v182 = vmul.f32 %v118, %v152
    %v183 = vmul.f32 %v119, %v152
    %v184 = vmul.f32 %v120, %v152
    %v185 = vmul.f32 %v121, %v152
    %v186 = vmul.f32 %v122, %v152
    %v187 = vmul.f32 %v123, %v152
    %v188 = vmul.f32 %v124, %v152
    %v189 = vmul.f32 %v125, %v152
    %v190 = vmul.f32 %v126, %v152
    %v191 = vmul.f32 %v127, %v152
    %v192 = vmul.f32 %v128, %v152
    %v193 = vmul.f32 %v129, %v152
    %194 = vst [vmem:[#allocation7] sm:$0xff] %v178
    %195 = vst [vmem:[#allocation7 + $0x8] sm:$0xff] %v179
    %196 = vst [vmem:[#allocation7 + $0x10] sm:$0xff] %v180
    %197 = vst [vmem:[#allocation7 + $0x18] sm:$0xff] %v181
    %198 = vst [vmem:[#allocation7 + $0x20] sm:$0xff] %v182
    %199 = vst [vmem:[#allocation7 + $0x28] sm:$0xff] %v183
    %200 = vst [vmem:[#allocation7 + $0x30] sm:$0xff] %v184
    %201 = vst [vmem:[#allocation7 + $0x38] sm:$0xff] %v185
    %202 = vst [vmem:[#allocation7 + $0x40] sm:$0xff] %v186
    %203 = vst [vmem:[#allocation7 + $0x48] sm:$0xff] %v187
    %204 = vst [vmem:[#allocation7 + $0x50] sm:$0xff] %v188
    %205 = vst [vmem:[#allocation7 + $0x58] sm:$0xff] %v189
    %206 = vst [vmem:[#allocation7 + $0x60] sm:$0xff] %v190
    %207 = vst [vmem:[#allocation7 + $0x68] sm:$0xff] %v191
    %208 = vst [vmem:[#allocation7 + $0x70] sm:$0xff] %v192
    %209 = vst [vmem:[#allocation7 + $0x78] sm:$0xff] %v193
    %v210 = vrot.slane %v114, 7
    %v211 = vrot.slane %v115, 7
    %v212 = vrot.slane %v116, 7
    %v213 = vrot.slane %v117, 7
    %v214 = vrot.slane %v118, 7
    %v215 = vrot.slane %v119, 7
    %v216 = vrot.slane %v120, 7
    %v217 = vrot.slane %v121, 7
    %v218 = vrot.slane %v122, 7
    %v219 = vrot.slane %v123, 7
    %v220 = vrot.slane %v124, 7
    %v221 = vrot.slane %v125, 7
    %v222 = vrot.slane %v126, 7
    %v223 = vrot.slane %v127, 7
    %v224 = vrot.slane %v128, 7
    %v225 = vrot.slane %v129, 7
    %v226 = vmul.f32 %v210, %v155
    %v227 = vmul.f32 %v211, %v155
    %v228 = vmul.f32 %v212, %v155
    %v229 = vmul.f32 %v213, %v155
    %v230 = vmul.f32 %v214, %v155
    %v231 = vmul.f32 %v215, %v155
    %v232 = vmul.f32 %v216, %v155
    %v233 = vmul.f32 %v217, %v155
    %v234 = vmul.f32 %v218, %v155
    %v235 = vmul.f32 %v219, %v155
    %v236 = vmul.f32 %v220, %v155
    %v237 = vmul.f32 %v221, %v155
    %v238 = vmul.f32 %v222, %v155
    %v239 = vmul.f32 %v223, %v155
    %v240 = vmul.f32 %v224, %v155
    %v241 = vmul.f32 %v225, %v155
    %242 = vst [vmem:[#allocation8] sm:$0xff] %v226
    %243 = vst [vmem:[#allocation8 + $0x8] sm:$0xff] %v227
    %244 = vst [vmem:[#allocation8 + $0x10] sm:$0xff] %v228
    %245 = vst [vmem:[#allocation8 + $0x18] sm:$0xff] %v229
    %246 = vst [vmem:[#allocation8 + $0x20] sm:$0xff] %v230
    %247 = vst [vmem:[#allocation8 + $0x28] sm:$0xff] %v231
    %248 = vst [vmem:[#allocation8 + $0x30] sm:$0xff] %v232
    %249 = vst [vmem:[#allocation8 + $0x38] sm:$0xff] %v233
    %250 = vst [vmem:[#allocation8 + $0x40] sm:$0xff] %v234
    %251 = vst [vmem:[#allocation8 + $0x48] sm:$0xff] %v235
    %252 = vst [vmem:[#allocation8 + $0x50] sm:$0xff] %v236
    %253 = vst [vmem:[#allocation8 + $0x58] sm:$0xff] %v237
    %254 = vst [vmem:[#allocation8 + $0x60] sm:$0xff] %v238
    %255 = vst [vmem:[#allocation8 + $0x68] sm:$0xff] %v239
    %256 = vst [vmem:[#allocation8 + $0x70] sm:$0xff] %v240
    %257 = vst [vmem:[#allocation8 + $0x78] sm:$0xff] %v241
    %v258 = vmul.f32 %v130, %v158
    %v259 = vmul.f32 %v131, %v158
    %v260 = vmul.f32 %v132, %v158
    %v261 = vmul.f32 %v133, %v158
    %v262 = vmul.f32 %v134, %v158
    %v263 = vmul.f32 %v135, %v158
    %v264 = vmul.f32 %v136, %v158
    %v265 = vmul.f32 %v137, %v158
    %v266 = vmul.f32 %v138, %v158
    %v267 = vmul.f32 %v139, %v158
    %v268 = vmul.f32 %v140, %v158
    %v269 = vmul.f32 %v141, %v158
    %v270 = vmul.f32 %v142, %v158
    %v271 = vmul.f32 %v143, %v158
    %v272 = vmul.f32 %v144, %v158
    %v273 = vmul.f32 %v145, %v158
    %274 = vst [vmem:[#allocation9] sm:$0xff] %v258
    %275 = vst [vmem:[#allocation9 + $0x8] sm:$0xff] %v259
    %276 = vst [vmem:[#allocation9 + $0x10] sm:$0xff] %v260
    %277 = vst [vmem:[#allocation9 + $0x18] sm:$0xff] %v261
    %278 = vst [vmem:[#allocation9 + $0x20] sm:$0xff] %v262
    %279 = vst [vmem:[#allocation9 + $0x28] sm:$0xff] %v263
    %280 = vst [vmem:[#allocation9 + $0x30] sm:$0xff] %v264
    %281 = vst [vmem:[#allocation9 + $0x38] sm:$0xff] %v265
    %282 = vst [vmem:[#allocation9 + $0x40] sm:$0xff] %v266
    %283 = vst [vmem:[#allocation9 + $0x48] sm:$0xff] %v267
    %284 = vst [vmem:[#allocation9 + $0x50] sm:$0xff] %v268
    %285 = vst [vmem:[#allocation9 + $0x58] sm:$0xff] %v269
    %286 = vst [vmem:[#allocation9 + $0x60] sm:$0xff] %v270
    %287 = vst [vmem:[#allocation9 + $0x68] sm:$0xff] %v271
    %288 = vst [vmem:[#allocation9 + $0x70] sm:$0xff] %v272
    %289 = vst [vmem:[#allocation9 + $0x78] sm:$0xff] %v273
    %290 = vrot.lane.b32.xlu0 %v130, 1
    %v291 = vpop.permute.xlu0 %290
    %292 = vrot.lane.b32.xlu0 %v131, 1
    %v293 = vpop.permute.xlu0 %292
    %294 = vrot.lane.b32.xlu0 %v132, 1
    %v295 = vpop.permute.xlu0 %294
    %296 = vrot.lane.b32.xlu0 %v133, 1
    %v297 = vpop.permute.xlu0 %296
    %298 = vrot.lane.b32.xlu0 %v134, 1
    %v299 = vpop.permute.xlu0 %298
    %300 = vrot.lane.b32.xlu0 %v135, 1
    %v301 = vpop.permute.xlu0 %300
    %302 = vrot.lane.b32.xlu0 %v136, 1
    %v303 = vpop.permute.xlu0 %302
    %304 = vrot.lane.b32.xlu0 %v137, 1
    %v305 = vpop.permute.xlu0 %304
    %306 = vrot.lane.b32.xlu0 %v138, 1
    %v307 = vpop.permute.xlu0 %306
    %308 = vrot.lane.b32.xlu0 %v139, 1
    %v309 = vpop.permute.xlu0 %308
    %310 = vrot.lane.b32.xlu0 %v140, 1
    %v311 = vpop.permute.xlu0 %310
    %312 = vrot.lane.b32.xlu0 %v141, 1
    %v313 = vpop.permute.xlu0 %312
    %314 = vrot.lane.b32.xlu0 %v142, 1
    %v315 = vpop.permute.xlu0 %314
    %316 = vrot.lane.b32.xlu0 %v143, 1
    %v317 = vpop.permute.xlu0 %316
    %318 = vrot.lane.b32.xlu0 %v144, 1
    %v319 = vpop.permute.xlu0 %318
    %320 = vrot.lane.b32.xlu0 %v145, 1
    %v321 = vpop.permute.xlu0 %320
    %v322 = vmul.f32 %v291, %v161
    %v323 = vmul.f32 %v293, %v161
    %v324 = vmul.f32 %v295, %v161
    %v325 = vmul.f32 %v297, %v161
    %v326 = vmul.f32 %v299, %v161
    %v327 = vmul.f32 %v301, %v161
    %v328 = vmul.f32 %v303, %v161
    %v329 = vmul.f32 %v305, %v161
    %v330 = vmul.f32 %v307, %v161
    %v331 = vmul.f32 %v309, %v161
    %v332 = vmul.f32 %v311, %v161
    %v333 = vmul.f32 %v313, %v161
    %v334 = vmul.f32 %v315, %v161
    %v335 = vmul.f32 %v317, %v161
    %v336 = vmul.f32 %v319, %v161
    %v337 = vmul.f32 %v321, %v161
    %338 = vst [vmem:[#allocation10] sm:$0xff] %v322
    %339 = vst [vmem:[#allocation10 + $0x8] sm:$0xff] %v323
    %340 = vst [vmem:[#allocation10 + $0x10] sm:$0xff] %v324
    %341 = vst [vmem:[#allocation10 + $0x18] sm:$0xff] %v325
    %342 = vst [vmem:[#allocation10 + $0x20] sm:$0xff] %v326
    %343 = vst [vmem:[#allocation10 + $0x28] sm:$0xff] %v327
    %344 = vst [vmem:[#allocation10 + $0x30] sm:$0xff] %v328
    %345 = vst [vmem:[#allocation10 + $0x38] sm:$0xff] %v329
    %346 = vst [vmem:[#allocation10 + $0x40] sm:$0xff] %v330
    %347 = vst [vmem:[#allocation10 + $0x48] sm:$0xff] %v331
    %348 = vst [vmem:[#allocation10 + $0x50] sm:$0xff] %v332
    %349 = vst [vmem:[#allocation10 + $0x58] sm:$0xff] %v333
    %350 = vst [vmem:[#allocation10 + $0x60] sm:$0xff] %v334
    %351 = vst [vmem:[#allocation10 + $0x68] sm:$0xff] %v335
    %352 = vst [vmem:[#allocation10 + $0x70] sm:$0xff] %v336
    %353 = vst [vmem:[#allocation10 + $0x78] sm:$0xff] %v337
    %v354 = vmax.f32 %v82, 0.0
    %v355 = vmax.f32 %v83, 0.0
    %v356 = vmax.f32 %v84, 0.0
    %v357 = vmax.f32 %v85, 0.0
    %v358 = vmax.f32 %v86, 0.0
    %v359 = vmax.f32 %v87, 0.0
    %v360 = vmax.f32 %v88, 0.0
    %v361 = vmax.f32 %v89, 0.0
    %v362 = vmax.f32 %v90, 0.0
    %v363 = vmax.f32 %v91, 0.0
    %v364 = vmax.f32 %v92, 0.0
    %v365 = vmax.f32 %v93, 0.0
    %v366 = vmax.f32 %v94, 0.0
    %v367 = vmax.f32 %v95, 0.0
    %v368 = vmax.f32 %v96, 0.0
    %v369 = vmax.f32 %v97, 0.0
    %v370 = vmin.f32 %v82, 0.0
    %v371 = vmin.f32 %v83, 0.0
    %v372 = vmin.f32 %v84, 0.0
    %v373 = vmin.f32 %v85, 0.0
    %v374 = vmin.f32 %v86, 0.0
    %v375 = vmin.f32 %v87, 0.0
    %v376 = vmin.f32 %v88, 0.0
    %v377 = vmin.f32 %v89, 0.0
    %v378 = vmin.f32 %v90, 0.0
    %v379 = vmin.f32 %v91, 0.0
    %v380 = vmin.f32 %v92, 0.0
    %v381 = vmin.f32 %v93, 0.0
    %v382 = vmin.f32 %v94, 0.0
    %v383 = vmin.f32 %v95, 0.0
    %v384 = vmin.f32 %v96, 0.0
    %v385 = vmin.f32 %v97, 0.0
    %v386 = vsub.f32 0.0, %v370
    %v387 = vsub.f32 0.0, %v371
    %v388 = vsub.f32 0.0, %v372
    %v389 = vsub.f32 0.0, %v373
    %v390 = vsub.f32 0.0, %v374
    %v391 = vsub.f32 0.0, %v375
    %v392 = vsub.f32 0.0, %v376
    %v393 = vsub.f32 0.0, %v377
    %v394 = vsub.f32 0.0, %v378
    %v395 = vsub.f32 0.0, %v379
    %v396 = vsub.f32 0.0, %v380
    %v397 = vsub.f32 0.0, %v381
    %v398 = vsub.f32 0.0, %v382
    %v399 = vsub.f32 0.0, %v383
    %v400 = vsub.f32 0.0, %v384
    %v401 = vsub.f32 0.0, %v385
    %402 = vst [vmem:[#allocation12] sm:$0xff] 0.0
    %403 = vst [vmem:[#allocation12 + $0x8] sm:$0xff] 0.0
    %404 = vst [vmem:[#allocation12 + $0x10] sm:$0xff] 0.0
    %405 = vst [vmem:[#allocation12 + $0x18] sm:$0xff] 0.0
    %406 = vst [vmem:[#allocation12 + $0x20] sm:$0xff] 0.0
    %407 = vst [vmem:[#allocation12 + $0x28] sm:$0xff] 0.0
    %408 = vst [vmem:[#allocation12 + $0x30] sm:$0xff] 0.0
    %409 = vst [vmem:[#allocation12 + $0x38] sm:$0xff] 0.0
    %410 = vst [vmem:[#allocation12 + $0x40] sm:$0xff] 0.0
    %411 = vst [vmem:[#allocation12 + $0x48] sm:$0xff] 0.0
    %412 = vst [vmem:[#allocation12 + $0x50] sm:$0xff] 0.0
    %413 = vst [vmem:[#allocation12 + $0x58] sm:$0xff] 0.0
    %414 = vst [vmem:[#allocation12 + $0x60] sm:$0xff] 0.0
    %415 = vst [vmem:[#allocation12 + $0x68] sm:$0xff] 0.0
    %416 = vst [vmem:[#allocation12 + $0x70] sm:$0xff] 0.0
    %417 = vst [vmem:[#allocation12 + $0x78] sm:$0xff] 0.0
    %418 = vst [vmem:[#allocation13] sm:$0xff] 0.0
    %419 = vst [vmem:[#allocation13 + $0x8] sm:$0xff] 0.0
    %420 = vst [vmem:[#allocation13 + $0x10] sm:$0xff] 0.0
    %421 = vst [vmem:[#allocation13 + $0x18] sm:$0xff] 0.0
    %422 = vst [vmem:[#allocation13 + $0x20] sm:$0xff] 0.0
    %423 = vst [vmem:[#allocation13 + $0x28] sm:$0xff] 0.0
    %424 = vst [vmem:[#allocation13 + $0x30] sm:$0xff] 0.0
    %425 = vst [vmem:[#allocation13 + $0x38] sm:$0xff] 0.0
    %426 = vst [vmem:[#allocation13 + $0x40] sm:$0xff] 0.0
    %427 = vst [vmem:[#allocation13 + $0x48] sm:$0xff] 0.0
    %428 = vst [vmem:[#allocation13 + $0x50] sm:$0xff] 0.0
    %429 = vst [vmem:[#allocation13 + $0x58] sm:$0xff] 0.0
    %430 = vst [vmem:[#allocation13 + $0x60] sm:$0xff] 0.0
    %431 = vst [vmem:[#allocation13 + $0x68] sm:$0xff] 0.0
    %432 = vst [vmem:[#allocation13 + $0x70] sm:$0xff] 0.0
    %433 = vst [vmem:[#allocation13 + $0x78] sm:$0xff] 0.0
    %434 = vst [vmem:[#allocation14] sm:$0xff] 0.0
    %435 = vst [vmem:[#allocation14 + $0x8] sm:$0xff] 0.0
    %436 = vst [vmem:[#allocation14 + $0x10] sm:$0xff] 0.0
    %437 = vst [vmem:[#allocation14 + $0x18] sm:$0xff] 0.0
    %438 = vst [vmem:[#allocation14 + $0x20] sm:$0xff] 0.0
    %439 = vst [vmem:[#allocation14 + $0x28] sm:$0xff] 0.0
    %440 = vst [vmem:[#allocation14 + $0x30] sm:$0xff] 0.0
    %441 = vst [vmem:[#allocation14 + $0x38] sm:$0xff] 0.0
    %442 = vst [vmem:[#allocation14 + $0x40] sm:$0xff] 0.0
    %443 = vst [vmem:[#allocation14 + $0x48] sm:$0xff] 0.0
    %444 = vst [vmem:[#allocation14 + $0x50] sm:$0xff] 0.0
    %445 = vst [vmem:[#allocation14 + $0x58] sm:$0xff] 0.0
    %446 = vst [vmem:[#allocation14 + $0x60] sm:$0xff] 0.0
    %447 = vst [vmem:[#allocation14 + $0x68] sm:$0xff] 0.0
    %448 = vst [vmem:[#allocation14 + $0x70] sm:$0xff] 0.0
    %449 = vst [vmem:[#allocation14 + $0x78] sm:$0xff] 0.0
    %450 = vst [vmem:[#allocation15] sm:$0xff] 0.0
    %451 = vst [vmem:[#allocation15 + $0x8] sm:$0xff] 0.0
    %452 = vst [vmem:[#allocation15 + $0x10] sm:$0xff] 0.0
    %453 = vst [vmem:[#allocation15 + $0x18] sm:$0xff] 0.0
    %454 = vst [vmem:[#allocation15 + $0x20] sm:$0xff] 0.0
    %455 = vst [vmem:[#allocation15 + $0x28] sm:$0xff] 0.0
    %456 = vst [vmem:[#allocation15 + $0x30] sm:$0xff] 0.0
    %457 = vst [vmem:[#allocation15 + $0x38] sm:$0xff] 0.0
    %458 = vst [vmem:[#allocation15 + $0x40] sm:$0xff] 0.0
    %459 = vst [vmem:[#allocation15 + $0x48] sm:$0xff] 0.0
    %460 = vst [vmem:[#allocation15 + $0x50] sm:$0xff] 0.0
    %461 = vst [vmem:[#allocation15 + $0x58] sm:$0xff] 0.0
    %462 = vst [vmem:[#allocation15 + $0x60] sm:$0xff] 0.0
    %463 = vst [vmem:[#allocation15 + $0x68] sm:$0xff] 0.0
    %464 = vst [vmem:[#allocation15 + $0x70] sm:$0xff] 0.0
    %465 = vst [vmem:[#allocation15 + $0x78] sm:$0xff] 0.0
    %466 = vst [vmem:[#allocation16] sm:$0xff] 0.0
    %467 = vst [vmem:[#allocation16 + $0x8] sm:$0xff] 0.0
    %468 = vst [vmem:[#allocation16 + $0x10] sm:$0xff] 0.0
    %469 = vst [vmem:[#allocation16 + $0x18] sm:$0xff] 0.0
    %470 = vst [vmem:[#allocation16 + $0x20] sm:$0xff] 0.0
    %471 = vst [vmem:[#allocation16 + $0x28] sm:$0xff] 0.0
    %472 = vst [vmem:[#allocation16 + $0x30] sm:$0xff] 0.0
    %473 = vst [vmem:[#allocation16 + $0x38] sm:$0xff] 0.0
    %474 = vst [vmem:[#allocation16 + $0x40] sm:$0xff] 0.0
    %475 = vst [vmem:[#allocation16 + $0x48] sm:$0xff] 0.0
    %476 = vst [vmem:[#allocation16 + $0x50] sm:$0xff] 0.0
    %477 = vst [vmem:[#allocation16 + $0x58] sm:$0xff] 0.0
    %478 = vst [vmem:[#allocation16 + $0x60] sm:$0xff] 0.0
    %479 = vst [vmem:[#allocation16 + $0x68] sm:$0xff] 0.0
    %480 = vst [vmem:[#allocation16 + $0x70] sm:$0xff] 0.0
    %481 = vst [vmem:[#allocation16 + $0x78] sm:$0xff] 0.0
    %482 = vst [vmem:[#allocation17] sm:$0xff] 0.0
    %483 = vst [vmem:[#allocation17 + $0x8] sm:$0xff] 0.0
    %484 = vst [vmem:[#allocation17 + $0x10] sm:$0xff] 0.0
    %485 = vst [vmem:[#allocation17 + $0x18] sm:$0xff] 0.0
    %486 = vst [vmem:[#allocation17 + $0x20] sm:$0xff] 0.0
    %487 = vst [vmem:[#allocation17 + $0x28] sm:$0xff] 0.0
    %488 = vst [vmem:[#allocation17 + $0x30] sm:$0xff] 0.0
    %489 = vst [vmem:[#allocation17 + $0x38] sm:$0xff] 0.0
    %490 = vst [vmem:[#allocation17 + $0x40] sm:$0xff] 0.0
    %491 = vst [vmem:[#allocation17 + $0x48] sm:$0xff] 0.0
    %492 = vst [vmem:[#allocation17 + $0x50] sm:$0xff] 0.0
    %493 = vst [vmem:[#allocation17 + $0x58] sm:$0xff] 0.0
    %494 = vst [vmem:[#allocation17 + $0x60] sm:$0xff] 0.0
    %495 = vst [vmem:[#allocation17 + $0x68] sm:$0xff] 0.0
    %496 = vst [vmem:[#allocation17 + $0x70] sm:$0xff] 0.0
    %497 = vst [vmem:[#allocation17 + $0x78] sm:$0xff] 0.0
    %v498 = vsub.f32 0.0, %v82
    %v499 = vsub.f32 0.0, %v83
    %v500 = vsub.f32 0.0, %v84
    %v501 = vsub.f32 0.0, %v85
    %v502 = vsub.f32 0.0, %v86
    %v503 = vsub.f32 0.0, %v87
    %v504 = vsub.f32 0.0, %v88
    %v505 = vsub.f32 0.0, %v89
    %v506 = vsub.f32 0.0, %v90
    %v507 = vsub.f32 0.0, %v91
    %v508 = vsub.f32 0.0, %v92
    %v509 = vsub.f32 0.0, %v93
    %v510 = vsub.f32 0.0, %v94
    %v511 = vsub.f32 0.0, %v95
    %v512 = vsub.f32 0.0, %v96
    %v513 = vsub.f32 0.0, %v97
    %v514 = vmul.f32 %v498, 1.442695
    %v515 = vpow.pop %v514
    %v516 = vmul.f32 %v499, 1.442695
    %v517 = vpow.pop %v516
    %v518 = vmul.f32 %v500, 1.442695
    %v519 = vpow.pop %v518
    %v520 = vmul.f32 %v501, 1.442695
    %v521 = vpow.pop %v520
    %v522 = vmul.f32 %v502, 1.442695
    %v523 = vpow.pop %v522
    %v524 = vmul.f32 %v503, 1.442695
    %v525 = vpow.pop %v524
    %v526 = vmul.f32 %v504, 1.442695
    %v527 = vpow.pop %v526
    %v528 = vmul.f32 %v505, 1.442695
    %v529 = vpow.pop %v528
    %v530 = vmul.f32 %v506, 1.442695
    %v531 = vpow.pop %v530
    %v532 = vmul.f32 %v507, 1.442695
    %v533 = vpow.pop %v532
    %v534 = vmul.f32 %v508, 1.442695
    %v535 = vpow.pop %v534
    %v536 = vmul.f32 %v509, 1.442695
    %v537 = vpow.pop %v536
    %v538 = vmul.f32 %v510, 1.442695
    %v539 = vpow.pop %v538
    %v540 = vmul.f32 %v511, 1.442695
    %v541 = vpow.pop %v540
    %v542 = vmul.f32 %v512, 1.442695
    %v543 = vpow.pop %v542
    %v544 = vmul.f32 %v513, 1.442695
    %v545 = vpow.pop %v544
    %v546 = vadd.f32 %v515, 1.0
    %v547 = vadd.f32 %v517, 1.0
    %v548 = vadd.f32 %v519, 1.0
    %v549 = vadd.f32 %v521, 1.0
    %v550 = vadd.f32 %v523, 1.0
    %v551 = vadd.f32 %v525, 1.0
    %v552 = vadd.f32 %v527, 1.0
    %v553 = vadd.f32 %v529, 1.0
    %v554 = vadd.f32 %v531, 1.0
    %v555 = vadd.f32 %v533, 1.0
    %v556 = vadd.f32 %v535, 1.0
    %v557 = vadd.f32 %v537, 1.0
    %v558 = vadd.f32 %v539, 1.0
    %v559 = vadd.f32 %v541, 1.0
    %v560 = vadd.f32 %v543, 1.0
    %v561 = vadd.f32 %v545, 1.0
    %v562 = vrcp.pop %v546
    %v563 = vrcp.pop %v547
    %v564 = vrcp.pop %v548
    %v565 = vrcp.pop %v549
    %v566 = vrcp.pop %v550
    %v567 = vrcp.pop %v551
    %v568 = vrcp.pop %v552
    %v569 = vrcp.pop %v553
    %v570 = vrcp.pop %v554
    %v571 = vrcp.pop %v555
    %v572 = vrcp.pop %v556
    %v573 = vrcp.pop %v557
    %v574 = vrcp.pop %v558
    %v575 = vrcp.pop %v559
    %v576 = vrcp.pop %v560
    %v577 = vrcp.pop %v561
    %578 = vst [vmem:[#allocation11] sm:$0xff] %v562
    %579 = vst [vmem:[#allocation11 + $0x8] sm:$0xff] %v563
    %580 = vst [vmem:[#allocation11 + $0x10] sm:$0xff] %v564
    %581 = vst [vmem:[#allocation11 + $0x18] sm:$0xff] %v565
    %582 = vst [vmem:[#allocation11 + $0x20] sm:$0xff] %v566
    %583 = vst [vmem:[#allocation11 + $0x28] sm:$0xff] %v567
    %584 = vst [vmem:[#allocation11 + $0x30] sm:$0xff] %v568
    %585 = vst [vmem:[#allocation11 + $0x38] sm:$0xff] %v569
    %586 = vst [vmem:[#allocation11 + $0x40] sm:$0xff] %v570
    %587 = vst [vmem:[#allocation11 + $0x48] sm:$0xff] %v571
    %588 = vst [vmem:[#allocation11 + $0x50] sm:$0xff] %v572
    %589 = vst [vmem:[#allocation11 + $0x58] sm:$0xff] %v573
    %590 = vst [vmem:[#allocation11 + $0x60] sm:$0xff] %v574
    %591 = vst [vmem:[#allocation11 + $0x68] sm:$0xff] %v575
    %592 = vst [vmem:[#allocation11 + $0x70] sm:$0xff] %v576
    %593 = vst [vmem:[#allocation11 + $0x78] sm:$0xff] %v577
    %s594 = scalar_lea.smem [#allocation18], 0
    %595 = sst [smem:[%s594]] 0
    %s596 = scalar_lea.smem [#allocation18], 1
    %597 = sst [smem:[%s596]] 0
    loop: start=0, step=1, limit=100
    $region22: #{tpu_custom_call.1} parent=1 // loop_pre_header
      _
    $region23: #{tpu_custom_call.1} parent=1 // loop_header
      %s599 = sphi 0, %s603
      %p600 = scmp.ge.s32.totalorder %s599, 100
    $region24: #{tpu_custom_call.1} parent=1 // loop_header_branch
      %602 = sbr.rel (%p600) target = $region28
    $region25: #{tpu_custom_call.1} parent=1 // loop_body
      %s604 = sld [smem:[#allocation18]]
      %p605 = scmp.eq.s32.totalorder %s604, 0
      // Predicated region
      $region29: #{tpu_custom_call.1} parent=25 // pred_check
        %p606 = pneg %p605
      $region30: #{tpu_custom_call.1} parent=25 // pred_check_branch
        %608 = sbr.rel (%p606) target = $region32
      $region31: #{tpu_custom_call.1} parent=25 // pred_region
        %v609 = vld [vmem:[#allocation11] sm:$0xff]
        %v610 = vld [vmem:[#allocation11 + $0x8] sm:$0xff]
        %v611 = vld [vmem:[#allocation11 + $0x10] sm:$0xff]
        %v612 = vld [vmem:[#allocation11 + $0x18] sm:$0xff]
        %v613 = vld [vmem:[#allocation11 + $0x20] sm:$0xff]
        %v614 = vld [vmem:[#allocation11 + $0x28] sm:$0xff]
        %v615 = vld [vmem:[#allocation11 + $0x30] sm:$0xff]
        %v616 = vld [vmem:[#allocation11 + $0x38] sm:$0xff]
        %v617 = vld [vmem:[#allocation11 + $0x40] sm:$0xff]
        %v618 = vld [vmem:[#allocation11 + $0x48] sm:$0xff]
        %v619 = vld [vmem:[#allocation11 + $0x50] sm:$0xff]
        %v620 = vld [vmem:[#allocation11 + $0x58] sm:$0xff]
        %v621 = vld [vmem:[#allocation11 + $0x60] sm:$0xff]
        %v622 = vld [vmem:[#allocation11 + $0x68] sm:$0xff]
        %v623 = vld [vmem:[#allocation11 + $0x70] sm:$0xff]
        %v624 = vld [vmem:[#allocation11 + $0x78] sm:$0xff]
        %v625 = vld [vmem:[#allocation12] sm:$0xff]
        %v626 = vld [vmem:[#allocation12 + $0x8] sm:$0xff]
        %v627 = vld [vmem:[#allocation12 + $0x10] sm:$0xff]
        %v628 = vld [vmem:[#allocation12 + $0x18] sm:$0xff]
        %v629 = vld [vmem:[#allocation12 + $0x20] sm:$0xff]
        %v630 = vld [vmem:[#allocation12 + $0x28] sm:$0xff]
        %v631 = vld [vmem:[#allocation12 + $0x30] sm:$0xff]
        %v632 = vld [vmem:[#allocation12 + $0x38] sm:$0xff]
        %v633 = vld [vmem:[#allocation12 + $0x40] sm:$0xff]
        %v634 = vld [vmem:[#allocation12 + $0x48] sm:$0xff]
        %v635 = vld [vmem:[#allocation12 + $0x50] sm:$0xff]
        %v636 = vld [vmem:[#allocation12 + $0x58] sm:$0xff]
        %v637 = vld [vmem:[#allocation12 + $0x60] sm:$0xff]
        %v638 = vld [vmem:[#allocation12 + $0x68] sm:$0xff]
        %v639 = vld [vmem:[#allocation12 + $0x70] sm:$0xff]
        %v640 = vld [vmem:[#allocation12 + $0x78] sm:$0xff]
        %v641 = vld [vmem:[#allocation13] sm:$0xff]
        %v642 = vld [vmem:[#allocation13 + $0x8] sm:$0xff]
        %v643 = vld [vmem:[#allocation13 + $0x10] sm:$0xff]
        %v644 = vld [vmem:[#allocation13 + $0x18] sm:$0xff]
        %v645 = vld [vmem:[#allocation13 + $0x20] sm:$0xff]
        %v646 = vld [vmem:[#allocation13 + $0x28] sm:$0xff]
        %v647 = vld [vmem:[#allocation13 + $0x30] sm:$0xff]
        %v648 = vld [vmem:[#allocation13 + $0x38] sm:$0xff]
        %v649 = vld [vmem:[#allocation13 + $0x40] sm:$0xff]
        %v650 = vld [vmem:[#allocation13 + $0x48] sm:$0xff]
        %v651 = vld [vmem:[#allocation13 + $0x50] sm:$0xff]
        %v652 = vld [vmem:[#allocation13 + $0x58] sm:$0xff]
        %v653 = vld [vmem:[#allocation13 + $0x60] sm:$0xff]
        %v654 = vld [vmem:[#allocation13 + $0x68] sm:$0xff]
        %v655 = vld [vmem:[#allocation13 + $0x70] sm:$0xff]
        %v656 = vld [vmem:[#allocation13 + $0x78] sm:$0xff]
        %v657 = vld [vmem:[#allocation17] sm:$0xff]
        %v658 = vld [vmem:[#allocation17 + $0x8] sm:$0xff]
        %v659 = vld [vmem:[#allocation17 + $0x10] sm:$0xff]
        %v660 = vld [vmem:[#allocation17 + $0x18] sm:$0xff]
        %v661 = vld [vmem:[#allocation17 + $0x20] sm:$0xff]
        %v662 = vld [vmem:[#allocation17 + $0x28] sm:$0xff]
        %v663 = vld [vmem:[#allocation17 + $0x30] sm:$0xff]
        %v664 = vld [vmem:[#allocation17 + $0x38] sm:$0xff]
        %v665 = vld [vmem:[#allocation17 + $0x40] sm:$0xff]
        %v666 = vld [vmem:[#allocation17 + $0x48] sm:$0xff]
        %v667 = vld [vmem:[#allocation17 + $0x50] sm:$0xff]
        %v668 = vld [vmem:[#allocation17 + $0x58] sm:$0xff]
        %v669 = vld [vmem:[#allocation17 + $0x60] sm:$0xff]
        %v670 = vld [vmem:[#allocation17 + $0x68] sm:$0xff]
        %v671 = vld [vmem:[#allocation17 + $0x70] sm:$0xff]
        %v672 = vld [vmem:[#allocation17 + $0x78] sm:$0xff]
        %v673 = vld [vmem:[#allocation14] sm:$0xff]
        %v674 = vld [vmem:[#allocation14 + $0x8] sm:$0xff]
        %v675 = vld [vmem:[#allocation14 + $0x10] sm:$0xff]
        %v676 = vld [vmem:[#allocation14 + $0x18] sm:$0xff]
        %v677 = vld [vmem:[#allocation14 + $0x20] sm:$0xff]
        %v678 = vld [vmem:[#allocation14 + $0x28] sm:$0xff]
        %v679 = vld [vmem:[#allocation14 + $0x30] sm:$0xff]
        %v680 = vld [vmem:[#allocation14 + $0x38] sm:$0xff]
        %v681 = vld [vmem:[#allocation14 + $0x40] sm:$0xff]
        %v682 = vld [vmem:[#allocation14 + $0x48] sm:$0xff]
        %v683 = vld [vmem:[#allocation14 + $0x50] sm:$0xff]
        %v684 = vld [vmem:[#allocation14 + $0x58] sm:$0xff]
        %v685 = vld [vmem:[#allocation14 + $0x60] sm:$0xff]
        %v686 = vld [vmem:[#allocation14 + $0x68] sm:$0xff]
        %v687 = vld [vmem:[#allocation14 + $0x70] sm:$0xff]
        %v688 = vld [vmem:[#allocation14 + $0x78] sm:$0xff]
        %v689 = vld [vmem:[#allocation15] sm:$0xff]
        %v690 = vld [vmem:[#allocation15 + $0x8] sm:$0xff]
        %v691 = vld [vmem:[#allocation15 + $0x10] sm:$0xff]
        %v692 = vld [vmem:[#allocation15 + $0x18] sm:$0xff]
        %v693 = vld [vmem:[#allocation15 + $0x20] sm:$0xff]
        %v694 = vld [vmem:[#allocation15 + $0x28] sm:$0xff]
        %v695 = vld [vmem:[#allocation15 + $0x30] sm:$0xff]
        %v696 = vld [vmem:[#allocation15 + $0x38] sm:$0xff]
        %v697 = vld [vmem:[#allocation15 + $0x40] sm:$0xff]
        %v698 = vld [vmem:[#allocation15 + $0x48] sm:$0xff]
        %v699 = vld [vmem:[#allocation15 + $0x50] sm:$0xff]
        %v700 = vld [vmem:[#allocation15 + $0x58] sm:$0xff]
        %v701 = vld [vmem:[#allocation15 + $0x60] sm:$0xff]
        %v702 = vld [vmem:[#allocation15 + $0x68] sm:$0xff]
        %v703 = vld [vmem:[#allocation15 + $0x70] sm:$0xff]
        %v704 = vld [vmem:[#allocation15 + $0x78] sm:$0xff]
        %v705 = vld [vmem:[#allocation16] sm:$0xff]
        %v706 = vld [vmem:[#allocation16 + $0x8] sm:$0xff]
        %v707 = vld [vmem:[#allocation16 + $0x10] sm:$0xff]
        %v708 = vld [vmem:[#allocation16 + $0x18] sm:$0xff]
        %v709 = vld [vmem:[#allocation16 + $0x20] sm:$0xff]
        %v710 = vld [vmem:[#allocation16 + $0x28] sm:$0xff]
        %v711 = vld [vmem:[#allocation16 + $0x30] sm:$0xff]
        %v712 = vld [vmem:[#allocation16 + $0x38] sm:$0xff]
        %v713 = vld [vmem:[#allocation16 + $0x40] sm:$0xff]
        %v714 = vld [vmem:[#allocation16 + $0x48] sm:$0xff]
        %v715 = vld [vmem:[#allocation16 + $0x50] sm:$0xff]
        %v716 = vld [vmem:[#allocation16 + $0x58] sm:$0xff]
        %v717 = vld [vmem:[#allocation16 + $0x60] sm:$0xff]
        %v718 = vld [vmem:[#allocation16 + $0x68] sm:$0xff]
        %v719 = vld [vmem:[#allocation16 + $0x70] sm:$0xff]
        %v720 = vld [vmem:[#allocation16 + $0x78] sm:$0xff]
        %v721 = vadd.f32 %v657, %v641
        %v722 = vadd.f32 %v658, %v642
        %v723 = vadd.f32 %v659, %v643
        %v724 = vadd.f32 %v660, %v644
        %v725 = vadd.f32 %v661, %v645
        %v726 = vadd.f32 %v662, %v646
        %v727 = vadd.f32 %v663, %v647
        %v728 = vadd.f32 %v664, %v648
        %v729 = vadd.f32 %v665, %v649
        %v730 = vadd.f32 %v666, %v650
        %v731 = vadd.f32 %v667, %v651
        %v732 = vadd.f32 %v668, %v652
        %v733 = vadd.f32 %v669, %v653
        %v734 = vadd.f32 %v670, %v654
        %v735 = vadd.f32 %v671, %v655
        %v736 = vadd.f32 %v672, %v656
        %v737 = vsub.f32 %v721, %v625
        %v738 = vsub.f32 %v722, %v626
        %v739 = vsub.f32 %v723, %v627
        %v740 = vsub.f32 %v724, %v628
        %v741 = vsub.f32 %v725, %v629
        %v742 = vsub.f32 %v726, %v630
        %v743 = vsub.f32 %v727, %v631
        %v744 = vsub.f32 %v728, %v632
        %v745 = vsub.f32 %v729, %v633
        %v746 = vsub.f32 %v730, %v634
        %v747 = vsub.f32 %v731, %v635
        %v748 = vsub.f32 %v732, %v636
        %v749 = vsub.f32 %v733, %v637
        %v750 = vsub.f32 %v734, %v638
        %v751 = vsub.f32 %v735, %v639
        %v752 = vsub.f32 %v736, %v640
        %v753 = vmul.f32 %v609, 0.25
        %v754 = vmul.f32 %v610, 0.25
        %v755 = vmul.f32 %v611, 0.25
        %v756 = vmul.f32 %v612, 0.25
        %v757 = vmul.f32 %v613, 0.25
        %v758 = vmul.f32 %v614, 0.25
        %v759 = vmul.f32 %v615, 0.25
        %v760 = vmul.f32 %v616, 0.25
        %v761 = vmul.f32 %v617, 0.25
        %v762 = vmul.f32 %v618, 0.25
        %v763 = vmul.f32 %v619, 0.25
        %v764 = vmul.f32 %v620, 0.25
        %v765 = vmul.f32 %v621, 0.25
        %v766 = vmul.f32 %v622, 0.25
        %v767 = vmul.f32 %v623, 0.25
        %v768 = vmul.f32 %v624, 0.25
        %v769 = vsub.f32 %v737, %v753
        %v770 = vsub.f32 %v738, %v754
        %v771 = vsub.f32 %v739, %v755
        %v772 = vsub.f32 %v740, %v756
        %v773 = vsub.f32 %v741, %v757
        %v774 = vsub.f32 %v742, %v758
        %v775 = vsub.f32 %v743, %v759
        %v776 = vsub.f32 %v744, %v760
        %v777 = vsub.f32 %v745, %v761
        %v778 = vsub.f32 %v746, %v762
        %v779 = vsub.f32 %v747, %v763
        %v780 = vsub.f32 %v748, %v764
        %v781 = vsub.f32 %v749, %v765
        %v782 = vsub.f32 %v750, %v766
        %v783 = vsub.f32 %v751, %v767
        %v784 = vsub.f32 %v752, %v768
        %v785 = vmul.f32 %v769, 0.1
        %v786 = vmul.f32 %v770, 0.1
        %v787 = vmul.f32 %v771, 0.1
        %v788 = vmul.f32 %v772, 0.1
        %v789 = vmul.f32 %v773, 0.1
        %v790 = vmul.f32 %v774, 0.1
        %v791 = vmul.f32 %v775, 0.1
        %v792 = vmul.f32 %v776, 0.1
        %v793 = vmul.f32 %v777, 0.1
        %v794 = vmul.f32 %v778, 0.1
        %v795 = vmul.f32 %v779, 0.1
        %v796 = vmul.f32 %v780, 0.1
        %v797 = vmul.f32 %v781, 0.1
        %v798 = vmul.f32 %v782, 0.1
        %v799 = vmul.f32 %v783, 0.1
        %v800 = vmul.f32 %v784, 0.1
        %v801 = vsub.f32 %v786, %v785
        %v802 = vsub.f32 %v787, %v786
        %v803 = vsub.f32 %v788, %v787
        %v804 = vsub.f32 %v789, %v788
        %v805 = vsub.f32 %v790, %v789
        %v806 = vsub.f32 %v791, %v790
        %v807 = vsub.f32 %v792, %v791
        %v808 = vsub.f32 %v792, %v792
        %v809 = vsub.f32 %v794, %v793
        %v810 = vsub.f32 %v795, %v794
        %v811 = vsub.f32 %v796, %v795
        %v812 = vsub.f32 %v797, %v796
        %v813 = vsub.f32 %v798, %v797
        %v814 = vsub.f32 %v799, %v798
        %v815 = vsub.f32 %v800, %v799
        %v816 = vsub.f32 %v800, %v800
        %v817 = vadd.f32 %v673, %v801
        %v818 = vadd.f32 %v674, %v802
        %v819 = vadd.f32 %v675, %v803
        %v820 = vadd.f32 %v676, %v804
        %v821 = vadd.f32 %v677, %v805
        %v822 = vadd.f32 %v678, %v806
        %v823 = vadd.f32 %v679, %v807
        %v824 = vadd.f32 %v680, %v808
        %v825 = vadd.f32 %v681, %v809
        %v826 = vadd.f32 %v682, %v810
        %v827 = vadd.f32 %v683, %v811
        %v828 = vadd.f32 %v684, %v812
        %v829 = vadd.f32 %v685, %v813
        %v830 = vadd.f32 %v686, %v814
        %v831 = vadd.f32 %v687, %v815
        %v832 = vadd.f32 %v688, %v816
        %v833 = vmin.f32 %v817, %v98
        %v834 = vmin.f32 %v818, %v99
        %v835 = vmin.f32 %v819, %v100
        %v836 = vmin.f32 %v820, %v101
        %v837 = vmin.f32 %v821, %v102
        %v838 = vmin.f32 %v822, %v103
        %v839 = vmin.f32 %v823, %v104
        %v840 = vmin.f32 %v824, %v105
        %v841 = vmin.f32 %v825, %v106
        %v842 = vmin.f32 %v826, %v107
        %v843 = vmin.f32 %v827, %v108
        %v844 = vmin.f32 %v828, %v109
        %v845 = vmin.f32 %v829, %v110
        %v846 = vmin.f32 %v830, %v111
        %v847 = vmin.f32 %v831, %v112
        %v848 = vmin.f32 %v832, %v113
        %v849 = vsub.f32 0.0, %v98
        %v850 = vsub.f32 0.0, %v99
        %v851 = vsub.f32 0.0, %v100
        %v852 = vsub.f32 0.0, %v101
        %v853 = vsub.f32 0.0, %v102
        %v854 = vsub.f32 0.0, %v103
        %v855 = vsub.f32 0.0, %v104
        %v856 = vsub.f32 0.0, %v105
        %v857 = vsub.f32 0.0, %v106
        %v858 = vsub.f32 0.0, %v107
        %v859 = vsub.f32 0.0, %v108
        %v860 = vsub.f32 0.0, %v109
        %v861 = vsub.f32 0.0, %v110
        %v862 = vsub.f32 0.0, %v111
        %v863 = vsub.f32 0.0, %v112
        %v864 = vsub.f32 0.0, %v113
        %v865 = vmax.f32 %v833, %v849
        %v866 = vmax.f32 %v834, %v850
        %v867 = vmax.f32 %v835, %v851
        %v868 = vmax.f32 %v836, %v852
        %v869 = vmax.f32 %v837, %v853
        %v870 = vmax.f32 %v838, %v854
        %v871 = vmax.f32 %v839, %v855
        %v872 = vmax.f32 %v840, %v856
        %v873 = vmax.f32 %v841, %v857
        %v874 = vmax.f32 %v842, %v858
        %v875 = vmax.f32 %v843, %v859
        %v876 = vmax.f32 %v844, %v860
        %v877 = vmax.f32 %v845, %v861
        %v878 = vmax.f32 %v846, %v862
        %v879 = vmax.f32 %v847, %v863
        %v880 = vmax.f32 %v848, %v864
        %v881 = vrot.slane %v785, 1
        %v882 = vrot.slane %v786, 1
        %v883 = vrot.slane %v787, 1
        %v884 = vrot.slane %v788, 1
        %v885 = vrot.slane %v789, 1
        %v886 = vrot.slane %v790, 1
        %v887 = vrot.slane %v791, 1
        %v888 = vrot.slane %v792, 1
        %v889 = vrot.slane %v793, 1
        %v890 = vrot.slane %v794, 1
        %v891 = vrot.slane %v795, 1
        %v892 = vrot.slane %v796, 1
        %v893 = vrot.slane %v797, 1
        %v894 = vrot.slane %v798, 1
        %v895 = vrot.slane %v799, 1
        %v896 = vrot.slane %v800, 1
        %v897 = vsub.f32 %v881, %v785
        %v898 = vsub.f32 %v882, %v786
        %v899 = vsub.f32 %v883, %v787
        %v900 = vsub.f32 %v884, %v788
        %v901 = vsub.f32 %v885, %v789
        %v902 = vsub.f32 %v886, %v790
        %v903 = vsub.f32 %v887, %v791
        %v904 = vsub.f32 %v888, %v792
        %v905 = vsub.f32 %v889, %v793
        %v906 = vsub.f32 %v890, %v794
        %v907 = vsub.f32 %v891, %v795
        %v908 = vsub.f32 %v892, %v796
        %v909 = vsub.f32 %v893, %v797
        %v910 = vsub.f32 %v894, %v798
        %v911 = vsub.f32 %v895, %v799
        %v912 = vsub.f32 %v896, %v800
        %v913 = vmul.f32 %v152, %v897
        %v914 = vmul.f32 %v152, %v898
        %v915 = vmul.f32 %v152, %v899
        %v916 = vmul.f32 %v152, %v900
        %v917 = vmul.f32 %v152, %v901
        %v918 = vmul.f32 %v152, %v902
        %v919 = vmul.f32 %v152, %v903
        %v920 = vmul.f32 %v152, %v904
        %v921 = vmul.f32 %v152, %v905
        %v922 = vmul.f32 %v152, %v906
        %v923 = vmul.f32 %v152, %v907
        %v924 = vmul.f32 %v152, %v908
        %v925 = vmul.f32 %v152, %v909
        %v926 = vmul.f32 %v152, %v910
        %v927 = vmul.f32 %v152, %v911
        %v928 = vmul.f32 %v152, %v912
        %v929 = vadd.f32 %v689, %v913
        %v930 = vadd.f32 %v690, %v914
        %v931 = vadd.f32 %v691, %v915
        %v932 = vadd.f32 %v692, %v916
        %v933 = vadd.f32 %v693, %v917
        %v934 = vadd.f32 %v694, %v918
        %v935 = vadd.f32 %v695, %v919
        %v936 = vadd.f32 %v696, %v920
        %v937 = vadd.f32 %v697, %v921
        %v938 = vadd.f32 %v698, %v922
        %v939 = vadd.f32 %v699, %v923
        %v940 = vadd.f32 %v700, %v924
        %v941 = vadd.f32 %v701, %v925
        %v942 = vadd.f32 %v702, %v926
        %v943 = vadd.f32 %v703, %v927
        %v944 = vadd.f32 %v704, %v928
        %v945 = vmin.f32 %v929, %v114
        %v946 = vmin.f32 %v930, %v115
        %v947 = vmin.f32 %v931, %v116
        %v948 = vmin.f32 %v932, %v117
        %v949 = vmin.f32 %v933, %v118
        %v950 = vmin.f32 %v934, %v119
        %v951 = vmin.f32 %v935, %v120
        %v952 = vmin.f32 %v936, %v121
        %v953 = vmin.f32 %v937, %v122
        %v954 = vmin.f32 %v938, %v123
        %v955 = vmin.f32 %v939, %v124
        %v956 = vmin.f32 %v940, %v125
        %v957 = vmin.f32 %v941, %v126
        %v958 = vmin.f32 %v942, %v127
        %v959 = vmin.f32 %v943, %v128
        %v960 = vmin.f32 %v944, %v129
        %v961 = vsub.f32 0.0, %v114
        %v962 = vsub.f32 0.0, %v115
        %v963 = vsub.f32 0.0, %v116
        %v964 = vsub.f32 0.0, %v117
        %v965 = vsub.f32 0.0, %v118
        %v966 = vsub.f32 0.0, %v119
        %v967 = vsub.f32 0.0, %v120
        %v968 = vsub.f32 0.0, %v121
        %v969 = vsub.f32 0.0, %v122
        %v970 = vsub.f32 0.0, %v123
        %v971 = vsub.f32 0.0, %v124
        %v972 = vsub.f32 0.0, %v125
        %v973 = vsub.f32 0.0, %v126
        %v974 = vsub.f32 0.0, %v127
        %v975 = vsub.f32 0.0, %v128
        %v976 = vsub.f32 0.0, %v129
        %v977 = vmax.f32 %v945, %v961
        %v978 = vmax.f32 %v946, %v962
        %v979 = vmax.f32 %v947, %v963
        %v980 = vmax.f32 %v948, %v964
        %v981 = vmax.f32 %v949, %v965
        %v982 = vmax.f32 %v950, %v966
        %v983 = vmax.f32 %v951, %v967
        %v984 = vmax.f32 %v952, %v968
        %v985 = vmax.f32 %v953, %v969
        %v986 = vmax.f32 %v954, %v970
        %v987 = vmax.f32 %v955, %v971
        %v988 = vmax.f32 %v956, %v972
        %v989 = vmax.f32 %v957, %v973
        %v990 = vmax.f32 %v958, %v974
        %v991 = vmax.f32 %v959, %v975
        %v992 = vmax.f32 %v960, %v976
        %993 = vrot.lane.b32.xlu0 %v785, 127
        %v994 = vpop.permute.xlu0 %993
        %995 = vrot.lane.b32.xlu0 %v786, 127
        %v996 = vpop.permute.xlu0 %995
        %997 = vrot.lane.b32.xlu0 %v787, 127
        %v998 = vpop.permute.xlu0 %997
        %999 = vrot.lane.b32.xlu0 %v788, 127
        %v1000 = vpop.permute.xlu0 %999
        %1001 = vrot.lane.b32.xlu0 %v789, 127
        %v1002 = vpop.permute.xlu0 %1001
        %1003 = vrot.lane.b32.xlu0 %v790, 127
        %v1004 = vpop.permute.xlu0 %1003
        %1005 = vrot.lane.b32.xlu0 %v791, 127
        %v1006 = vpop.permute.xlu0 %1005
        %1007 = vrot.lane.b32.xlu0 %v792, 127
        %v1008 = vpop.permute.xlu0 %1007
        %1009 = vrot.lane.b32.xlu0 %v793, 127
        %v1010 = vpop.permute.xlu0 %1009
        %1011 = vrot.lane.b32.xlu0 %v794, 127
        %v1012 = vpop.permute.xlu0 %1011
        %1013 = vrot.lane.b32.xlu0 %v795, 127
        %v1014 = vpop.permute.xlu0 %1013
        %1015 = vrot.lane.b32.xlu0 %v796, 127
        %v1016 = vpop.permute.xlu0 %1015
        %1017 = vrot.lane.b32.xlu0 %v797, 127
        %v1018 = vpop.permute.xlu0 %1017
        %1019 = vrot.lane.b32.xlu0 %v798, 127
        %v1020 = vpop.permute.xlu0 %1019
        %1021 = vrot.lane.b32.xlu0 %v799, 127
        %v1022 = vpop.permute.xlu0 %1021
        %1023 = vrot.lane.b32.xlu0 %v800, 127
        %v1024 = vpop.permute.xlu0 %1023
        %v1025 = vsub.f32 %v994, %v785
        %v1026 = vsub.f32 %v996, %v786
        %v1027 = vsub.f32 %v998, %v787
        %v1028 = vsub.f32 %v1000, %v788
        %v1029 = vsub.f32 %v1002, %v789
        %v1030 = vsub.f32 %v1004, %v790
        %v1031 = vsub.f32 %v1006, %v791
        %v1032 = vsub.f32 %v1008, %v792
        %v1033 = vsub.f32 %v1010, %v793
        %v1034 = vsub.f32 %v1012, %v794
        %v1035 = vsub.f32 %v1014, %v795
        %v1036 = vsub.f32 %v1016, %v796
        %v1037 = vsub.f32 %v1018, %v797
        %v1038 = vsub.f32 %v1020, %v798
        %v1039 = vsub.f32 %v1022, %v799
        %v1040 = vsub.f32 %v1024, %v800
        %v1041 = vmul.f32 %v158, %v1025
        %v1042 = vmul.f32 %v158, %v1026
        %v1043 = vmul.f32 %v158, %v1027
        %v1044 = vmul.f32 %v158, %v1028
        %v1045 = vmul.f32 %v158, %v1029
        %v1046 = vmul.f32 %v158, %v1030
        %v1047 = vmul.f32 %v158, %v1031
        %v1048 = vmul.f32 %v158, %v1032
        %v1049 = vmul.f32 %v158, %v1033
        %v1050 = vmul.f32 %v158, %v1034
        %v1051 = vmul.f32 %v158, %v1035
        %v1052 = vmul.f32 %v158, %v1036
        %v1053 = vmul.f32 %v158, %v1037
        %v1054 = vmul.f32 %v158, %v1038
        %v1055 = vmul.f32 %v158, %v1039
        %v1056 = vmul.f32 %v158, %v1040
        %v1057 = vadd.f32 %v705, %v1041
        %v1058 = vadd.f32 %v706, %v1042
        %v1059 = vadd.f32 %v707, %v1043
        %v1060 = vadd.f32 %v708, %v1044
        %v1061 = vadd.f32 %v709, %v1045
        %v1062 = vadd.f32 %v710, %v1046
        %v1063 = vadd.f32 %v711, %v1047
        %v1064 = vadd.f32 %v712, %v1048
        %v1065 = vadd.f32 %v713, %v1049
        %v1066 = vadd.f32 %v714, %v1050
        %v1067 = vadd.f32 %v715, %v1051
        %v1068 = vadd.f32 %v716, %v1052
        %v1069 = vadd.f32 %v717, %v1053
        %v1070 = vadd.f32 %v718, %v1054
        %v1071 = vadd.f32 %v719, %v1055
        %v1072 = vadd.f32 %v720, %v1056
        %v1073 = vmin.f32 %v1057, %v130
        %v1074 = vmin.f32 %v1058, %v131
        %v1075 = vmin.f32 %v1059, %v132
        %v1076 = vmin.f32 %v1060, %v133
        %v1077 = vmin.f32 %v1061, %v134
        %v1078 = vmin.f32 %v1062, %v135
        %v1079 = vmin.f32 %v1063, %v136
        %v1080 = vmin.f32 %v1064, %v137
        %v1081 = vmin.f32 %v1065, %v138
        %v1082 = vmin.f32 %v1066, %v139
        %v1083 = vmin.f32 %v1067, %v140
        %v1084 = vmin.f32 %v1068, %v141
        %v1085 = vmin.f32 %v1069, %v142
        %v1086 = vmin.f32 %v1070, %v143
        %v1087 = vmin.f32 %v1071, %v144
        %v1088 = vmin.f32 %v1072, %v145
        %v1089 = vsub.f32 0.0, %v130
        %v1090 = vsub.f32 0.0, %v131
        %v1091 = vsub.f32 0.0, %v132
        %v1092 = vsub.f32 0.0, %v133
        %v1093 = vsub.f32 0.0, %v134
        %v1094 = vsub.f32 0.0, %v135
        %v1095 = vsub.f32 0.0, %v136
        %v1096 = vsub.f32 0.0, %v137
        %v1097 = vsub.f32 0.0, %v138
        %v1098 = vsub.f32 0.0, %v139
        %v1099 = vsub.f32 0.0, %v140
        %v1100 = vsub.f32 0.0, %v141
        %v1101 = vsub.f32 0.0, %v142
        %v1102 = vsub.f32 0.0, %v143
        %v1103 = vsub.f32 0.0, %v144
        %v1104 = vsub.f32 0.0, %v145
        %v1105 = vmax.f32 %v1073, %v1089
        %v1106 = vmax.f32 %v1074, %v1090
        %v1107 = vmax.f32 %v1075, %v1091
        %v1108 = vmax.f32 %v1076, %v1092
        %v1109 = vmax.f32 %v1077, %v1093
        %v1110 = vmax.f32 %v1078, %v1094
        %v1111 = vmax.f32 %v1079, %v1095
        %v1112 = vmax.f32 %v1080, %v1096
        %v1113 = vmax.f32 %v1081, %v1097
        %v1114 = vmax.f32 %v1082, %v1098
        %v1115 = vmax.f32 %v1083, %v1099
        %v1116 = vmax.f32 %v1084, %v1100
        %v1117 = vmax.f32 %v1085, %v1101
        %v1118 = vmax.f32 %v1086, %v1102
        %v1119 = vmax.f32 %v1087, %v1103
        %v1120 = vmax.f32 %v1088, %v1104
        %v1121 = vadd.f32 %v865, %v977
        %v1122 = vadd.f32 %v866, %v978
        %v1123 = vadd.f32 %v867, %v979
        %v1124 = vadd.f32 %v868, %v980
        %v1125 = vadd.f32 %v869, %v981
        %v1126 = vadd.f32 %v870, %v982
        %v1127 = vadd.f32 %v871, %v983
        %v1128 = vadd.f32 %v872, %v984
        %v1129 = vadd.f32 %v873, %v985
        %v1130 = vadd.f32 %v874, %v986
        %v1131 = vadd.f32 %v875, %v987
        %v1132 = vadd.f32 %v876, %v988
        %v1133 = vadd.f32 %v877, %v989
        %v1134 = vadd.f32 %v878, %v990
        %v1135 = vadd.f32 %v879, %v991
        %v1136 = vadd.f32 %v880, %v992
        %v1137 = vadd.f32 %v1121, %v1105
        %v1138 = vadd.f32 %v1122, %v1106
        %v1139 = vadd.f32 %v1123, %v1107
        %v1140 = vadd.f32 %v1124, %v1108
        %v1141 = vadd.f32 %v1125, %v1109
        %v1142 = vadd.f32 %v1126, %v1110
        %v1143 = vadd.f32 %v1127, %v1111
        %v1144 = vadd.f32 %v1128, %v1112
        %v1145 = vadd.f32 %v1129, %v1113
        %v1146 = vadd.f32 %v1130, %v1114
        %v1147 = vadd.f32 %v1131, %v1115
        %v1148 = vadd.f32 %v1132, %v1116
        %v1149 = vadd.f32 %v1133, %v1117
        %v1150 = vadd.f32 %v1134, %v1118
        %v1151 = vadd.f32 %v1135, %v1119
        %v1152 = vadd.f32 %v1136, %v1120
        %v1153 = vsub.f32 %v1138, %v865
        %v1154 = vsub.f32 %v1139, %v866
        %v1155 = vsub.f32 %v1140, %v867
        %v1156 = vsub.f32 %v1141, %v868
        %v1157 = vsub.f32 %v1142, %v869
        %v1158 = vsub.f32 %v1143, %v870
        %v1159 = vsub.f32 %v1144, %v871
        %v1160 = vsub.f32 %v1146, %v873
        %v1161 = vsub.f32 %v1147, %v874
        %v1162 = vsub.f32 %v1148, %v875
        %v1163 = vsub.f32 %v1149, %v876
        %v1164 = vsub.f32 %v1150, %v877
        %v1165 = vsub.f32 %v1151, %v878
        %v1166 = vsub.f32 %v1152, %v879
        %v1167 = vrot.slane %v977, 7
        %v1168 = vrot.slane %v978, 7
        %v1169 = vrot.slane %v979, 7
        %v1170 = vrot.slane %v980, 7
        %v1171 = vrot.slane %v981, 7
        %v1172 = vrot.slane %v982, 7
        %v1173 = vrot.slane %v983, 7
        %v1174 = vrot.slane %v984, 7
        %v1175 = vrot.slane %v985, 7
        %v1176 = vrot.slane %v986, 7
        %v1177 = vrot.slane %v987, 7
        %v1178 = vrot.slane %v988, 7
        %v1179 = vrot.slane %v989, 7
        %v1180 = vrot.slane %v990, 7
        %v1181 = vrot.slane %v991, 7
        %v1182 = vrot.slane %v992, 7
        %v1183 = vmul.f32 %v155, %v1167
        %v1184 = vmul.f32 %v155, %v1168
        %v1185 = vmul.f32 %v155, %v1169
        %v1186 = vmul.f32 %v155, %v1170
        %v1187 = vmul.f32 %v155, %v1171
        %v1188 = vmul.f32 %v155, %v1172
        %v1189 = vmul.f32 %v155, %v1173
        %v1190 = vmul.f32 %v155, %v1174
        %v1191 = vmul.f32 %v155, %v1175
        %v1192 = vmul.f32 %v155, %v1176
        %v1193 = vmul.f32 %v155, %v1177
        %v1194 = vmul.f32 %v155, %v1178
        %v1195 = vmul.f32 %v155, %v1179
        %v1196 = vmul.f32 %v155, %v1180
        %v1197 = vmul.f32 %v155, %v1181
        %v1198 = vmul.f32 %v155, %v1182
        %v1199 = vsub.f32 %v1137, %v1183
        %v1200 = vsub.f32 %v1153, %v1184
        %v1201 = vsub.f32 %v1154, %v1185
        %v1202 = vsub.f32 %v1155, %v1186
        %v1203 = vsub.f32 %v1156, %v1187
        %v1204 = vsub.f32 %v1157, %v1188
        %v1205 = vsub.f32 %v1158, %v1189
        %v1206 = vsub.f32 %v1159, %v1190
        %v1207 = vsub.f32 %v1145, %v1191
        %v1208 = vsub.f32 %v1160, %v1192
        %v1209 = vsub.f32 %v1161, %v1193
        %v1210 = vsub.f32 %v1162, %v1194
        %v1211 = vsub.f32 %v1163, %v1195
        %v1212 = vsub.f32 %v1164, %v1196
        %v1213 = vsub.f32 %v1165, %v1197
        %v1214 = vsub.f32 %v1166, %v1198
        %1215 = vrot.lane.b32.xlu0 %v1105, 1
        %v1216 = vpop.permute.xlu0 %1215
        %1217 = vrot.lane.b32.xlu0 %v1106, 1
        %v1218 = vpop.permute.xlu0 %1217
        %1219 = vrot.lane.b32.xlu0 %v1107, 1
        %v1220 = vpop.permute.xlu0 %1219
        %1221 = vrot.lane.b32.xlu0 %v1108, 1
        %v1222 = vpop.permute.xlu0 %1221
        %1223 = vrot.lane.b32.xlu0 %v1109, 1
        %v1224 = vpop.permute.xlu0 %1223
        %1225 = vrot.lane.b32.xlu0 %v1110, 1
        %v1226 = vpop.permute.xlu0 %1225
        %1227 = vrot.lane.b32.xlu0 %v1111, 1
        %v1228 = vpop.permute.xlu0 %1227
        %1229 = vrot.lane.b32.xlu0 %v1112, 1
        %v1230 = vpop.permute.xlu0 %1229
        %1231 = vrot.lane.b32.xlu0 %v1113, 1
        %v1232 = vpop.permute.xlu0 %1231
        %1233 = vrot.lane.b32.xlu0 %v1114, 1
        %v1234 = vpop.permute.xlu0 %1233
        %1235 = vrot.lane.b32.xlu0 %v1115, 1
        %v1236 = vpop.permute.xlu0 %1235
        %1237 = vrot.lane.b32.xlu0 %v1116, 1
        %v1238 = vpop.permute.xlu0 %1237
        %1239 = vrot.lane.b32.xlu0 %v1117, 1
        %v1240 = vpop.permute.xlu0 %1239
        %1241 = vrot.lane.b32.xlu0 %v1118, 1
        %v1242 = vpop.permute.xlu0 %1241
        %1243 = vrot.lane.b32.xlu0 %v1119, 1
        %v1244 = vpop.permute.xlu0 %1243
        %1245 = vrot.lane.b32.xlu0 %v1120, 1
        %v1246 = vpop.permute.xlu0 %1245
        %v1247 = vmul.f32 %v161, %v1216
        %v1248 = vmul.f32 %v161, %v1218
        %v1249 = vmul.f32 %v161, %v1220
        %v1250 = vmul.f32 %v161, %v1222
        %v1251 = vmul.f32 %v161, %v1224
        %v1252 = vmul.f32 %v161, %v1226
        %v1253 = vmul.f32 %v161, %v1228
        %v1254 = vmul.f32 %v161, %v1230
        %v1255 = vmul.f32 %v161, %v1232
        %v1256 = vmul.f32 %v161, %v1234
        %v1257 = vmul.f32 %v161, %v1236
        %v1258 = vmul.f32 %v161, %v1238
        %v1259 = vmul.f32 %v161, %v1240
        %v1260 = vmul.f32 %v161, %v1242
        %v1261 = vmul.f32 %v161, %v1244
        %v1262 = vmul.f32 %v161, %v1246
        %v1263 = vsub.f32 %v1199, %v1247
        %v1264 = vsub.f32 %v1200, %v1248
        %v1265 = vsub.f32 %v1201, %v1249
        %v1266 = vsub.f32 %v1202, %v1250
        %v1267 = vsub.f32 %v1203, %v1251
        %v1268 = vsub.f32 %v1204, %v1252
        %v1269 = vsub.f32 %v1205, %v1253
        %v1270 = vsub.f32 %v1206, %v1254
        %v1271 = vsub.f32 %v1207, %v1255
        %v1272 = vsub.f32 %v1208, %v1256
        %v1273 = vsub.f32 %v1209, %v1257
        %v1274 = vsub.f32 %v1210, %v1258
        %v1275 = vsub.f32 %v1211, %v1259
        %v1276 = vsub.f32 %v1212, %v1260
        %v1277 = vsub.f32 %v1213, %v1261
        %v1278 = vsub.f32 %v1214, %v1262
        %v1279 = vadd.f32 %v641, 0.25
        %v1280 = vadd.f32 %v642, 0.25
        %v1281 = vadd.f32 %v643, 0.25
        %v1282 = vadd.f32 %v644, 0.25
        %v1283 = vadd.f32 %v645, 0.25
        %v1284 = vadd.f32 %v646, 0.25
        %v1285 = vadd.f32 %v647, 0.25
        %v1286 = vadd.f32 %v648, 0.25
        %v1287 = vadd.f32 %v649, 0.25
        %v1288 = vadd.f32 %v650, 0.25
        %v1289 = vadd.f32 %v651, 0.25
        %v1290 = vadd.f32 %v652, 0.25
        %v1291 = vadd.f32 %v653, 0.25
        %v1292 = vadd.f32 %v654, 0.25
        %v1293 = vadd.f32 %v655, 0.25
        %v1294 = vadd.f32 %v656, 0.25
        %v1295 = vadd.f32 %v1279, %v1263
        %v1296 = vadd.f32 %v1280, %v1264
        %v1297 = vadd.f32 %v1281, %v1265
        %v1298 = vadd.f32 %v1282, %v1266
        %v1299 = vadd.f32 %v1283, %v1267
        %v1300 = vadd.f32 %v1284, %v1268
        %v1301 = vadd.f32 %v1285, %v1269
        %v1302 = vadd.f32 %v1286, %v1270
        %v1303 = vadd.f32 %v1287, %v1271
        %v1304 = vadd.f32 %v1288, %v1272
        %v1305 = vadd.f32 %v1289, %v1273
        %v1306 = vadd.f32 %v1290, %v1274
        %v1307 = vadd.f32 %v1291, %v1275
        %v1308 = vadd.f32 %v1292, %v1276
        %v1309 = vadd.f32 %v1293, %v1277
        %v1310 = vadd.f32 %v1294, %v1278
        %v1311 = vsub.f32 %v1295, %v753
        %v1312 = vsub.f32 %v1296, %v754
        %v1313 = vsub.f32 %v1297, %v755
        %v1314 = vsub.f32 %v1298, %v756
        %v1315 = vsub.f32 %v1299, %v757
        %v1316 = vsub.f32 %v1300, %v758
        %v1317 = vsub.f32 %v1301, %v759
        %v1318 = vsub.f32 %v1302, %v760
        %v1319 = vsub.f32 %v1303, %v761
        %v1320 = vsub.f32 %v1304, %v762
        %v1321 = vsub.f32 %v1305, %v763
        %v1322 = vsub.f32 %v1306, %v764
        %v1323 = vsub.f32 %v1307, %v765
        %v1324 = vsub.f32 %v1308, %v766
        %v1325 = vsub.f32 %v1309, %v767
        %v1326 = vsub.f32 %v1310, %v768
        %v1327 = vmin.f32 %v1311, %v354
        %v1328 = vmin.f32 %v1312, %v355
        %v1329 = vmin.f32 %v1313, %v356
        %v1330 = vmin.f32 %v1314, %v357
        %v1331 = vmin.f32 %v1315, %v358
        %v1332 = vmin.f32 %v1316, %v359
        %v1333 = vmin.f32 %v1317, %v360
        %v1334 = vmin.f32 %v1318, %v361
        %v1335 = vmin.f32 %v1319, %v362
        %v1336 = vmin.f32 %v1320, %v363
        %v1337 = vmin.f32 %v1321, %v364
        %v1338 = vmin.f32 %v1322, %v365
        %v1339 = vmin.f32 %v1323, %v366
        %v1340 = vmin.f32 %v1324, %v367
        %v1341 = vmin.f32 %v1325, %v368
        %v1342 = vmin.f32 %v1326, %v369
        %v1343 = vsub.f32 %v1327, %v1263
        %v1344 = vsub.f32 %v1328, %v1264
        %v1345 = vsub.f32 %v1329, %v1265
        %v1346 = vsub.f32 %v1330, %v1266
        %v1347 = vsub.f32 %v1331, %v1267
        %v1348 = vsub.f32 %v1332, %v1268
        %v1349 = vsub.f32 %v1333, %v1269
        %v1350 = vsub.f32 %v1334, %v1270
        %v1351 = vsub.f32 %v1335, %v1271
        %v1352 = vsub.f32 %v1336, %v1272
        %v1353 = vsub.f32 %v1337, %v1273
        %v1354 = vsub.f32 %v1338, %v1274
        %v1355 = vsub.f32 %v1339, %v1275
        %v1356 = vsub.f32 %v1340, %v1276
        %v1357 = vsub.f32 %v1341, %v1277
        %v1358 = vsub.f32 %v1342, %v1278
        %v1359 = vadd.f32 %v1343, %v753
        %v1360 = vadd.f32 %v1344, %v754
        %v1361 = vadd.f32 %v1345, %v755
        %v1362 = vadd.f32 %v1346, %v756
        %v1363 = vadd.f32 %v1347, %v757
        %v1364 = vadd.f32 %v1348, %v758
        %v1365 = vadd.f32 %v1349, %v759
        %v1366 = vadd.f32 %v1350, %v760
        %v1367 = vadd.f32 %v1351, %v761
        %v1368 = vadd.f32 %v1352, %v762
        %v1369 = vadd.f32 %v1353, %v763
        %v1370 = vadd.f32 %v1354, %v764
        %v1371 = vadd.f32 %v1355, %v765
        %v1372 = vadd.f32 %v1356, %v766
        %v1373 = vadd.f32 %v1357, %v767
        %v1374 = vadd.f32 %v1358, %v768
        %v1375 = vmin.f32 %v1359, %v386
        %v1376 = vmin.f32 %v1360, %v387
        %v1377 = vmin.f32 %v1361, %v388
        %v1378 = vmin.f32 %v1362, %v389
        %v1379 = vmin.f32 %v1363, %v390
        %v1380 = vmin.f32 %v1364, %v391
        %v1381 = vmin.f32 %v1365, %v392
        %v1382 = vmin.f32 %v1366, %v393
        %v1383 = vmin.f32 %v1367, %v394
        %v1384 = vmin.f32 %v1368, %v395
        %v1385 = vmin.f32 %v1369, %v396
        %v1386 = vmin.f32 %v1370, %v397
        %v1387 = vmin.f32 %v1371, %v398
        %v1388 = vmin.f32 %v1372, %v399
        %v1389 = vmin.f32 %v1373, %v400
        %v1390 = vmin.f32 %v1374, %v401
        %v1391 = vsub.f32 %v1263, %v1327
        %v1392 = vsub.f32 %v1264, %v1328
        %v1393 = vsub.f32 %v1265, %v1329
        %v1394 = vsub.f32 %v1266, %v1330
        %v1395 = vsub.f32 %v1267, %v1331
        %v1396 = vsub.f32 %v1268, %v1332
        %v1397 = vsub.f32 %v1269, %v1333
        %v1398 = vsub.f32 %v1270, %v1334
        %v1399 = vsub.f32 %v1271, %v1335
        %v1400 = vsub.f32 %v1272, %v1336
        %v1401 = vsub.f32 %v1273, %v1337
        %v1402 = vsub.f32 %v1274, %v1338
        %v1403 = vsub.f32 %v1275, %v1339
        %v1404 = vsub.f32 %v1276, %v1340
        %v1405 = vsub.f32 %v1277, %v1341
        %v1406 = vsub.f32 %v1278, %v1342
        %v1407 = vadd.f32 %v1391, %v1375
        %v1408 = vadd.f32 %v1392, %v1376
        %v1409 = vadd.f32 %v1393, %v1377
        %v1410 = vadd.f32 %v1394, %v1378
        %v1411 = vadd.f32 %v1395, %v1379
        %v1412 = vadd.f32 %v1396, %v1380
        %v1413 = vadd.f32 %v1397, %v1381
        %v1414 = vadd.f32 %v1398, %v1382
        %v1415 = vadd.f32 %v1399, %v1383
        %v1416 = vadd.f32 %v1400, %v1384
        %v1417 = vadd.f32 %v1401, %v1385
        %v1418 = vadd.f32 %v1402, %v1386
        %v1419 = vadd.f32 %v1403, %v1387
        %v1420 = vadd.f32 %v1404, %v1388
        %v1421 = vadd.f32 %v1405, %v1389
        %v1422 = vadd.f32 %v1406, %v1390
        %v1423 = vmul.f32 %v1407, 4.0
        %v1424 = vmul.f32 %v1408, 4.0
        %v1425 = vmul.f32 %v1409, 4.0
        %v1426 = vmul.f32 %v1410, 4.0
        %v1427 = vmul.f32 %v1411, 4.0
        %v1428 = vmul.f32 %v1412, 4.0
        %v1429 = vmul.f32 %v1413, 4.0
        %v1430 = vmul.f32 %v1414, 4.0
        %v1431 = vmul.f32 %v1415, 4.0
        %v1432 = vmul.f32 %v1416, 4.0
        %v1433 = vmul.f32 %v1417, 4.0
        %v1434 = vmul.f32 %v1418, 4.0
        %v1435 = vmul.f32 %v1419, 4.0
        %v1436 = vmul.f32 %v1420, 4.0
        %v1437 = vmul.f32 %v1421, 4.0
        %v1438 = vmul.f32 %v1422, 4.0
        %v1439 = vsub.f32 %v609, %v1423
        %v1440 = vsub.f32 %v610, %v1424
        %v1441 = vsub.f32 %v611, %v1425
        %v1442 = vsub.f32 %v612, %v1426
        %v1443 = vsub.f32 %v613, %v1427
        %v1444 = vsub.f32 %v614, %v1428
        %v1445 = vsub.f32 %v615, %v1429
        %v1446 = vsub.f32 %v616, %v1430
        %v1447 = vsub.f32 %v617, %v1431
        %v1448 = vsub.f32 %v618, %v1432
        %v1449 = vsub.f32 %v619, %v1433
        %v1450 = vsub.f32 %v620, %v1434
        %v1451 = vsub.f32 %v621, %v1435
        %v1452 = vsub.f32 %v622, %v1436
        %v1453 = vsub.f32 %v623, %v1437
        %v1454 = vsub.f32 %v624, %v1438
        %1455 = vst [vmem:[#allocation14] sm:$0xff] %v865
        %1456 = vst [vmem:[#allocation14 + $0x8] sm:$0xff] %v866
        %1457 = vst [vmem:[#allocation14 + $0x10] sm:$0xff] %v867
        %1458 = vst [vmem:[#allocation14 + $0x18] sm:$0xff] %v868
        %1459 = vst [vmem:[#allocation14 + $0x20] sm:$0xff] %v869
        %1460 = vst [vmem:[#allocation14 + $0x28] sm:$0xff] %v870
        %1461 = vst [vmem:[#allocation14 + $0x30] sm:$0xff] %v871
        %1462 = vst [vmem:[#allocation14 + $0x38] sm:$0xff] %v872
        %1463 = vst [vmem:[#allocation14 + $0x40] sm:$0xff] %v873
        %1464 = vst [vmem:[#allocation14 + $0x48] sm:$0xff] %v874
        %1465 = vst [vmem:[#allocation14 + $0x50] sm:$0xff] %v875
        %1466 = vst [vmem:[#allocation14 + $0x58] sm:$0xff] %v876
        %1467 = vst [vmem:[#allocation14 + $0x60] sm:$0xff] %v877
        %1468 = vst [vmem:[#allocation14 + $0x68] sm:$0xff] %v878
        %1469 = vst [vmem:[#allocation14 + $0x70] sm:$0xff] %v879
        %1470 = vst [vmem:[#allocation14 + $0x78] sm:$0xff] %v880
        %1471 = vst [vmem:[#allocation15] sm:$0xff] %v977
        %1472 = vst [vmem:[#allocation15 + $0x8] sm:$0xff] %v978
        %1473 = vst [vmem:[#allocation15 + $0x10] sm:$0xff] %v979
        %1474 = vst [vmem:[#allocation15 + $0x18] sm:$0xff] %v980
        %1475 = vst [vmem:[#allocation15 + $0x20] sm:$0xff] %v981
        %1476 = vst [vmem:[#allocation15 + $0x28] sm:$0xff] %v982
        %1477 = vst [vmem:[#allocation15 + $0x30] sm:$0xff] %v983
        %1478 = vst [vmem:[#allocation15 + $0x38] sm:$0xff] %v984
        %1479 = vst [vmem:[#allocation15 + $0x40] sm:$0xff] %v985
        %1480 = vst [vmem:[#allocation15 + $0x48] sm:$0xff] %v986
        %1481 = vst [vmem:[#allocation15 + $0x50] sm:$0xff] %v987
        %1482 = vst [vmem:[#allocation15 + $0x58] sm:$0xff] %v988
        %1483 = vst [vmem:[#allocation15 + $0x60] sm:$0xff] %v989
        %1484 = vst [vmem:[#allocation15 + $0x68] sm:$0xff] %v990
        %1485 = vst [vmem:[#allocation15 + $0x70] sm:$0xff] %v991
        %1486 = vst [vmem:[#allocation15 + $0x78] sm:$0xff] %v992
        %1487 = vst [vmem:[#allocation16] sm:$0xff] %v1105
        %1488 = vst [vmem:[#allocation16 + $0x8] sm:$0xff] %v1106
        %1489 = vst [vmem:[#allocation16 + $0x10] sm:$0xff] %v1107
        %1490 = vst [vmem:[#allocation16 + $0x18] sm:$0xff] %v1108
        %1491 = vst [vmem:[#allocation16 + $0x20] sm:$0xff] %v1109
        %1492 = vst [vmem:[#allocation16 + $0x28] sm:$0xff] %v1110
        %1493 = vst [vmem:[#allocation16 + $0x30] sm:$0xff] %v1111
        %1494 = vst [vmem:[#allocation16 + $0x38] sm:$0xff] %v1112
        %1495 = vst [vmem:[#allocation16 + $0x40] sm:$0xff] %v1113
        %1496 = vst [vmem:[#allocation16 + $0x48] sm:$0xff] %v1114
        %1497 = vst [vmem:[#allocation16 + $0x50] sm:$0xff] %v1115
        %1498 = vst [vmem:[#allocation16 + $0x58] sm:$0xff] %v1116
        %1499 = vst [vmem:[#allocation16 + $0x60] sm:$0xff] %v1117
        %1500 = vst [vmem:[#allocation16 + $0x68] sm:$0xff] %v1118
        %1501 = vst [vmem:[#allocation16 + $0x70] sm:$0xff] %v1119
        %1502 = vst [vmem:[#allocation16 + $0x78] sm:$0xff] %v1120
        %1503 = vst [vmem:[#allocation17] sm:$0xff] %v1263
        %1504 = vst [vmem:[#allocation17 + $0x8] sm:$0xff] %v1264
        %1505 = vst [vmem:[#allocation17 + $0x10] sm:$0xff] %v1265
        %1506 = vst [vmem:[#allocation17 + $0x18] sm:$0xff] %v1266
        %1507 = vst [vmem:[#allocation17 + $0x20] sm:$0xff] %v1267
        %1508 = vst [vmem:[#allocation17 + $0x28] sm:$0xff] %v1268
        %1509 = vst [vmem:[#allocation17 + $0x30] sm:$0xff] %v1269
        %1510 = vst [vmem:[#allocation17 + $0x38] sm:$0xff] %v1270
        %1511 = vst [vmem:[#allocation17 + $0x40] sm:$0xff] %v1271
        %1512 = vst [vmem:[#allocation17 + $0x48] sm:$0xff] %v1272
        %1513 = vst [vmem:[#allocation17 + $0x50] sm:$0xff] %v1273
        %1514 = vst [vmem:[#allocation17 + $0x58] sm:$0xff] %v1274
        %1515 = vst [vmem:[#allocation17 + $0x60] sm:$0xff] %v1275
        %1516 = vst [vmem:[#allocation17 + $0x68] sm:$0xff] %v1276
        %1517 = vst [vmem:[#allocation17 + $0x70] sm:$0xff] %v1277
        %1518 = vst [vmem:[#allocation17 + $0x78] sm:$0xff] %v1278
        %1519 = vst [vmem:[#allocation12] sm:$0xff] %v1327
        %1520 = vst [vmem:[#allocation12 + $0x8] sm:$0xff] %v1328
        %1521 = vst [vmem:[#allocation12 + $0x10] sm:$0xff] %v1329
        %1522 = vst [vmem:[#allocation12 + $0x18] sm:$0xff] %v1330
        %1523 = vst [vmem:[#allocation12 + $0x20] sm:$0xff] %v1331
        %1524 = vst [vmem:[#allocation12 + $0x28] sm:$0xff] %v1332
        %1525 = vst [vmem:[#allocation12 + $0x30] sm:$0xff] %v1333
        %1526 = vst [vmem:[#allocation12 + $0x38] sm:$0xff] %v1334
        %1527 = vst [vmem:[#allocation12 + $0x40] sm:$0xff] %v1335
        %1528 = vst [vmem:[#allocation12 + $0x48] sm:$0xff] %v1336
        %1529 = vst [vmem:[#allocation12 + $0x50] sm:$0xff] %v1337
        %1530 = vst [vmem:[#allocation12 + $0x58] sm:$0xff] %v1338
        %1531 = vst [vmem:[#allocation12 + $0x60] sm:$0xff] %v1339
        %1532 = vst [vmem:[#allocation12 + $0x68] sm:$0xff] %v1340
        %1533 = vst [vmem:[#allocation12 + $0x70] sm:$0xff] %v1341
        %1534 = vst [vmem:[#allocation12 + $0x78] sm:$0xff] %v1342
        %1535 = vst [vmem:[#allocation13] sm:$0xff] %v1375
        %1536 = vst [vmem:[#allocation13 + $0x8] sm:$0xff] %v1376
        %1537 = vst [vmem:[#allocation13 + $0x10] sm:$0xff] %v1377
        %1538 = vst [vmem:[#allocation13 + $0x18] sm:$0xff] %v1378
        %1539 = vst [vmem:[#allocation13 + $0x20] sm:$0xff] %v1379
        %1540 = vst [vmem:[#allocation13 + $0x28] sm:$0xff] %v1380
        %1541 = vst [vmem:[#allocation13 + $0x30] sm:$0xff] %v1381
        %1542 = vst [vmem:[#allocation13 + $0x38] sm:$0xff] %v1382
        %1543 = vst [vmem:[#allocation13 + $0x40] sm:$0xff] %v1383
        %1544 = vst [vmem:[#allocation13 + $0x48] sm:$0xff] %v1384
        %1545 = vst [vmem:[#allocation13 + $0x50] sm:$0xff] %v1385
        %1546 = vst [vmem:[#allocation13 + $0x58] sm:$0xff] %v1386
        %1547 = vst [vmem:[#allocation13 + $0x60] sm:$0xff] %v1387
        %1548 = vst [vmem:[#allocation13 + $0x68] sm:$0xff] %v1388
        %1549 = vst [vmem:[#allocation13 + $0x70] sm:$0xff] %v1389
        %1550 = vst [vmem:[#allocation13 + $0x78] sm:$0xff] %v1390
        %1551 = vst [vmem:[#allocation11] sm:$0xff] %v1439
        %1552 = vst [vmem:[#allocation11 + $0x8] sm:$0xff] %v1440
        %1553 = vst [vmem:[#allocation11 + $0x10] sm:$0xff] %v1441
        %1554 = vst [vmem:[#allocation11 + $0x18] sm:$0xff] %v1442
        %1555 = vst [vmem:[#allocation11 + $0x20] sm:$0xff] %v1443
        %1556 = vst [vmem:[#allocation11 + $0x28] sm:$0xff] %v1444
        %1557 = vst [vmem:[#allocation11 + $0x30] sm:$0xff] %v1445
        %1558 = vst [vmem:[#allocation11 + $0x38] sm:$0xff] %v1446
        %1559 = vst [vmem:[#allocation11 + $0x40] sm:$0xff] %v1447
        %1560 = vst [vmem:[#allocation11 + $0x48] sm:$0xff] %v1448
        %1561 = vst [vmem:[#allocation11 + $0x50] sm:$0xff] %v1449
        %1562 = vst [vmem:[#allocation11 + $0x58] sm:$0xff] %v1450
        %1563 = vst [vmem:[#allocation11 + $0x60] sm:$0xff] %v1451
        %1564 = vst [vmem:[#allocation11 + $0x68] sm:$0xff] %v1452
        %1565 = vst [vmem:[#allocation11 + $0x70] sm:$0xff] %v1453
        %1566 = vst [vmem:[#allocation11 + $0x78] sm:$0xff] %v1454
        %v1567 = vand.u32 2147483647, %v1423
        %v1568 = vand.u32 2147483647, %v1424
        %v1569 = vand.u32 2147483647, %v1425
        %v1570 = vand.u32 2147483647, %v1426
        %v1571 = vand.u32 2147483647, %v1427
        %v1572 = vand.u32 2147483647, %v1428
        %v1573 = vand.u32 2147483647, %v1429
        %v1574 = vand.u32 2147483647, %v1430
        %v1575 = vand.u32 2147483647, %v1431
        %v1576 = vand.u32 2147483647, %v1432
        %v1577 = vand.u32 2147483647, %v1433
        %v1578 = vand.u32 2147483647, %v1434
        %v1579 = vand.u32 2147483647, %v1435
        %v1580 = vand.u32 2147483647, %v1436
        %v1581 = vand.u32 2147483647, %v1437
        %v1582 = vand.u32 2147483647, %v1438
        %v1583 = vmax.f32 %v1567, %v1571
        %v1584 = vmax.f32 %v1568, %v1572
        %v1585 = vmax.f32 %v1569, %v1573
        %v1586 = vmax.f32 %v1570, %v1574
        %v1587 = vmax.f32 %v1583, %v1575
        %v1588 = vmax.f32 %v1584, %v1576
        %v1589 = vmax.f32 %v1585, %v1577
        %v1590 = vmax.f32 %v1586, %v1578
        %v1591 = vmax.f32 %v1587, %v1579
        %v1592 = vmax.f32 %v1588, %v1580
        %v1593 = vmax.f32 %v1589, %v1581
        %v1594 = vmax.f32 %v1590, %v1582
        %v1595 = vmax.f32 %v1591, %v1592
        %v1596 = vmax.f32 %v1593, %v1594
        %v1597 = vmax.f32 %v1595, %v1596
        %1598 = vmax.xlane.f32.xlu0 %v1597
        %v1599 = vpop.xlane.xlu0 %1598
        %v1600 = vrot.slane %v1599, 4
        %v1601 = vmax.f32 %v1599, %v1600
        %v1602 = vrot.slane %v1601, 2
        %v1603 = vmax.f32 %v1601, %v1602
        %v1604 = vrot.slane %v1603, 1
        %v1605 = vmax.f32 %v1603, %v1604
        %s1606 = vtos %v1605
        %p1607 = scmp.lt.f32.partialorder %s1606, 0.001
        %s1608 = scalar_select %p1607, 1, 0
        %1609 = sst [smem:[%s594]] %s1608
      $region32: #{tpu_custom_call.1} parent=25 // pred_fallthru
        _
    $region26: #{tpu_custom_call.1} parent=1 // loop_footer
      %s603 = sadd.s32 1, %s599
    $region27: #{tpu_custom_call.1} parent=1 // loop_footer_branch
      %598 = sbr.rel target = $region23
    $region28: #{tpu_custom_call.1} parent=1 // loop_exit
      _
    %v1610 = vld [vmem:[#allocation11] sm:$0xff]
    %v1611 = vld [vmem:[#allocation11 + $0x8] sm:$0xff]
    %v1612 = vld [vmem:[#allocation11 + $0x10] sm:$0xff]
    %v1613 = vld [vmem:[#allocation11 + $0x18] sm:$0xff]
    %v1614 = vld [vmem:[#allocation11 + $0x20] sm:$0xff]
    %v1615 = vld [vmem:[#allocation11 + $0x28] sm:$0xff]
    %v1616 = vld [vmem:[#allocation11 + $0x30] sm:$0xff]
    %v1617 = vld [vmem:[#allocation11 + $0x38] sm:$0xff]
    %v1618 = vld [vmem:[#allocation11 + $0x40] sm:$0xff]
    %v1619 = vld [vmem:[#allocation11 + $0x48] sm:$0xff]
    %v1620 = vld [vmem:[#allocation11 + $0x50] sm:$0xff]
    %v1621 = vld [vmem:[#allocation11 + $0x58] sm:$0xff]
    %v1622 = vld [vmem:[#allocation11 + $0x60] sm:$0xff]
    %v1623 = vld [vmem:[#allocation11 + $0x68] sm:$0xff]
    %v1624 = vld [vmem:[#allocation11 + $0x70] sm:$0xff]
    %v1625 = vld [vmem:[#allocation11 + $0x78] sm:$0xff]
    %v1626 = vmax.f32 %v1610, 0.0
    %v1627 = vmax.f32 %v1611, 0.0
    %v1628 = vmax.f32 %v1612, 0.0
    %v1629 = vmax.f32 %v1613, 0.0
    %v1630 = vmax.f32 %v1614, 0.0
    %v1631 = vmax.f32 %v1615, 0.0
    %v1632 = vmax.f32 %v1616, 0.0
    %v1633 = vmax.f32 %v1617, 0.0
    %v1634 = vmax.f32 %v1618, 0.0
    %v1635 = vmax.f32 %v1619, 0.0
    %v1636 = vmax.f32 %v1620, 0.0
    %v1637 = vmax.f32 %v1621, 0.0
    %v1638 = vmax.f32 %v1622, 0.0
    %v1639 = vmax.f32 %v1623, 0.0
    %v1640 = vmax.f32 %v1624, 0.0
    %v1641 = vmax.f32 %v1625, 0.0
    %v1642 = vmin.f32 %v1626, 1.0
    %v1643 = vmin.f32 %v1627, 1.0
    %v1644 = vmin.f32 %v1628, 1.0
    %v1645 = vmin.f32 %v1629, 1.0
    %v1646 = vmin.f32 %v1630, 1.0
    %v1647 = vmin.f32 %v1631, 1.0
    %v1648 = vmin.f32 %v1632, 1.0
    %v1649 = vmin.f32 %v1633, 1.0
    %v1650 = vmin.f32 %v1634, 1.0
    %v1651 = vmin.f32 %v1635, 1.0
    %v1652 = vmin.f32 %v1636, 1.0
    %v1653 = vmin.f32 %v1637, 1.0
    %v1654 = vmin.f32 %v1638, 1.0
    %v1655 = vmin.f32 %v1639, 1.0
    %v1656 = vmin.f32 %v1640, 1.0
    %v1657 = vmin.f32 %v1641, 1.0
    %1658 = vst [vmem:[#allocation11] sm:$0xff] %v1642
    %1659 = vst [vmem:[#allocation11 + $0x8] sm:$0xff] %v1643
    %1660 = vst [vmem:[#allocation11 + $0x10] sm:$0xff] %v1644
    %1661 = vst [vmem:[#allocation11 + $0x18] sm:$0xff] %v1645
    %1662 = vst [vmem:[#allocation11 + $0x20] sm:$0xff] %v1646
    %1663 = vst [vmem:[#allocation11 + $0x28] sm:$0xff] %v1647
    %1664 = vst [vmem:[#allocation11 + $0x30] sm:$0xff] %v1648
    %1665 = vst [vmem:[#allocation11 + $0x38] sm:$0xff] %v1649
    %1666 = vst [vmem:[#allocation11 + $0x40] sm:$0xff] %v1650
    %1667 = vst [vmem:[#allocation11 + $0x48] sm:$0xff] %v1651
    %1668 = vst [vmem:[#allocation11 + $0x50] sm:$0xff] %v1652
    %1669 = vst [vmem:[#allocation11 + $0x58] sm:$0xff] %v1653
    %1670 = vst [vmem:[#allocation11 + $0x60] sm:$0xff] %v1654
    %1671 = vst [vmem:[#allocation11 + $0x68] sm:$0xff] %v1655
    %1672 = vst [vmem:[#allocation11 + $0x70] sm:$0xff] %v1656
    %1673 = vst [vmem:[#allocation11 + $0x78] sm:$0xff] %v1657
    loop: start=0, step=1, limit=100
    $region33: #{tpu_custom_call.1} parent=1 // loop_pre_header
      _
    $region34: #{tpu_custom_call.1} parent=1 // loop_header
      %s1675 = sphi 0, %s1679
      %p1676 = scmp.ge.s32.totalorder %s1675, 100
    $region35: #{tpu_custom_call.1} parent=1 // loop_header_branch
      %1678 = sbr.rel (%p1676) target = $region39
    $region36: #{tpu_custom_call.1} parent=1 // loop_body
      %s1680 = sld [smem:[#allocation18 + $0x1]]
      %p1681 = scmp.eq.s32.totalorder %s1680, 0
      // Predicated region
      $region40: #{tpu_custom_call.1} parent=36 // pred_check
        %p1682 = pneg %p1681
      $region41: #{tpu_custom_call.1} parent=36 // pred_check_branch
        %1684 = sbr.rel (%p1682) target = $region43
      $region42: #{tpu_custom_call.1} parent=36 // pred_region
        loop: start=0, step=1, limit=144
        $region44: #{tpu_custom_call.1} parent=42 // loop_pre_header
          _
        $region45: #{tpu_custom_call.1} parent=42 // loop_header
          %s1686 = sphi 0, %s1690
          %p1687 = scmp.ge.s32.totalorder %s1686, 144
        $region46: #{tpu_custom_call.1} parent=42 // loop_header_branch
          %1689 = sbr.rel (%p1687) target = $region50
        $region47: #{tpu_custom_call.1} parent=42 // loop_body
          %v1691 = vld [vmem:[#allocation11] sm:$0xff]
          %v1692 = vld [vmem:[#allocation11 + $0x8] sm:$0xff]
          %v1693 = vld [vmem:[#allocation11 + $0x10] sm:$0xff]
          %v1694 = vld [vmem:[#allocation11 + $0x18] sm:$0xff]
          %v1695 = vld [vmem:[#allocation11 + $0x20] sm:$0xff]
          %v1696 = vld [vmem:[#allocation11 + $0x28] sm:$0xff]
          %v1697 = vld [vmem:[#allocation11 + $0x30] sm:$0xff]
          %v1698 = vld [vmem:[#allocation11 + $0x38] sm:$0xff]
          %v1699 = vld [vmem:[#allocation11 + $0x40] sm:$0xff]
          %v1700 = vld [vmem:[#allocation11 + $0x48] sm:$0xff]
          %v1701 = vld [vmem:[#allocation11 + $0x50] sm:$0xff]
          %v1702 = vld [vmem:[#allocation11 + $0x58] sm:$0xff]
          %v1703 = vld [vmem:[#allocation11 + $0x60] sm:$0xff]
          %v1704 = vld [vmem:[#allocation11 + $0x68] sm:$0xff]
          %v1705 = vld [vmem:[#allocation11 + $0x70] sm:$0xff]
          %v1706 = vld [vmem:[#allocation11 + $0x78] sm:$0xff]
          %v1707 = vmul.f32 %v1691, 2.0
          %v1708 = vmul.f32 %v1692, 2.0
          %v1709 = vmul.f32 %v1693, 2.0
          %v1710 = vmul.f32 %v1694, 2.0
          %v1711 = vmul.f32 %v1695, 2.0
          %v1712 = vmul.f32 %v1696, 2.0
          %v1713 = vmul.f32 %v1697, 2.0
          %v1714 = vmul.f32 %v1698, 2.0
          %v1715 = vmul.f32 %v1699, 2.0
          %v1716 = vmul.f32 %v1700, 2.0
          %v1717 = vmul.f32 %v1701, 2.0
          %v1718 = vmul.f32 %v1702, 2.0
          %v1719 = vmul.f32 %v1703, 2.0
          %v1720 = vmul.f32 %v1704, 2.0
          %v1721 = vmul.f32 %v1705, 2.0
          %v1722 = vmul.f32 %v1706, 2.0
          %v1723 = vsub.f32 %v1707, 1.0
          %v1724 = vsub.f32 %v1708, 1.0
          %v1725 = vsub.f32 %v1709, 1.0
          %v1726 = vsub.f32 %v1710, 1.0
          %v1727 = vsub.f32 %v1711, 1.0
          %v1728 = vsub.f32 %v1712, 1.0
          %v1729 = vsub.f32 %v1713, 1.0
          %v1730 = vsub.f32 %v1714, 1.0
          %v1731 = vsub.f32 %v1715, 1.0
          %v1732 = vsub.f32 %v1716, 1.0
          %v1733 = vsub.f32 %v1717, 1.0
          %v1734 = vsub.f32 %v1718, 1.0
          %v1735 = vsub.f32 %v1719, 1.0
          %v1736 = vsub.f32 %v1720, 1.0
          %v1737 = vsub.f32 %v1721, 1.0
          %v1738 = vsub.f32 %v1722, 1.0
          %v1739 = vld [vmem:[#allocation2] sm:$0xff]
          %v1740 = vld [vmem:[#allocation2 + $0x8] sm:$0xff]
          %v1741 = vld [vmem:[#allocation2 + $0x10] sm:$0xff]
          %v1742 = vld [vmem:[#allocation2 + $0x18] sm:$0xff]
          %v1743 = vld [vmem:[#allocation2 + $0x20] sm:$0xff]
          %v1744 = vld [vmem:[#allocation2 + $0x28] sm:$0xff]
          %v1745 = vld [vmem:[#allocation2 + $0x30] sm:$0xff]
          %v1746 = vld [vmem:[#allocation2 + $0x38] sm:$0xff]
          %v1747 = vld [vmem:[#allocation2 + $0x40] sm:$0xff]
          %v1748 = vld [vmem:[#allocation2 + $0x48] sm:$0xff]
          %v1749 = vld [vmem:[#allocation2 + $0x50] sm:$0xff]
          %v1750 = vld [vmem:[#allocation2 + $0x58] sm:$0xff]
          %v1751 = vld [vmem:[#allocation2 + $0x60] sm:$0xff]
          %v1752 = vld [vmem:[#allocation2 + $0x68] sm:$0xff]
          %v1753 = vld [vmem:[#allocation2 + $0x70] sm:$0xff]
          %v1754 = vld [vmem:[#allocation2 + $0x78] sm:$0xff]
          %v1755 = vld [vmem:[#allocation3] sm:$0xff]
          %v1756 = vld [vmem:[#allocation3 + $0x8] sm:$0xff]
          %v1757 = vld [vmem:[#allocation3 + $0x10] sm:$0xff]
          %v1758 = vld [vmem:[#allocation3 + $0x18] sm:$0xff]
          %v1759 = vld [vmem:[#allocation3 + $0x20] sm:$0xff]
          %v1760 = vld [vmem:[#allocation3 + $0x28] sm:$0xff]
          %v1761 = vld [vmem:[#allocation3 + $0x30] sm:$0xff]
          %v1762 = vld [vmem:[#allocation3 + $0x38] sm:$0xff]
          %v1763 = vld [vmem:[#allocation3 + $0x40] sm:$0xff]
          %v1764 = vld [vmem:[#allocation3 + $0x48] sm:$0xff]
          %v1765 = vld [vmem:[#allocation3 + $0x50] sm:$0xff]
          %v1766 = vld [vmem:[#allocation3 + $0x58] sm:$0xff]
          %v1767 = vld [vmem:[#allocation3 + $0x60] sm:$0xff]
          %v1768 = vld [vmem:[#allocation3 + $0x68] sm:$0xff]
          %v1769 = vld [vmem:[#allocation3 + $0x70] sm:$0xff]
          %v1770 = vld [vmem:[#allocation3 + $0x78] sm:$0xff]
          %v1771 = vmul.f32 %v1755, %v1724
          %v1772 = vmul.f32 %v1756, %v1725
          %v1773 = vmul.f32 %v1757, %v1726
          %v1774 = vmul.f32 %v1758, %v1727
          %v1775 = vmul.f32 %v1759, %v1728
          %v1776 = vmul.f32 %v1760, %v1729
          %v1777 = vmul.f32 %v1761, %v1730
          %v1778 = vmul.f32 %v1762, 0.0
          %v1779 = vmul.f32 %v1763, %v1732
          %v1780 = vmul.f32 %v1764, %v1733
          %v1781 = vmul.f32 %v1765, %v1734
          %v1782 = vmul.f32 %v1766, %v1735
          %v1783 = vmul.f32 %v1767, %v1736
          %v1784 = vmul.f32 %v1768, %v1737
          %v1785 = vmul.f32 %v1769, %v1738
          %v1786 = vmul.f32 %v1770, 0.0
          %v1787 = vadd.f32 %v1739, %v1771
          %v1788 = vadd.f32 %v1740, %v1772
          %v1789 = vadd.f32 %v1741, %v1773
          %v1790 = vadd.f32 %v1742, %v1774
          %v1791 = vadd.f32 %v1743, %v1775
          %v1792 = vadd.f32 %v1744, %v1776
          %v1793 = vadd.f32 %v1745, %v1777
          %v1794 = vadd.f32 %v1746, %v1778
          %v1795 = vadd.f32 %v1747, %v1779
          %v1796 = vadd.f32 %v1748, %v1780
          %v1797 = vadd.f32 %v1749, %v1781
          %v1798 = vadd.f32 %v1750, %v1782
          %v1799 = vadd.f32 %v1751, %v1783
          %v1800 = vadd.f32 %v1752, %v1784
          %v1801 = vadd.f32 %v1753, %v1785
          %v1802 = vadd.f32 %v1754, %v1786
          %v1803 = vld [vmem:[#allocation6] sm:$0xff]
          %v1804 = vld [vmem:[#allocation6 + $0x8] sm:$0xff]
          %v1805 = vld [vmem:[#allocation6 + $0x10] sm:$0xff]
          %v1806 = vld [vmem:[#allocation6 + $0x18] sm:$0xff]
          %v1807 = vld [vmem:[#allocation6 + $0x20] sm:$0xff]
          %v1808 = vld [vmem:[#allocation6 + $0x28] sm:$0xff]
          %v1809 = vld [vmem:[#allocation6 + $0x30] sm:$0xff]
          %v1810 = vld [vmem:[#allocation6 + $0x38] sm:$0xff]
          %v1811 = vld [vmem:[#allocation6 + $0x40] sm:$0xff]
          %v1812 = vld [vmem:[#allocation6 + $0x48] sm:$0xff]
          %v1813 = vld [vmem:[#allocation6 + $0x50] sm:$0xff]
          %v1814 = vld [vmem:[#allocation6 + $0x58] sm:$0xff]
          %v1815 = vld [vmem:[#allocation6 + $0x60] sm:$0xff]
          %v1816 = vld [vmem:[#allocation6 + $0x68] sm:$0xff]
          %v1817 = vld [vmem:[#allocation6 + $0x70] sm:$0xff]
          %v1818 = vld [vmem:[#allocation6 + $0x78] sm:$0xff]
          %v1819 = vmul.f32 %v1803, 0.0
          %v1820 = vmul.f32 %v1804, %v1723
          %v1821 = vmul.f32 %v1805, %v1724
          %v1822 = vmul.f32 %v1806, %v1725
          %v1823 = vmul.f32 %v1807, %v1726
          %v1824 = vmul.f32 %v1808, %v1727
          %v1825 = vmul.f32 %v1809, %v1728
          %v1826 = vmul.f32 %v1810, %v1729
          %v1827 = vmul.f32 %v1811, 0.0
          %v1828 = vmul.f32 %v1812, %v1731
          %v1829 = vmul.f32 %v1813, %v1732
          %v1830 = vmul.f32 %v1814, %v1733
          %v1831 = vmul.f32 %v1815, %v1734
          %v1832 = vmul.f32 %v1816, %v1735
          %v1833 = vmul.f32 %v1817, %v1736
          %v1834 = vmul.f32 %v1818, %v1737
          %v1835 = vadd.f32 %v1787, %v1819
          %v1836 = vadd.f32 %v1788, %v1820
          %v1837 = vadd.f32 %v1789, %v1821
          %v1838 = vadd.f32 %v1790, %v1822
          %v1839 = vadd.f32 %v1791, %v1823
          %v1840 = vadd.f32 %v1792, %v1824
          %v1841 = vadd.f32 %v1793, %v1825
          %v1842 = vadd.f32 %v1794, %v1826
          %v1843 = vadd.f32 %v1795, %v1827
          %v1844 = vadd.f32 %v1796, %v1828
          %v1845 = vadd.f32 %v1797, %v1829
          %v1846 = vadd.f32 %v1798, %v1830
          %v1847 = vadd.f32 %v1799, %v1831
          %v1848 = vadd.f32 %v1800, %v1832
          %v1849 = vadd.f32 %v1801, %v1833
          %v1850 = vadd.f32 %v1802, %v1834
          %v1851 = vld [vmem:[#allocation7] sm:$0xff]
          %v1852 = vld [vmem:[#allocation7 + $0x8] sm:$0xff]
          %v1853 = vld [vmem:[#allocation7 + $0x10] sm:$0xff]
          %v1854 = vld [vmem:[#allocation7 + $0x18] sm:$0xff]
          %v1855 = vld [vmem:[#allocation7 + $0x20] sm:$0xff]
          %v1856 = vld [vmem:[#allocation7 + $0x28] sm:$0xff]
          %v1857 = vld [vmem:[#allocation7 + $0x30] sm:$0xff]
          %v1858 = vld [vmem:[#allocation7 + $0x38] sm:$0xff]
          %v1859 = vld [vmem:[#allocation7 + $0x40] sm:$0xff]
          %v1860 = vld [vmem:[#allocation7 + $0x48] sm:$0xff]
          %v1861 = vld [vmem:[#allocation7 + $0x50] sm:$0xff]
          %v1862 = vld [vmem:[#allocation7 + $0x58] sm:$0xff]
          %v1863 = vld [vmem:[#allocation7 + $0x60] sm:$0xff]
          %v1864 = vld [vmem:[#allocation7 + $0x68] sm:$0xff]
          %v1865 = vld [vmem:[#allocation7 + $0x70] sm:$0xff]
          %v1866 = vld [vmem:[#allocation7 + $0x78] sm:$0xff]
          %v1867 = vrot.slane %v1723, 1
          %v1868 = vrot.slane %v1724, 1
          %v1869 = vrot.slane %v1725, 1
          %v1870 = vrot.slane %v1726, 1
          %v1871 = vrot.slane %v1727, 1
          %v1872 = vrot.slane %v1728, 1
          %v1873 = vrot.slane %v1729, 1
          %v1874 = vrot.slane %v1730, 1
          %v1875 = vrot.slane %v1731, 1
          %v1876 = vrot.slane %v1732, 1
          %v1877 = vrot.slane %v1733, 1
          %v1878 = vrot.slane %v1734, 1
          %v1879 = vrot.slane %v1735, 1
          %v1880 = vrot.slane %v1736, 1
          %v1881 = vrot.slane %v1737, 1
          %v1882 = vrot.slane %v1738, 1
          %v1883 = vmul.f32 %v1851, %v1867
          %v1884 = vmul.f32 %v1852, %v1868
          %v1885 = vmul.f32 %v1853, %v1869
          %v1886 = vmul.f32 %v1854, %v1870
          %v1887 = vmul.f32 %v1855, %v1871
          %v1888 = vmul.f32 %v1856, %v1872
          %v1889 = vmul.f32 %v1857, %v1873
          %v1890 = vmul.f32 %v1858, %v1874
          %v1891 = vmul.f32 %v1859, %v1875
          %v1892 = vmul.f32 %v1860, %v1876
          %v1893 = vmul.f32 %v1861, %v1877
          %v1894 = vmul.f32 %v1862, %v1878
          %v1895 = vmul.f32 %v1863, %v1879
          %v1896 = vmul.f32 %v1864, %v1880
          %v1897 = vmul.f32 %v1865, %v1881
          %v1898 = vmul.f32 %v1866, %v1882
          %v1899 = vadd.f32 %v1835, %v1883
          %v1900 = vadd.f32 %v1836, %v1884
          %v1901 = vadd.f32 %v1837, %v1885
          %v1902 = vadd.f32 %v1838, %v1886
          %v1903 = vadd.f32 %v1839, %v1887
          %v1904 = vadd.f32 %v1840, %v1888
          %v1905 = vadd.f32 %v1841, %v1889
          %v1906 = vadd.f32 %v1842, %v1890
          %v1907 = vadd.f32 %v1843, %v1891
          %v1908 = vadd.f32 %v1844, %v1892
          %v1909 = vadd.f32 %v1845, %v1893
          %v1910 = vadd.f32 %v1846, %v1894
          %v1911 = vadd.f32 %v1847, %v1895
          %v1912 = vadd.f32 %v1848, %v1896
          %v1913 = vadd.f32 %v1849, %v1897
          %v1914 = vadd.f32 %v1850, %v1898
          %v1915 = vld [vmem:[#allocation8] sm:$0xff]
          %v1916 = vld [vmem:[#allocation8 + $0x8] sm:$0xff]
          %v1917 = vld [vmem:[#allocation8 + $0x10] sm:$0xff]
          %v1918 = vld [vmem:[#allocation8 + $0x18] sm:$0xff]
          %v1919 = vld [vmem:[#allocation8 + $0x20] sm:$0xff]
          %v1920 = vld [vmem:[#allocation8 + $0x28] sm:$0xff]
          %v1921 = vld [vmem:[#allocation8 + $0x30] sm:$0xff]
          %v1922 = vld [vmem:[#allocation8 + $0x38] sm:$0xff]
          %v1923 = vld [vmem:[#allocation8 + $0x40] sm:$0xff]
          %v1924 = vld [vmem:[#allocation8 + $0x48] sm:$0xff]
          %v1925 = vld [vmem:[#allocation8 + $0x50] sm:$0xff]
          %v1926 = vld [vmem:[#allocation8 + $0x58] sm:$0xff]
          %v1927 = vld [vmem:[#allocation8 + $0x60] sm:$0xff]
          %v1928 = vld [vmem:[#allocation8 + $0x68] sm:$0xff]
          %v1929 = vld [vmem:[#allocation8 + $0x70] sm:$0xff]
          %v1930 = vld [vmem:[#allocation8 + $0x78] sm:$0xff]
          %v1931 = vrot.slane %v1723, 7
          %v1932 = vrot.slane %v1724, 7
          %v1933 = vrot.slane %v1725, 7
          %v1934 = vrot.slane %v1726, 7
          %v1935 = vrot.slane %v1727, 7
          %v1936 = vrot.slane %v1728, 7
          %v1937 = vrot.slane %v1729, 7
          %v1938 = vrot.slane %v1730, 7
          %v1939 = vrot.slane %v1731, 7
          %v1940 = vrot.slane %v1732, 7
          %v1941 = vrot.slane %v1733, 7
          %v1942 = vrot.slane %v1734, 7
          %v1943 = vrot.slane %v1735, 7
          %v1944 = vrot.slane %v1736, 7
          %v1945 = vrot.slane %v1737, 7
          %v1946 = vrot.slane %v1738, 7
          %v1947 = vmul.f32 %v1915, %v1931
          %v1948 = vmul.f32 %v1916, %v1932
          %v1949 = vmul.f32 %v1917, %v1933
          %v1950 = vmul.f32 %v1918, %v1934
          %v1951 = vmul.f32 %v1919, %v1935
          %v1952 = vmul.f32 %v1920, %v1936
          %v1953 = vmul.f32 %v1921, %v1937
          %v1954 = vmul.f32 %v1922, %v1938
          %v1955 = vmul.f32 %v1923, %v1939
          %v1956 = vmul.f32 %v1924, %v1940
          %v1957 = vmul.f32 %v1925, %v1941
          %v1958 = vmul.f32 %v1926, %v1942
          %v1959 = vmul.f32 %v1927, %v1943
          %v1960 = vmul.f32 %v1928, %v1944
          %v1961 = vmul.f32 %v1929, %v1945
          %v1962 = vmul.f32 %v1930, %v1946
          %v1963 = vadd.f32 %v1899, %v1947
          %v1964 = vadd.f32 %v1900, %v1948
          %v1965 = vadd.f32 %v1901, %v1949
          %v1966 = vadd.f32 %v1902, %v1950
          %v1967 = vadd.f32 %v1903, %v1951
          %v1968 = vadd.f32 %v1904, %v1952
          %v1969 = vadd.f32 %v1905, %v1953
          %v1970 = vadd.f32 %v1906, %v1954
          %v1971 = vadd.f32 %v1907, %v1955
          %v1972 = vadd.f32 %v1908, %v1956
          %v1973 = vadd.f32 %v1909, %v1957
          %v1974 = vadd.f32 %v1910, %v1958
          %v1975 = vadd.f32 %v1911, %v1959
          %v1976 = vadd.f32 %v1912, %v1960
          %v1977 = vadd.f32 %v1913, %v1961
          %v1978 = vadd.f32 %v1914, %v1962
          %v1979 = vld [vmem:[#allocation9] sm:$0xff]
          %v1980 = vld [vmem:[#allocation9 + $0x8] sm:$0xff]
          %v1981 = vld [vmem:[#allocation9 + $0x10] sm:$0xff]
          %v1982 = vld [vmem:[#allocation9 + $0x18] sm:$0xff]
          %v1983 = vld [vmem:[#allocation9 + $0x20] sm:$0xff]
          %v1984 = vld [vmem:[#allocation9 + $0x28] sm:$0xff]
          %v1985 = vld [vmem:[#allocation9 + $0x30] sm:$0xff]
          %v1986 = vld [vmem:[#allocation9 + $0x38] sm:$0xff]
          %v1987 = vld [vmem:[#allocation9 + $0x40] sm:$0xff]
          %v1988 = vld [vmem:[#allocation9 + $0x48] sm:$0xff]
          %v1989 = vld [vmem:[#allocation9 + $0x50] sm:$0xff]
          %v1990 = vld [vmem:[#allocation9 + $0x58] sm:$0xff]
          %v1991 = vld [vmem:[#allocation9 + $0x60] sm:$0xff]
          %v1992 = vld [vmem:[#allocation9 + $0x68] sm:$0xff]
          %v1993 = vld [vmem:[#allocation9 + $0x70] sm:$0xff]
          %v1994 = vld [vmem:[#allocation9 + $0x78] sm:$0xff]
          %1995 = vrot.lane.b32.xlu0 %v1723, 127
          %v1996 = vpop.permute.xlu0 %1995
          %1997 = vrot.lane.b32.xlu0 %v1724, 127
          %v1998 = vpop.permute.xlu0 %1997
          %1999 = vrot.lane.b32.xlu0 %v1725, 127
          %v2000 = vpop.permute.xlu0 %1999
          %2001 = vrot.lane.b32.xlu0 %v1726, 127
          %v2002 = vpop.permute.xlu0 %2001
          %2003 = vrot.lane.b32.xlu0 %v1727, 127
          %v2004 = vpop.permute.xlu0 %2003
          %2005 = vrot.lane.b32.xlu0 %v1728, 127
          %v2006 = vpop.permute.xlu0 %2005
          %2007 = vrot.lane.b32.xlu0 %v1729, 127
          %v2008 = vpop.permute.xlu0 %2007
          %2009 = vrot.lane.b32.xlu0 %v1730, 127
          %v2010 = vpop.permute.xlu0 %2009
          %2011 = vrot.lane.b32.xlu0 %v1731, 127
          %v2012 = vpop.permute.xlu0 %2011
          %2013 = vrot.lane.b32.xlu0 %v1732, 127
          %v2014 = vpop.permute.xlu0 %2013
          %2015 = vrot.lane.b32.xlu0 %v1733, 127
          %v2016 = vpop.permute.xlu0 %2015
          %2017 = vrot.lane.b32.xlu0 %v1734, 127
          %v2018 = vpop.permute.xlu0 %2017
          %2019 = vrot.lane.b32.xlu0 %v1735, 127
          %v2020 = vpop.permute.xlu0 %2019
          %2021 = vrot.lane.b32.xlu0 %v1736, 127
          %v2022 = vpop.permute.xlu0 %2021
          %2023 = vrot.lane.b32.xlu0 %v1737, 127
          %v2024 = vpop.permute.xlu0 %2023
          %2025 = vrot.lane.b32.xlu0 %v1738, 127
          %v2026 = vpop.permute.xlu0 %2025
          %v2027 = vmul.f32 %v1979, %v1996
          %v2028 = vmul.f32 %v1980, %v1998
          %v2029 = vmul.f32 %v1981, %v2000
          %v2030 = vmul.f32 %v1982, %v2002
          %v2031 = vmul.f32 %v1983, %v2004
          %v2032 = vmul.f32 %v1984, %v2006
          %v2033 = vmul.f32 %v1985, %v2008
          %v2034 = vmul.f32 %v1986, %v2010
          %v2035 = vmul.f32 %v1987, %v2012
          %v2036 = vmul.f32 %v1988, %v2014
          %v2037 = vmul.f32 %v1989, %v2016
          %v2038 = vmul.f32 %v1990, %v2018
          %v2039 = vmul.f32 %v1991, %v2020
          %v2040 = vmul.f32 %v1992, %v2022
          %v2041 = vmul.f32 %v1993, %v2024
          %v2042 = vmul.f32 %v1994, %v2026
          %v2043 = vadd.f32 %v1963, %v2027
          %v2044 = vadd.f32 %v1964, %v2028
          %v2045 = vadd.f32 %v1965, %v2029
          %v2046 = vadd.f32 %v1966, %v2030
          %v2047 = vadd.f32 %v1967, %v2031
          %v2048 = vadd.f32 %v1968, %v2032
          %v2049 = vadd.f32 %v1969, %v2033
          %v2050 = vadd.f32 %v1970, %v2034
          %v2051 = vadd.f32 %v1971, %v2035
          %v2052 = vadd.f32 %v1972, %v2036
          %v2053 = vadd.f32 %v1973, %v2037
          %v2054 = vadd.f32 %v1974, %v2038
          %v2055 = vadd.f32 %v1975, %v2039
          %v2056 = vadd.f32 %v1976, %v2040
          %v2057 = vadd.f32 %v1977, %v2041
          %v2058 = vadd.f32 %v1978, %v2042
          %v2059 = vld [vmem:[#allocation10] sm:$0xff]
          %v2060 = vld [vmem:[#allocation10 + $0x8] sm:$0xff]
          %v2061 = vld [vmem:[#allocation10 + $0x10] sm:$0xff]
          %v2062 = vld [vmem:[#allocation10 + $0x18] sm:$0xff]
          %v2063 = vld [vmem:[#allocation10 + $0x20] sm:$0xff]
          %v2064 = vld [vmem:[#allocation10 + $0x28] sm:$0xff]
          %v2065 = vld [vmem:[#allocation10 + $0x30] sm:$0xff]
          %v2066 = vld [vmem:[#allocation10 + $0x38] sm:$0xff]
          %v2067 = vld [vmem:[#allocation10 + $0x40] sm:$0xff]
          %v2068 = vld [vmem:[#allocation10 + $0x48] sm:$0xff]
          %v2069 = vld [vmem:[#allocation10 + $0x50] sm:$0xff]
          %v2070 = vld [vmem:[#allocation10 + $0x58] sm:$0xff]
          %v2071 = vld [vmem:[#allocation10 + $0x60] sm:$0xff]
          %v2072 = vld [vmem:[#allocation10 + $0x68] sm:$0xff]
          %v2073 = vld [vmem:[#allocation10 + $0x70] sm:$0xff]
          %v2074 = vld [vmem:[#allocation10 + $0x78] sm:$0xff]
          %2075 = vrot.lane.b32.xlu0 %v1723, 1
          %v2076 = vpop.permute.xlu0 %2075
          %2077 = vrot.lane.b32.xlu0 %v1724, 1
          %v2078 = vpop.permute.xlu0 %2077
          %2079 = vrot.lane.b32.xlu0 %v1725, 1
          %v2080 = vpop.permute.xlu0 %2079
          %2081 = vrot.lane.b32.xlu0 %v1726, 1
          %v2082 = vpop.permute.xlu0 %2081
          %2083 = vrot.lane.b32.xlu0 %v1727, 1
          %v2084 = vpop.permute.xlu0 %2083
          %2085 = vrot.lane.b32.xlu0 %v1728, 1
          %v2086 = vpop.permute.xlu0 %2085
          %2087 = vrot.lane.b32.xlu0 %v1729, 1
          %v2088 = vpop.permute.xlu0 %2087
          %2089 = vrot.lane.b32.xlu0 %v1730, 1
          %v2090 = vpop.permute.xlu0 %2089
          %2091 = vrot.lane.b32.xlu0 %v1731, 1
          %v2092 = vpop.permute.xlu0 %2091
          %2093 = vrot.lane.b32.xlu0 %v1732, 1
          %v2094 = vpop.permute.xlu0 %2093
          %2095 = vrot.lane.b32.xlu0 %v1733, 1
          %v2096 = vpop.permute.xlu0 %2095
          %2097 = vrot.lane.b32.xlu0 %v1734, 1
          %v2098 = vpop.permute.xlu0 %2097
          %2099 = vrot.lane.b32.xlu0 %v1735, 1
          %v2100 = vpop.permute.xlu0 %2099
          %2101 = vrot.lane.b32.xlu0 %v1736, 1
          %v2102 = vpop.permute.xlu0 %2101
          %2103 = vrot.lane.b32.xlu0 %v1737, 1
          %v2104 = vpop.permute.xlu0 %2103
          %2105 = vrot.lane.b32.xlu0 %v1738, 1
          %v2106 = vpop.permute.xlu0 %2105
          %v2107 = vmul.f32 %v2059, %v2076
          %v2108 = vmul.f32 %v2060, %v2078
          %v2109 = vmul.f32 %v2061, %v2080
          %v2110 = vmul.f32 %v2062, %v2082
          %v2111 = vmul.f32 %v2063, %v2084
          %v2112 = vmul.f32 %v2064, %v2086
          %v2113 = vmul.f32 %v2065, %v2088
          %v2114 = vmul.f32 %v2066, %v2090
          %v2115 = vmul.f32 %v2067, %v2092
          %v2116 = vmul.f32 %v2068, %v2094
          %v2117 = vmul.f32 %v2069, %v2096
          %v2118 = vmul.f32 %v2070, %v2098
          %v2119 = vmul.f32 %v2071, %v2100
          %v2120 = vmul.f32 %v2072, %v2102
          %v2121 = vmul.f32 %v2073, %v2104
          %v2122 = vmul.f32 %v2074, %v2106
          %v2123 = vadd.f32 %v2043, %v2107
          %v2124 = vadd.f32 %v2044, %v2108
          %v2125 = vadd.f32 %v2045, %v2109
          %v2126 = vadd.f32 %v2046, %v2110
          %v2127 = vadd.f32 %v2047, %v2111
          %v2128 = vadd.f32 %v2048, %v2112
          %v2129 = vadd.f32 %v2049, %v2113
          %v2130 = vadd.f32 %v2050, %v2114
          %v2131 = vadd.f32 %v2051, %v2115
          %v2132 = vadd.f32 %v2052, %v2116
          %v2133 = vadd.f32 %v2053, %v2117
          %v2134 = vadd.f32 %v2054, %v2118
          %v2135 = vadd.f32 %v2055, %v2119
          %v2136 = vadd.f32 %v2056, %v2120
          %v2137 = vadd.f32 %v2057, %v2121
          %v2138 = vadd.f32 %v2058, %v2122
          %v2139 = vsub.f32 0.0, %v2123
          %v2140 = vsub.f32 0.0, %v2124
          %v2141 = vsub.f32 0.0, %v2125
          %v2142 = vsub.f32 0.0, %v2126
          %v2143 = vsub.f32 0.0, %v2127
          %v2144 = vsub.f32 0.0, %v2128
          %v2145 = vsub.f32 0.0, %v2129
          %v2146 = vsub.f32 0.0, %v2130
          %v2147 = vsub.f32 0.0, %v2131
          %v2148 = vsub.f32 0.0, %v2132
          %v2149 = vsub.f32 0.0, %v2133
          %v2150 = vsub.f32 0.0, %v2134
          %v2151 = vsub.f32 0.0, %v2135
          %v2152 = vsub.f32 0.0, %v2136
          %v2153 = vsub.f32 0.0, %v2137
          %v2154 = vsub.f32 0.0, %v2138
          %v2155 = vmul.f32 %v2139, 1.442695
          %v2156 = vpow.pop %v2155
          %v2157 = vmul.f32 %v2140, 1.442695
          %v2158 = vpow.pop %v2157
          %v2159 = vmul.f32 %v2141, 1.442695
          %v2160 = vpow.pop %v2159
          %v2161 = vmul.f32 %v2142, 1.442695
          %v2162 = vpow.pop %v2161
          %v2163 = vmul.f32 %v2143, 1.442695
          %v2164 = vpow.pop %v2163
          %v2165 = vmul.f32 %v2144, 1.442695
          %v2166 = vpow.pop %v2165
          %v2167 = vmul.f32 %v2145, 1.442695
          %v2168 = vpow.pop %v2167
          %v2169 = vmul.f32 %v2146, 1.442695
          %v2170 = vpow.pop %v2169
          %v2171 = vmul.f32 %v2147, 1.442695
          %v2172 = vpow.pop %v2171
          %v2173 = vmul.f32 %v2148, 1.442695
          %v2174 = vpow.pop %v2173
          %v2175 = vmul.f32 %v2149, 1.442695
          %v2176 = vpow.pop %v2175
          %v2177 = vmul.f32 %v2150, 1.442695
          %v2178 = vpow.pop %v2177
          %v2179 = vmul.f32 %v2151, 1.442695
          %v2180 = vpow.pop %v2179
          %v2181 = vmul.f32 %v2152, 1.442695
          %v2182 = vpow.pop %v2181
          %v2183 = vmul.f32 %v2153, 1.442695
          %v2184 = vpow.pop %v2183
          %v2185 = vmul.f32 %v2154, 1.442695
          %v2186 = vpow.pop %v2185
          %v2187 = vadd.f32 %v2156, 1.0
          %v2188 = vadd.f32 %v2158, 1.0
          %v2189 = vadd.f32 %v2160, 1.0
          %v2190 = vadd.f32 %v2162, 1.0
          %v2191 = vadd.f32 %v2164, 1.0
          %v2192 = vadd.f32 %v2166, 1.0
          %v2193 = vadd.f32 %v2168, 1.0
          %v2194 = vadd.f32 %v2170, 1.0
          %v2195 = vadd.f32 %v2172, 1.0
          %v2196 = vadd.f32 %v2174, 1.0
          %v2197 = vadd.f32 %v2176, 1.0
          %v2198 = vadd.f32 %v2178, 1.0
          %v2199 = vadd.f32 %v2180, 1.0
          %v2200 = vadd.f32 %v2182, 1.0
          %v2201 = vadd.f32 %v2184, 1.0
          %v2202 = vadd.f32 %v2186, 1.0
          %v2203 = vrcp.pop %v2187
          %v2204 = vrcp.pop %v2188
          %v2205 = vrcp.pop %v2189
          %v2206 = vrcp.pop %v2190
          %v2207 = vrcp.pop %v2191
          %v2208 = vrcp.pop %v2192
          %v2209 = vrcp.pop %v2193
          %v2210 = vrcp.pop %v2194
          %v2211 = vrcp.pop %v2195
          %v2212 = vrcp.pop %v2196
          %v2213 = vrcp.pop %v2197
          %v2214 = vrcp.pop %v2198
          %v2215 = vrcp.pop %v2199
          %v2216 = vrcp.pop %v2200
          %v2217 = vrcp.pop %v2201
          %v2218 = vrcp.pop %v2202
          %v2219 = vmul.f32 %v1691, 0.5
          %v2220 = vmul.f32 %v1692, 0.5
          %v2221 = vmul.f32 %v1693, 0.5
          %v2222 = vmul.f32 %v1694, 0.5
          %v2223 = vmul.f32 %v1695, 0.5
          %v2224 = vmul.f32 %v1696, 0.5
          %v2225 = vmul.f32 %v1697, 0.5
          %v2226 = vmul.f32 %v1698, 0.5
          %v2227 = vmul.f32 %v1699, 0.5
          %v2228 = vmul.f32 %v1700, 0.5
          %v2229 = vmul.f32 %v1701, 0.5
          %v2230 = vmul.f32 %v1702, 0.5
          %v2231 = vmul.f32 %v1703, 0.5
          %v2232 = vmul.f32 %v1704, 0.5
          %v2233 = vmul.f32 %v1705, 0.5
          %v2234 = vmul.f32 %v1706, 0.5
          %v2235 = vmul.f32 %v2203, 0.5
          %v2236 = vmul.f32 %v2204, 0.5
          %v2237 = vmul.f32 %v2205, 0.5
          %v2238 = vmul.f32 %v2206, 0.5
          %v2239 = vmul.f32 %v2207, 0.5
          %v2240 = vmul.f32 %v2208, 0.5
          %v2241 = vmul.f32 %v2209, 0.5
          %v2242 = vmul.f32 %v2210, 0.5
          %v2243 = vmul.f32 %v2211, 0.5
          %v2244 = vmul.f32 %v2212, 0.5
          %v2245 = vmul.f32 %v2213, 0.5
          %v2246 = vmul.f32 %v2214, 0.5
          %v2247 = vmul.f32 %v2215, 0.5
          %v2248 = vmul.f32 %v2216, 0.5
          %v2249 = vmul.f32 %v2217, 0.5
          %v2250 = vmul.f32 %v2218, 0.5
          %v2251 = vadd.f32 %v2219, %v2235
          %v2252 = vadd.f32 %v2220, %v2236
          %v2253 = vadd.f32 %v2221, %v2237
          %v2254 = vadd.f32 %v2222, %v2238
          %v2255 = vadd.f32 %v2223, %v2239
          %v2256 = vadd.f32 %v2224, %v2240
          %v2257 = vadd.f32 %v2225, %v2241
          %v2258 = vadd.f32 %v2226, %v2242
          %v2259 = vadd.f32 %v2227, %v2243
          %v2260 = vadd.f32 %v2228, %v2244
          %v2261 = vadd.f32 %v2229, %v2245
          %v2262 = vadd.f32 %v2230, %v2246
          %v2263 = vadd.f32 %v2231, %v2247
          %v2264 = vadd.f32 %v2232, %v2248
          %v2265 = vadd.f32 %v2233, %v2249
          %v2266 = vadd.f32 %v2234, %v2250
          %2267 = vst [vmem:[#allocation11] sm:$0xff] %v2251
          %2268 = vst [vmem:[#allocation11 + $0x8] sm:$0xff] %v2252
          %2269 = vst [vmem:[#allocation11 + $0x10] sm:$0xff] %v2253
          %2270 = vst [vmem:[#allocation11 + $0x18] sm:$0xff] %v2254
          %2271 = vst [vmem:[#allocation11 + $0x20] sm:$0xff] %v2255
          %2272 = vst [vmem:[#allocation11 + $0x28] sm:$0xff] %v2256
          %2273 = vst [vmem:[#allocation11 + $0x30] sm:$0xff] %v2257
          %2274 = vst [vmem:[#allocation11 + $0x38] sm:$0xff] %v2258
          %2275 = vst [vmem:[#allocation11 + $0x40] sm:$0xff] %v2259
          %2276 = vst [vmem:[#allocation11 + $0x48] sm:$0xff] %v2260
          %2277 = vst [vmem:[#allocation11 + $0x50] sm:$0xff] %v2261
          %2278 = vst [vmem:[#allocation11 + $0x58] sm:$0xff] %v2262
          %2279 = vst [vmem:[#allocation11 + $0x60] sm:$0xff] %v2263
          %2280 = vst [vmem:[#allocation11 + $0x68] sm:$0xff] %v2264
          %2281 = vst [vmem:[#allocation11 + $0x70] sm:$0xff] %v2265
          %2282 = vst [vmem:[#allocation11 + $0x78] sm:$0xff] %v2266
          %p2283 = scmp.eq.s32.totalorder %s1686, 143
          // Predicated region
          $region51: #{tpu_custom_call.1} parent=47 // pred_check
            %p2284 = pneg %p2283
          $region52: #{tpu_custom_call.1} parent=47 // pred_check_branch
            %2286 = sbr.rel (%p2284) target = $region54
          $region53: #{tpu_custom_call.1} parent=47 // pred_region
            %v2287 = vsub.f32 %v2203, %v1691
            %v2288 = vsub.f32 %v2204, %v1692
            %v2289 = vsub.f32 %v2205, %v1693
            %v2290 = vsub.f32 %v2206, %v1694
            %v2291 = vsub.f32 %v2207, %v1695
            %v2292 = vsub.f32 %v2208, %v1696
            %v2293 = vsub.f32 %v2209, %v1697
            %v2294 = vsub.f32 %v2210, %v1698
            %v2295 = vsub.f32 %v2211, %v1699
            %v2296 = vsub.f32 %v2212, %v1700
            %v2297 = vsub.f32 %v2213, %v1701
            %v2298 = vsub.f32 %v2214, %v1702
            %v2299 = vsub.f32 %v2215, %v1703
            %v2300 = vsub.f32 %v2216, %v1704
            %v2301 = vsub.f32 %v2217, %v1705
            %v2302 = vsub.f32 %v2218, %v1706
            %v2303 = vand.u32 2147483647, %v2287
            %v2304 = vand.u32 2147483647, %v2288
            %v2305 = vand.u32 2147483647, %v2289
            %v2306 = vand.u32 2147483647, %v2290
            %v2307 = vand.u32 2147483647, %v2291
            %v2308 = vand.u32 2147483647, %v2292
            %v2309 = vand.u32 2147483647, %v2293
            %v2310 = vand.u32 2147483647, %v2294
            %v2311 = vand.u32 2147483647, %v2295
            %v2312 = vand.u32 2147483647, %v2296
            %v2313 = vand.u32 2147483647, %v2297
            %v2314 = vand.u32 2147483647, %v2298
            %v2315 = vand.u32 2147483647, %v2299
            %v2316 = vand.u32 2147483647, %v2300
            %v2317 = vand.u32 2147483647, %v2301
            %v2318 = vand.u32 2147483647, %v2302
            %v2319 = vmax.f32 %v2303, %v2307
            %v2320 = vmax.f32 %v2304, %v2308
            %v2321 = vmax.f32 %v2305, %v2309
            %v2322 = vmax.f32 %v2306, %v2310
            %v2323 = vmax.f32 %v2319, %v2311
            %v2324 = vmax.f32 %v2320, %v2312
            %v2325 = vmax.f32 %v2321, %v2313
            %v2326 = vmax.f32 %v2322, %v2314
            %v2327 = vmax.f32 %v2323, %v2315
            %v2328 = vmax.f32 %v2324, %v2316
            %v2329 = vmax.f32 %v2325, %v2317
            %v2330 = vmax.f32 %v2326, %v2318
            %v2331 = vmax.f32 %v2327, %v2328
            %v2332 = vmax.f32 %v2329, %v2330
            %v2333 = vmax.f32 %v2331, %v2332
            %2334 = vmax.xlane.f32.xlu0 %v2333
            %v2335 = vpop.xlane.xlu0 %2334
            %v2336 = vrot.slane %v2335, 4
            %v2337 = vmax.f32 %v2335, %v2336
            %v2338 = vrot.slane %v2337, 2
            %v2339 = vmax.f32 %v2337, %v2338
            %v2340 = vrot.slane %v2339, 1
            %v2341 = vmax.f32 %v2339, %v2340
            %s2342 = vtos %v2341
            %s2343 = smul.f32 %s2342, 0.5
            %p2344 = scmp.lt.f32.partialorder %s2343, 0.01
            %s2345 = scalar_select %p2344, 1, 0
            %2346 = sst [smem:[%s596]] %s2345
          $region54: #{tpu_custom_call.1} parent=47 // pred_fallthru
            _
        $region48: #{tpu_custom_call.1} parent=42 // loop_footer
          %s1690 = sadd.s32 1, %s1686
        $region49: #{tpu_custom_call.1} parent=42 // loop_footer_branch
          %1685 = sbr.rel target = $region45
        $region50: #{tpu_custom_call.1} parent=42 // loop_exit
          _
      $region43: #{tpu_custom_call.1} parent=36 // pred_fallthru
        _
    $region37: #{tpu_custom_call.1} parent=1 // loop_footer
      %s1679 = sadd.s32 1, %s1675
    $region38: #{tpu_custom_call.1} parent=1 // loop_footer_branch
      %1674 = sbr.rel target = $region34
    $region39: #{tpu_custom_call.1} parent=1 // loop_exit
      _
    loop: start=0, step=1, limit=144
    $region55: #{tpu_custom_call.1} parent=1 // loop_pre_header
      _
    $region56: #{tpu_custom_call.1} parent=1 // loop_header
      %s2348 = sphi 0, %s2352
      %p2349 = scmp.ge.s32.totalorder %s2348, 144
    $region57: #{tpu_custom_call.1} parent=1 // loop_header_branch
      %2351 = sbr.rel (%p2349) target = $region61
    $region58: #{tpu_custom_call.1} parent=1 // loop_body
      %v2353 = vld [vmem:[#allocation11] sm:$0xff]
      %v2354 = vld [vmem:[#allocation11 + $0x8] sm:$0xff]
      %v2355 = vld [vmem:[#allocation11 + $0x10] sm:$0xff]
      %v2356 = vld [vmem:[#allocation11 + $0x18] sm:$0xff]
      %v2357 = vld [vmem:[#allocation11 + $0x20] sm:$0xff]
      %v2358 = vld [vmem:[#allocation11 + $0x28] sm:$0xff]
      %v2359 = vld [vmem:[#allocation11 + $0x30] sm:$0xff]
      %v2360 = vld [vmem:[#allocation11 + $0x38] sm:$0xff]
      %v2361 = vld [vmem:[#allocation11 + $0x40] sm:$0xff]
      %v2362 = vld [vmem:[#allocation11 + $0x48] sm:$0xff]
      %v2363 = vld [vmem:[#allocation11 + $0x50] sm:$0xff]
      %v2364 = vld [vmem:[#allocation11 + $0x58] sm:$0xff]
      %v2365 = vld [vmem:[#allocation11 + $0x60] sm:$0xff]
      %v2366 = vld [vmem:[#allocation11 + $0x68] sm:$0xff]
      %v2367 = vld [vmem:[#allocation11 + $0x70] sm:$0xff]
      %v2368 = vld [vmem:[#allocation11 + $0x78] sm:$0xff]
      %v2369 = vmul.f32 %v2353, 0.5
      %v2370 = vmul.f32 %v2354, 0.5
      %v2371 = vmul.f32 %v2355, 0.5
      %v2372 = vmul.f32 %v2356, 0.5
      %v2373 = vmul.f32 %v2357, 0.5
      %v2374 = vmul.f32 %v2358, 0.5
      %v2375 = vmul.f32 %v2359, 0.5
      %v2376 = vmul.f32 %v2360, 0.5
      %v2377 = vmul.f32 %v2361, 0.5
      %v2378 = vmul.f32 %v2362, 0.5
      %v2379 = vmul.f32 %v2363, 0.5
      %v2380 = vmul.f32 %v2364, 0.5
      %v2381 = vmul.f32 %v2365, 0.5
      %v2382 = vmul.f32 %v2366, 0.5
      %v2383 = vmul.f32 %v2367, 0.5
      %v2384 = vmul.f32 %v2368, 0.5
      %v2385 = vmul.f32 %v2353, 2.0
      %v2386 = vmul.f32 %v2354, 2.0
      %v2387 = vmul.f32 %v2355, 2.0
      %v2388 = vmul.f32 %v2356, 2.0
      %v2389 = vmul.f32 %v2357, 2.0
      %v2390 = vmul.f32 %v2358, 2.0
      %v2391 = vmul.f32 %v2359, 2.0
      %v2392 = vmul.f32 %v2360, 2.0
      %v2393 = vmul.f32 %v2361, 2.0
      %v2394 = vmul.f32 %v2362, 2.0
      %v2395 = vmul.f32 %v2363, 2.0
      %v2396 = vmul.f32 %v2364, 2.0
      %v2397 = vmul.f32 %v2365, 2.0
      %v2398 = vmul.f32 %v2366, 2.0
      %v2399 = vmul.f32 %v2367, 2.0
      %v2400 = vmul.f32 %v2368, 2.0
      %v2401 = vsub.f32 %v2385, 1.0
      %v2402 = vsub.f32 %v2386, 1.0
      %v2403 = vsub.f32 %v2387, 1.0
      %v2404 = vsub.f32 %v2388, 1.0
      %v2405 = vsub.f32 %v2389, 1.0
      %v2406 = vsub.f32 %v2390, 1.0
      %v2407 = vsub.f32 %v2391, 1.0
      %v2408 = vsub.f32 %v2392, 1.0
      %v2409 = vsub.f32 %v2393, 1.0
      %v2410 = vsub.f32 %v2394, 1.0
      %v2411 = vsub.f32 %v2395, 1.0
      %v2412 = vsub.f32 %v2396, 1.0
      %v2413 = vsub.f32 %v2397, 1.0
      %v2414 = vsub.f32 %v2398, 1.0
      %v2415 = vsub.f32 %v2399, 1.0
      %v2416 = vsub.f32 %v2400, 1.0
      %v2417 = vld [vmem:[#allocation2] sm:$0xff]
      %v2418 = vld [vmem:[#allocation2 + $0x8] sm:$0xff]
      %v2419 = vld [vmem:[#allocation2 + $0x10] sm:$0xff]
      %v2420 = vld [vmem:[#allocation2 + $0x18] sm:$0xff]
      %v2421 = vld [vmem:[#allocation2 + $0x20] sm:$0xff]
      %v2422 = vld [vmem:[#allocation2 + $0x28] sm:$0xff]
      %v2423 = vld [vmem:[#allocation2 + $0x30] sm:$0xff]
      %v2424 = vld [vmem:[#allocation2 + $0x38] sm:$0xff]
      %v2425 = vld [vmem:[#allocation2 + $0x40] sm:$0xff]
      %v2426 = vld [vmem:[#allocation2 + $0x48] sm:$0xff]
      %v2427 = vld [vmem:[#allocation2 + $0x50] sm:$0xff]
      %v2428 = vld [vmem:[#allocation2 + $0x58] sm:$0xff]
      %v2429 = vld [vmem:[#allocation2 + $0x60] sm:$0xff]
      %v2430 = vld [vmem:[#allocation2 + $0x68] sm:$0xff]
      %v2431 = vld [vmem:[#allocation2 + $0x70] sm:$0xff]
      %v2432 = vld [vmem:[#allocation2 + $0x78] sm:$0xff]
      %v2433 = vld [vmem:[#allocation3] sm:$0xff]
      %v2434 = vld [vmem:[#allocation3 + $0x8] sm:$0xff]
      %v2435 = vld [vmem:[#allocation3 + $0x10] sm:$0xff]
      %v2436 = vld [vmem:[#allocation3 + $0x18] sm:$0xff]
      %v2437 = vld [vmem:[#allocation3 + $0x20] sm:$0xff]
      %v2438 = vld [vmem:[#allocation3 + $0x28] sm:$0xff]
      %v2439 = vld [vmem:[#allocation3 + $0x30] sm:$0xff]
      %v2440 = vld [vmem:[#allocation3 + $0x38] sm:$0xff]
      %v2441 = vld [vmem:[#allocation3 + $0x40] sm:$0xff]
      %v2442 = vld [vmem:[#allocation3 + $0x48] sm:$0xff]
      %v2443 = vld [vmem:[#allocation3 + $0x50] sm:$0xff]
      %v2444 = vld [vmem:[#allocation3 + $0x58] sm:$0xff]
      %v2445 = vld [vmem:[#allocation3 + $0x60] sm:$0xff]
      %v2446 = vld [vmem:[#allocation3 + $0x68] sm:$0xff]
      %v2447 = vld [vmem:[#allocation3 + $0x70] sm:$0xff]
      %v2448 = vld [vmem:[#allocation3 + $0x78] sm:$0xff]
      %v2449 = vmul.f32 %v2433, %v2402
      %v2450 = vmul.f32 %v2434, %v2403
      %v2451 = vmul.f32 %v2435, %v2404
      %v2452 = vmul.f32 %v2436, %v2405
      %v2453 = vmul.f32 %v2437, %v2406
      %v2454 = vmul.f32 %v2438, %v2407
      %v2455 = vmul.f32 %v2439, %v2408
      %v2456 = vmul.f32 %v2440, 0.0
      %v2457 = vmul.f32 %v2441, %v2410
      %v2458 = vmul.f32 %v2442, %v2411
      %v2459 = vmul.f32 %v2443, %v2412
      %v2460 = vmul.f32 %v2444, %v2413
      %v2461 = vmul.f32 %v2445, %v2414
      %v2462 = vmul.f32 %v2446, %v2415
      %v2463 = vmul.f32 %v2447, %v2416
      %v2464 = vmul.f32 %v2448, 0.0
      %v2465 = vadd.f32 %v2417, %v2449
      %v2466 = vadd.f32 %v2418, %v2450
      %v2467 = vadd.f32 %v2419, %v2451
      %v2468 = vadd.f32 %v2420, %v2452
      %v2469 = vadd.f32 %v2421, %v2453
      %v2470 = vadd.f32 %v2422, %v2454
      %v2471 = vadd.f32 %v2423, %v2455
      %v2472 = vadd.f32 %v2424, %v2456
      %v2473 = vadd.f32 %v2425, %v2457
      %v2474 = vadd.f32 %v2426, %v2458
      %v2475 = vadd.f32 %v2427, %v2459
      %v2476 = vadd.f32 %v2428, %v2460
      %v2477 = vadd.f32 %v2429, %v2461
      %v2478 = vadd.f32 %v2430, %v2462
      %v2479 = vadd.f32 %v2431, %v2463
      %v2480 = vadd.f32 %v2432, %v2464
      %v2481 = vld [vmem:[#allocation6] sm:$0xff]
      %v2482 = vld [vmem:[#allocation6 + $0x8] sm:$0xff]
      %v2483 = vld [vmem:[#allocation6 + $0x10] sm:$0xff]
      %v2484 = vld [vmem:[#allocation6 + $0x18] sm:$0xff]
      %v2485 = vld [vmem:[#allocation6 + $0x20] sm:$0xff]
      %v2486 = vld [vmem:[#allocation6 + $0x28] sm:$0xff]
      %v2487 = vld [vmem:[#allocation6 + $0x30] sm:$0xff]
      %v2488 = vld [vmem:[#allocation6 + $0x38] sm:$0xff]
      %v2489 = vld [vmem:[#allocation6 + $0x40] sm:$0xff]
      %v2490 = vld [vmem:[#allocation6 + $0x48] sm:$0xff]
      %v2491 = vld [vmem:[#allocation6 + $0x50] sm:$0xff]
      %v2492 = vld [vmem:[#allocation6 + $0x58] sm:$0xff]
      %v2493 = vld [vmem:[#allocation6 + $0x60] sm:$0xff]
      %v2494 = vld [vmem:[#allocation6 + $0x68] sm:$0xff]
      %v2495 = vld [vmem:[#allocation6 + $0x70] sm:$0xff]
      %v2496 = vld [vmem:[#allocation6 + $0x78] sm:$0xff]
      %v2497 = vmul.f32 %v2481, 0.0
      %v2498 = vmul.f32 %v2482, %v2401
      %v2499 = vmul.f32 %v2483, %v2402
      %v2500 = vmul.f32 %v2484, %v2403
      %v2501 = vmul.f32 %v2485, %v2404
      %v2502 = vmul.f32 %v2486, %v2405
      %v2503 = vmul.f32 %v2487, %v2406
      %v2504 = vmul.f32 %v2488, %v2407
      %v2505 = vmul.f32 %v2489, 0.0
      %v2506 = vmul.f32 %v2490, %v2409
      %v2507 = vmul.f32 %v2491, %v2410
      %v2508 = vmul.f32 %v2492, %v2411
      %v2509 = vmul.f32 %v2493, %v2412
      %v2510 = vmul.f32 %v2494, %v2413
      %v2511 = vmul.f32 %v2495, %v2414
      %v2512 = vmul.f32 %v2496, %v2415
      %v2513 = vadd.f32 %v2465, %v2497
      %v2514 = vadd.f32 %v2466, %v2498
      %v2515 = vadd.f32 %v2467, %v2499
      %v2516 = vadd.f32 %v2468, %v2500
      %v2517 = vadd.f32 %v2469, %v2501
      %v2518 = vadd.f32 %v2470, %v2502
      %v2519 = vadd.f32 %v2471, %v2503
      %v2520 = vadd.f32 %v2472, %v2504
      %v2521 = vadd.f32 %v2473, %v2505
      %v2522 = vadd.f32 %v2474, %v2506
      %v2523 = vadd.f32 %v2475, %v2507
      %v2524 = vadd.f32 %v2476, %v2508
      %v2525 = vadd.f32 %v2477, %v2509
      %v2526 = vadd.f32 %v2478, %v2510
      %v2527 = vadd.f32 %v2479, %v2511
      %v2528 = vadd.f32 %v2480, %v2512
      %v2529 = vld [vmem:[#allocation7] sm:$0xff]
      %v2530 = vld [vmem:[#allocation7 + $0x8] sm:$0xff]
      %v2531 = vld [vmem:[#allocation7 + $0x10] sm:$0xff]
      %v2532 = vld [vmem:[#allocation7 + $0x18] sm:$0xff]
      %v2533 = vld [vmem:[#allocation7 + $0x20] sm:$0xff]
      %v2534 = vld [vmem:[#allocation7 + $0x28] sm:$0xff]
      %v2535 = vld [vmem:[#allocation7 + $0x30] sm:$0xff]
      %v2536 = vld [vmem:[#allocation7 + $0x38] sm:$0xff]
      %v2537 = vld [vmem:[#allocation7 + $0x40] sm:$0xff]
      %v2538 = vld [vmem:[#allocation7 + $0x48] sm:$0xff]
      %v2539 = vld [vmem:[#allocation7 + $0x50] sm:$0xff]
      %v2540 = vld [vmem:[#allocation7 + $0x58] sm:$0xff]
      %v2541 = vld [vmem:[#allocation7 + $0x60] sm:$0xff]
      %v2542 = vld [vmem:[#allocation7 + $0x68] sm:$0xff]
      %v2543 = vld [vmem:[#allocation7 + $0x70] sm:$0xff]
      %v2544 = vld [vmem:[#allocation7 + $0x78] sm:$0xff]
      %v2545 = vrot.slane %v2401, 1
      %v2546 = vrot.slane %v2402, 1
      %v2547 = vrot.slane %v2403, 1
      %v2548 = vrot.slane %v2404, 1
      %v2549 = vrot.slane %v2405, 1
      %v2550 = vrot.slane %v2406, 1
      %v2551 = vrot.slane %v2407, 1
      %v2552 = vrot.slane %v2408, 1
      %v2553 = vrot.slane %v2409, 1
      %v2554 = vrot.slane %v2410, 1
      %v2555 = vrot.slane %v2411, 1
      %v2556 = vrot.slane %v2412, 1
      %v2557 = vrot.slane %v2413, 1
      %v2558 = vrot.slane %v2414, 1
      %v2559 = vrot.slane %v2415, 1
      %v2560 = vrot.slane %v2416, 1
      %v2561 = vmul.f32 %v2529, %v2545
      %v2562 = vmul.f32 %v2530, %v2546
      %v2563 = vmul.f32 %v2531, %v2547
      %v2564 = vmul.f32 %v2532, %v2548
      %v2565 = vmul.f32 %v2533, %v2549
      %v2566 = vmul.f32 %v2534, %v2550
      %v2567 = vmul.f32 %v2535, %v2551
      %v2568 = vmul.f32 %v2536, %v2552
      %v2569 = vmul.f32 %v2537, %v2553
      %v2570 = vmul.f32 %v2538, %v2554
      %v2571 = vmul.f32 %v2539, %v2555
      %v2572 = vmul.f32 %v2540, %v2556
      %v2573 = vmul.f32 %v2541, %v2557
      %v2574 = vmul.f32 %v2542, %v2558
      %v2575 = vmul.f32 %v2543, %v2559
      %v2576 = vmul.f32 %v2544, %v2560
      %v2577 = vadd.f32 %v2513, %v2561
      %v2578 = vadd.f32 %v2514, %v2562
      %v2579 = vadd.f32 %v2515, %v2563
      %v2580 = vadd.f32 %v2516, %v2564
      %v2581 = vadd.f32 %v2517, %v2565
      %v2582 = vadd.f32 %v2518, %v2566
      %v2583 = vadd.f32 %v2519, %v2567
      %v2584 = vadd.f32 %v2520, %v2568
      %v2585 = vadd.f32 %v2521, %v2569
      %v2586 = vadd.f32 %v2522, %v2570
      %v2587 = vadd.f32 %v2523, %v2571
      %v2588 = vadd.f32 %v2524, %v2572
      %v2589 = vadd.f32 %v2525, %v2573
      %v2590 = vadd.f32 %v2526, %v2574
      %v2591 = vadd.f32 %v2527, %v2575
      %v2592 = vadd.f32 %v2528, %v2576
      %v2593 = vld [vmem:[#allocation8] sm:$0xff]
      %v2594 = vld [vmem:[#allocation8 + $0x8] sm:$0xff]
      %v2595 = vld [vmem:[#allocation8 + $0x10] sm:$0xff]
      %v2596 = vld [vmem:[#allocation8 + $0x18] sm:$0xff]
      %v2597 = vld [vmem:[#allocation8 + $0x20] sm:$0xff]
      %v2598 = vld [vmem:[#allocation8 + $0x28] sm:$0xff]
      %v2599 = vld [vmem:[#allocation8 + $0x30] sm:$0xff]
      %v2600 = vld [vmem:[#allocation8 + $0x38] sm:$0xff]
      %v2601 = vld [vmem:[#allocation8 + $0x40] sm:$0xff]
      %v2602 = vld [vmem:[#allocation8 + $0x48] sm:$0xff]
      %v2603 = vld [vmem:[#allocation8 + $0x50] sm:$0xff]
      %v2604 = vld [vmem:[#allocation8 + $0x58] sm:$0xff]
      %v2605 = vld [vmem:[#allocation8 + $0x60] sm:$0xff]
      %v2606 = vld [vmem:[#allocation8 + $0x68] sm:$0xff]
      %v2607 = vld [vmem:[#allocation8 + $0x70] sm:$0xff]
      %v2608 = vld [vmem:[#allocation8 + $0x78] sm:$0xff]
      %v2609 = vrot.slane %v2401, 7
      %v2610 = vrot.slane %v2402, 7
      %v2611 = vrot.slane %v2403, 7
      %v2612 = vrot.slane %v2404, 7
      %v2613 = vrot.slane %v2405, 7
      %v2614 = vrot.slane %v2406, 7
      %v2615 = vrot.slane %v2407, 7
      %v2616 = vrot.slane %v2408, 7
      %v2617 = vrot.slane %v2409, 7
      %v2618 = vrot.slane %v2410, 7
      %v2619 = vrot.slane %v2411, 7
      %v2620 = vrot.slane %v2412, 7
      %v2621 = vrot.slane %v2413, 7
      %v2622 = vrot.slane %v2414, 7
      %v2623 = vrot.slane %v2415, 7
      %v2624 = vrot.slane %v2416, 7
      %v2625 = vmul.f32 %v2593, %v2609
      %v2626 = vmul.f32 %v2594, %v2610
      %v2627 = vmul.f32 %v2595, %v2611
      %v2628 = vmul.f32 %v2596, %v2612
      %v2629 = vmul.f32 %v2597, %v2613
      %v2630 = vmul.f32 %v2598, %v2614
      %v2631 = vmul.f32 %v2599, %v2615
      %v2632 = vmul.f32 %v2600, %v2616
      %v2633 = vmul.f32 %v2601, %v2617
      %v2634 = vmul.f32 %v2602, %v2618
      %v2635 = vmul.f32 %v2603, %v2619
      %v2636 = vmul.f32 %v2604, %v2620
      %v2637 = vmul.f32 %v2605, %v2621
      %v2638 = vmul.f32 %v2606, %v2622
      %v2639 = vmul.f32 %v2607, %v2623
      %v2640 = vmul.f32 %v2608, %v2624
      %v2641 = vadd.f32 %v2577, %v2625
      %v2642 = vadd.f32 %v2578, %v2626
      %v2643 = vadd.f32 %v2579, %v2627
      %v2644 = vadd.f32 %v2580, %v2628
      %v2645 = vadd.f32 %v2581, %v2629
      %v2646 = vadd.f32 %v2582, %v2630
      %v2647 = vadd.f32 %v2583, %v2631
      %v2648 = vadd.f32 %v2584, %v2632
      %v2649 = vadd.f32 %v2585, %v2633
      %v2650 = vadd.f32 %v2586, %v2634
      %v2651 = vadd.f32 %v2587, %v2635
      %v2652 = vadd.f32 %v2588, %v2636
      %v2653 = vadd.f32 %v2589, %v2637
      %v2654 = vadd.f32 %v2590, %v2638
      %v2655 = vadd.f32 %v2591, %v2639
      %v2656 = vadd.f32 %v2592, %v2640
      %v2657 = vld [vmem:[#allocation9] sm:$0xff]
      %v2658 = vld [vmem:[#allocation9 + $0x8] sm:$0xff]
      %v2659 = vld [vmem:[#allocation9 + $0x10] sm:$0xff]
      %v2660 = vld [vmem:[#allocation9 + $0x18] sm:$0xff]
      %v2661 = vld [vmem:[#allocation9 + $0x20] sm:$0xff]
      %v2662 = vld [vmem:[#allocation9 + $0x28] sm:$0xff]
      %v2663 = vld [vmem:[#allocation9 + $0x30] sm:$0xff]
      %v2664 = vld [vmem:[#allocation9 + $0x38] sm:$0xff]
      %v2665 = vld [vmem:[#allocation9 + $0x40] sm:$0xff]
      %v2666 = vld [vmem:[#allocation9 + $0x48] sm:$0xff]
      %v2667 = vld [vmem:[#allocation9 + $0x50] sm:$0xff]
      %v2668 = vld [vmem:[#allocation9 + $0x58] sm:$0xff]
      %v2669 = vld [vmem:[#allocation9 + $0x60] sm:$0xff]
      %v2670 = vld [vmem:[#allocation9 + $0x68] sm:$0xff]
      %v2671 = vld [vmem:[#allocation9 + $0x70] sm:$0xff]
      %v2672 = vld [vmem:[#allocation9 + $0x78] sm:$0xff]
      %2673 = vrot.lane.b32.xlu0 %v2401, 127
      %v2674 = vpop.permute.xlu0 %2673
      %2675 = vrot.lane.b32.xlu0 %v2402, 127
      %v2676 = vpop.permute.xlu0 %2675
      %2677 = vrot.lane.b32.xlu0 %v2403, 127
      %v2678 = vpop.permute.xlu0 %2677
      %2679 = vrot.lane.b32.xlu0 %v2404, 127
      %v2680 = vpop.permute.xlu0 %2679
      %2681 = vrot.lane.b32.xlu0 %v2405, 127
      %v2682 = vpop.permute.xlu0 %2681
      %2683 = vrot.lane.b32.xlu0 %v2406, 127
      %v2684 = vpop.permute.xlu0 %2683
      %2685 = vrot.lane.b32.xlu0 %v2407, 127
      %v2686 = vpop.permute.xlu0 %2685
      %2687 = vrot.lane.b32.xlu0 %v2408, 127
      %v2688 = vpop.permute.xlu0 %2687
      %2689 = vrot.lane.b32.xlu0 %v2409, 127
      %v2690 = vpop.permute.xlu0 %2689
      %2691 = vrot.lane.b32.xlu0 %v2410, 127
      %v2692 = vpop.permute.xlu0 %2691
      %2693 = vrot.lane.b32.xlu0 %v2411, 127
      %v2694 = vpop.permute.xlu0 %2693
      %2695 = vrot.lane.b32.xlu0 %v2412, 127
      %v2696 = vpop.permute.xlu0 %2695
      %2697 = vrot.lane.b32.xlu0 %v2413, 127
      %v2698 = vpop.permute.xlu0 %2697
      %2699 = vrot.lane.b32.xlu0 %v2414, 127
      %v2700 = vpop.permute.xlu0 %2699
      %2701 = vrot.lane.b32.xlu0 %v2415, 127
      %v2702 = vpop.permute.xlu0 %2701
      %2703 = vrot.lane.b32.xlu0 %v2416, 127
      %v2704 = vpop.permute.xlu0 %2703
      %v2705 = vmul.f32 %v2657, %v2674
      %v2706 = vmul.f32 %v2658, %v2676
      %v2707 = vmul.f32 %v2659, %v2678
      %v2708 = vmul.f32 %v2660, %v2680
      %v2709 = vmul.f32 %v2661, %v2682
      %v2710 = vmul.f32 %v2662, %v2684
      %v2711 = vmul.f32 %v2663, %v2686
      %v2712 = vmul.f32 %v2664, %v2688
      %v2713 = vmul.f32 %v2665, %v2690
      %v2714 = vmul.f32 %v2666, %v2692
      %v2715 = vmul.f32 %v2667, %v2694
      %v2716 = vmul.f32 %v2668, %v2696
      %v2717 = vmul.f32 %v2669, %v2698
      %v2718 = vmul.f32 %v2670, %v2700
      %v2719 = vmul.f32 %v2671, %v2702
      %v2720 = vmul.f32 %v2672, %v2704
      %v2721 = vadd.f32 %v2641, %v2705
      %v2722 = vadd.f32 %v2642, %v2706
      %v2723 = vadd.f32 %v2643, %v2707
      %v2724 = vadd.f32 %v2644, %v2708
      %v2725 = vadd.f32 %v2645, %v2709
      %v2726 = vadd.f32 %v2646, %v2710
      %v2727 = vadd.f32 %v2647, %v2711
      %v2728 = vadd.f32 %v2648, %v2712
      %v2729 = vadd.f32 %v2649, %v2713
      %v2730 = vadd.f32 %v2650, %v2714
      %v2731 = vadd.f32 %v2651, %v2715
      %v2732 = vadd.f32 %v2652, %v2716
      %v2733 = vadd.f32 %v2653, %v2717
      %v2734 = vadd.f32 %v2654, %v2718
      %v2735 = vadd.f32 %v2655, %v2719
      %v2736 = vadd.f32 %v2656, %v2720
      %v2737 = vld [vmem:[#allocation10] sm:$0xff]
      %v2738 = vld [vmem:[#allocation10 + $0x8] sm:$0xff]
      %v2739 = vld [vmem:[#allocation10 + $0x10] sm:$0xff]
      %v2740 = vld [vmem:[#allocation10 + $0x18] sm:$0xff]
      %v2741 = vld [vmem:[#allocation10 + $0x20] sm:$0xff]
      %v2742 = vld [vmem:[#allocation10 + $0x28] sm:$0xff]
      %v2743 = vld [vmem:[#allocation10 + $0x30] sm:$0xff]
      %v2744 = vld [vmem:[#allocation10 + $0x38] sm:$0xff]
      %v2745 = vld [vmem:[#allocation10 + $0x40] sm:$0xff]
      %v2746 = vld [vmem:[#allocation10 + $0x48] sm:$0xff]
      %v2747 = vld [vmem:[#allocation10 + $0x50] sm:$0xff]
      %v2748 = vld [vmem:[#allocation10 + $0x58] sm:$0xff]
      %v2749 = vld [vmem:[#allocation10 + $0x60] sm:$0xff]
      %v2750 = vld [vmem:[#allocation10 + $0x68] sm:$0xff]
      %v2751 = vld [vmem:[#allocation10 + $0x70] sm:$0xff]
      %v2752 = vld [vmem:[#allocation10 + $0x78] sm:$0xff]
      %2753 = vrot.lane.b32.xlu0 %v2401, 1
      %v2754 = vpop.permute.xlu0 %2753
      %2755 = vrot.lane.b32.xlu0 %v2402, 1
      %v2756 = vpop.permute.xlu0 %2755
      %2757 = vrot.lane.b32.xlu0 %v2403, 1
      %v2758 = vpop.permute.xlu0 %2757
      %2759 = vrot.lane.b32.xlu0 %v2404, 1
      %v2760 = vpop.permute.xlu0 %2759
      %2761 = vrot.lane.b32.xlu0 %v2405, 1
      %v2762 = vpop.permute.xlu0 %2761
      %2763 = vrot.lane.b32.xlu0 %v2406, 1
      %v2764 = vpop.permute.xlu0 %2763
      %2765 = vrot.lane.b32.xlu0 %v2407, 1
      %v2766 = vpop.permute.xlu0 %2765
      %2767 = vrot.lane.b32.xlu0 %v2408, 1
      %v2768 = vpop.permute.xlu0 %2767
      %2769 = vrot.lane.b32.xlu0 %v2409, 1
      %v2770 = vpop.permute.xlu0 %2769
      %2771 = vrot.lane.b32.xlu0 %v2410, 1
      %v2772 = vpop.permute.xlu0 %2771
      %2773 = vrot.lane.b32.xlu0 %v2411, 1
      %v2774 = vpop.permute.xlu0 %2773
      %2775 = vrot.lane.b32.xlu0 %v2412, 1
      %v2776 = vpop.permute.xlu0 %2775
      %2777 = vrot.lane.b32.xlu0 %v2413, 1
      %v2778 = vpop.permute.xlu0 %2777
      %2779 = vrot.lane.b32.xlu0 %v2414, 1
      %v2780 = vpop.permute.xlu0 %2779
      %2781 = vrot.lane.b32.xlu0 %v2415, 1
      %v2782 = vpop.permute.xlu0 %2781
      %2783 = vrot.lane.b32.xlu0 %v2416, 1
      %v2784 = vpop.permute.xlu0 %2783
      %v2785 = vmul.f32 %v2737, %v2754
      %v2786 = vmul.f32 %v2738, %v2756
      %v2787 = vmul.f32 %v2739, %v2758
      %v2788 = vmul.f32 %v2740, %v2760
      %v2789 = vmul.f32 %v2741, %v2762
      %v2790 = vmul.f32 %v2742, %v2764
      %v2791 = vmul.f32 %v2743, %v2766
      %v2792 = vmul.f32 %v2744, %v2768
      %v2793 = vmul.f32 %v2745, %v2770
      %v2794 = vmul.f32 %v2746, %v2772
      %v2795 = vmul.f32 %v2747, %v2774
      %v2796 = vmul.f32 %v2748, %v2776
      %v2797 = vmul.f32 %v2749, %v2778
      %v2798 = vmul.f32 %v2750, %v2780
      %v2799 = vmul.f32 %v2751, %v2782
      %v2800 = vmul.f32 %v2752, %v2784
      %v2801 = vadd.f32 %v2721, %v2785
      %v2802 = vadd.f32 %v2722, %v2786
      %v2803 = vadd.f32 %v2723, %v2787
      %v2804 = vadd.f32 %v2724, %v2788
      %v2805 = vadd.f32 %v2725, %v2789
      %v2806 = vadd.f32 %v2726, %v2790
      %v2807 = vadd.f32 %v2727, %v2791
      %v2808 = vadd.f32 %v2728, %v2792
      %v2809 = vadd.f32 %v2729, %v2793
      %v2810 = vadd.f32 %v2730, %v2794
      %v2811 = vadd.f32 %v2731, %v2795
      %v2812 = vadd.f32 %v2732, %v2796
      %v2813 = vadd.f32 %v2733, %v2797
      %v2814 = vadd.f32 %v2734, %v2798
      %v2815 = vadd.f32 %v2735, %v2799
      %v2816 = vadd.f32 %v2736, %v2800
      %v2817 = vsub.f32 0.0, %v2801
      %v2818 = vsub.f32 0.0, %v2802
      %v2819 = vsub.f32 0.0, %v2803
      %v2820 = vsub.f32 0.0, %v2804
      %v2821 = vsub.f32 0.0, %v2805
      %v2822 = vsub.f32 0.0, %v2806
      %v2823 = vsub.f32 0.0, %v2807
      %v2824 = vsub.f32 0.0, %v2808
      %v2825 = vsub.f32 0.0, %v2809
      %v2826 = vsub.f32 0.0, %v2810
      %v2827 = vsub.f32 0.0, %v2811
      %v2828 = vsub.f32 0.0, %v2812
      %v2829 = vsub.f32 0.0, %v2813
      %v2830 = vsub.f32 0.0, %v2814
      %v2831 = vsub.f32 0.0, %v2815
      %v2832 = vsub.f32 0.0, %v2816
      %v2833 = vmul.f32 %v2817, 1.442695
      %v2834 = vpow.pop %v2833
      %v2835 = vmul.f32 %v2818, 1.442695
      %v2836 = vpow.pop %v2835
      %v2837 = vmul.f32 %v2819, 1.442695
      %v2838 = vpow.pop %v2837
      %v2839 = vmul.f32 %v2820, 1.442695
      %v2840 = vpow.pop %v2839
      %v2841 = vmul.f32 %v2821, 1.442695
      %v2842 = vpow.pop %v2841
      %v2843 = vmul.f32 %v2822, 1.442695
      %v2844 = vpow.pop %v2843
      %v2845 = vmul.f32 %v2823, 1.442695
      %v2846 = vpow.pop %v2845
      %v2847 = vmul.f32 %v2824, 1.442695
      %v2848 = vpow.pop %v2847
      %v2849 = vmul.f32 %v2825, 1.442695
      %v2850 = vpow.pop %v2849
      %v2851 = vmul.f32 %v2826, 1.442695
      %v2852 = vpow.pop %v2851
      %v2853 = vmul.f32 %v2827, 1.442695
      %v2854 = vpow.pop %v2853
      %v2855 = vmul.f32 %v2828, 1.442695
      %v2856 = vpow.pop %v2855
      %v2857 = vmul.f32 %v2829, 1.442695
      %v2858 = vpow.pop %v2857
      %v2859 = vmul.f32 %v2830, 1.442695
      %v2860 = vpow.pop %v2859
      %v2861 = vmul.f32 %v2831, 1.442695
      %v2862 = vpow.pop %v2861
      %v2863 = vmul.f32 %v2832, 1.442695
      %v2864 = vpow.pop %v2863
      %v2865 = vadd.f32 %v2834, 1.0
      %v2866 = vadd.f32 %v2836, 1.0
      %v2867 = vadd.f32 %v2838, 1.0
      %v2868 = vadd.f32 %v2840, 1.0
      %v2869 = vadd.f32 %v2842, 1.0
      %v2870 = vadd.f32 %v2844, 1.0
      %v2871 = vadd.f32 %v2846, 1.0
      %v2872 = vadd.f32 %v2848, 1.0
      %v2873 = vadd.f32 %v2850, 1.0
      %v2874 = vadd.f32 %v2852, 1.0
      %v2875 = vadd.f32 %v2854, 1.0
      %v2876 = vadd.f32 %v2856, 1.0
      %v2877 = vadd.f32 %v2858, 1.0
      %v2878 = vadd.f32 %v2860, 1.0
      %v2879 = vadd.f32 %v2862, 1.0
      %v2880 = vadd.f32 %v2864, 1.0
      %v2881 = vrcp.pop %v2865
      %v2882 = vrcp.pop %v2866
      %v2883 = vrcp.pop %v2867
      %v2884 = vrcp.pop %v2868
      %v2885 = vrcp.pop %v2869
      %v2886 = vrcp.pop %v2870
      %v2887 = vrcp.pop %v2871
      %v2888 = vrcp.pop %v2872
      %v2889 = vrcp.pop %v2873
      %v2890 = vrcp.pop %v2874
      %v2891 = vrcp.pop %v2875
      %v2892 = vrcp.pop %v2876
      %v2893 = vrcp.pop %v2877
      %v2894 = vrcp.pop %v2878
      %v2895 = vrcp.pop %v2879
      %v2896 = vrcp.pop %v2880
      %v2897 = vmul.f32 %v2881, 0.5
      %v2898 = vmul.f32 %v2882, 0.5
      %v2899 = vmul.f32 %v2883, 0.5
      %v2900 = vmul.f32 %v2884, 0.5
      %v2901 = vmul.f32 %v2885, 0.5
      %v2902 = vmul.f32 %v2886, 0.5
      %v2903 = vmul.f32 %v2887, 0.5
      %v2904 = vmul.f32 %v2888, 0.5
      %v2905 = vmul.f32 %v2889, 0.5
      %v2906 = vmul.f32 %v2890, 0.5
      %v2907 = vmul.f32 %v2891, 0.5
      %v2908 = vmul.f32 %v2892, 0.5
      %v2909 = vmul.f32 %v2893, 0.5
      %v2910 = vmul.f32 %v2894, 0.5
      %v2911 = vmul.f32 %v2895, 0.5
      %v2912 = vmul.f32 %v2896, 0.5
      %v2913 = vadd.f32 %v2369, %v2897
      %v2914 = vadd.f32 %v2370, %v2898
      %v2915 = vadd.f32 %v2371, %v2899
      %v2916 = vadd.f32 %v2372, %v2900
      %v2917 = vadd.f32 %v2373, %v2901
      %v2918 = vadd.f32 %v2374, %v2902
      %v2919 = vadd.f32 %v2375, %v2903
      %v2920 = vadd.f32 %v2376, %v2904
      %v2921 = vadd.f32 %v2377, %v2905
      %v2922 = vadd.f32 %v2378, %v2906
      %v2923 = vadd.f32 %v2379, %v2907
      %v2924 = vadd.f32 %v2380, %v2908
      %v2925 = vadd.f32 %v2381, %v2909
      %v2926 = vadd.f32 %v2382, %v2910
      %v2927 = vadd.f32 %v2383, %v2911
      %v2928 = vadd.f32 %v2384, %v2912
      %2929 = vst [vmem:[#allocation11] sm:$0xff] %v2913
      %2930 = vst [vmem:[#allocation11 + $0x8] sm:$0xff] %v2914
      %2931 = vst [vmem:[#allocation11 + $0x10] sm:$0xff] %v2915
      %2932 = vst [vmem:[#allocation11 + $0x18] sm:$0xff] %v2916
      %2933 = vst [vmem:[#allocation11 + $0x20] sm:$0xff] %v2917
      %2934 = vst [vmem:[#allocation11 + $0x28] sm:$0xff] %v2918
      %2935 = vst [vmem:[#allocation11 + $0x30] sm:$0xff] %v2919
      %2936 = vst [vmem:[#allocation11 + $0x38] sm:$0xff] %v2920
      %2937 = vst [vmem:[#allocation11 + $0x40] sm:$0xff] %v2921
      %2938 = vst [vmem:[#allocation11 + $0x48] sm:$0xff] %v2922
      %2939 = vst [vmem:[#allocation11 + $0x50] sm:$0xff] %v2923
      %2940 = vst [vmem:[#allocation11 + $0x58] sm:$0xff] %v2924
      %2941 = vst [vmem:[#allocation11 + $0x60] sm:$0xff] %v2925
      %2942 = vst [vmem:[#allocation11 + $0x68] sm:$0xff] %v2926
      %2943 = vst [vmem:[#allocation11 + $0x70] sm:$0xff] %v2927
      %2944 = vst [vmem:[#allocation11 + $0x78] sm:$0xff] %v2928
    $region59: #{tpu_custom_call.1} parent=1 // loop_footer
      %s2352 = sadd.s32 1, %s2348
    $region60: #{tpu_custom_call.1} parent=1 // loop_footer_branch
      %2347 = sbr.rel target = $region56
    $region61: #{tpu_custom_call.1} parent=1 // loop_exit
      _
    %v2945 = vld [vmem:[#allocation11] sm:$0xff]
    %v2946 = vld [vmem:[#allocation11 + $0x8] sm:$0xff]
    %v2947 = vld [vmem:[#allocation11 + $0x10] sm:$0xff]
    %v2948 = vld [vmem:[#allocation11 + $0x18] sm:$0xff]
    %v2949 = vld [vmem:[#allocation11 + $0x20] sm:$0xff]
    %v2950 = vld [vmem:[#allocation11 + $0x28] sm:$0xff]
    %v2951 = vld [vmem:[#allocation11 + $0x30] sm:$0xff]
    %v2952 = vld [vmem:[#allocation11 + $0x38] sm:$0xff]
    %v2953 = vld [vmem:[#allocation11 + $0x40] sm:$0xff]
    %v2954 = vld [vmem:[#allocation11 + $0x48] sm:$0xff]
    %v2955 = vld [vmem:[#allocation11 + $0x50] sm:$0xff]
    %v2956 = vld [vmem:[#allocation11 + $0x58] sm:$0xff]
    %v2957 = vld [vmem:[#allocation11 + $0x60] sm:$0xff]
    %v2958 = vld [vmem:[#allocation11 + $0x68] sm:$0xff]
    %v2959 = vld [vmem:[#allocation11 + $0x70] sm:$0xff]
    %v2960 = vld [vmem:[#allocation11 + $0x78] sm:$0xff]
    %v2961 = vmul.f32 %v2945, 2.0
    %v2962 = vmul.f32 %v2946, 2.0
    %v2963 = vmul.f32 %v2947, 2.0
    %v2964 = vmul.f32 %v2948, 2.0
    %v2965 = vmul.f32 %v2949, 2.0
    %v2966 = vmul.f32 %v2950, 2.0
    %v2967 = vmul.f32 %v2951, 2.0
    %v2968 = vmul.f32 %v2952, 2.0
    %v2969 = vmul.f32 %v2953, 2.0
    %v2970 = vmul.f32 %v2954, 2.0
    %v2971 = vmul.f32 %v2955, 2.0
    %v2972 = vmul.f32 %v2956, 2.0
    %v2973 = vmul.f32 %v2957, 2.0
    %v2974 = vmul.f32 %v2958, 2.0
    %v2975 = vmul.f32 %v2959, 2.0
    %v2976 = vmul.f32 %v2960, 2.0
    %v2977 = vsub.f32 %v2961, 1.0
    %v2978 = vsub.f32 %v2962, 1.0
    %v2979 = vsub.f32 %v2963, 1.0
    %v2980 = vsub.f32 %v2964, 1.0
    %v2981 = vsub.f32 %v2965, 1.0
    %v2982 = vsub.f32 %v2966, 1.0
    %v2983 = vsub.f32 %v2967, 1.0
    %v2984 = vsub.f32 %v2968, 1.0
    %v2985 = vsub.f32 %v2969, 1.0
    %v2986 = vsub.f32 %v2970, 1.0
    %v2987 = vsub.f32 %v2971, 1.0
    %v2988 = vsub.f32 %v2972, 1.0
    %v2989 = vsub.f32 %v2973, 1.0
    %v2990 = vsub.f32 %v2974, 1.0
    %v2991 = vsub.f32 %v2975, 1.0
    %v2992 = vsub.f32 %v2976, 1.0
    %v2993 = vld [vmem:[#allocation2] sm:$0xff]
    %v2994 = vld [vmem:[#allocation2 + $0x8] sm:$0xff]
    %v2995 = vld [vmem:[#allocation2 + $0x10] sm:$0xff]
    %v2996 = vld [vmem:[#allocation2 + $0x18] sm:$0xff]
    %v2997 = vld [vmem:[#allocation2 + $0x20] sm:$0xff]
    %v2998 = vld [vmem:[#allocation2 + $0x28] sm:$0xff]
    %v2999 = vld [vmem:[#allocation2 + $0x30] sm:$0xff]
    %v3000 = vld [vmem:[#allocation2 + $0x38] sm:$0xff]
    %v3001 = vld [vmem:[#allocation2 + $0x40] sm:$0xff]
    %v3002 = vld [vmem:[#allocation2 + $0x48] sm:$0xff]
    %v3003 = vld [vmem:[#allocation2 + $0x50] sm:$0xff]
    %v3004 = vld [vmem:[#allocation2 + $0x58] sm:$0xff]
    %v3005 = vld [vmem:[#allocation2 + $0x60] sm:$0xff]
    %v3006 = vld [vmem:[#allocation2 + $0x68] sm:$0xff]
    %v3007 = vld [vmem:[#allocation2 + $0x70] sm:$0xff]
    %v3008 = vld [vmem:[#allocation2 + $0x78] sm:$0xff]
    %v3009 = vld [vmem:[#allocation3] sm:$0xff]
    %v3010 = vld [vmem:[#allocation3 + $0x8] sm:$0xff]
    %v3011 = vld [vmem:[#allocation3 + $0x10] sm:$0xff]
    %v3012 = vld [vmem:[#allocation3 + $0x18] sm:$0xff]
    %v3013 = vld [vmem:[#allocation3 + $0x20] sm:$0xff]
    %v3014 = vld [vmem:[#allocation3 + $0x28] sm:$0xff]
    %v3015 = vld [vmem:[#allocation3 + $0x30] sm:$0xff]
    %v3016 = vld [vmem:[#allocation3 + $0x38] sm:$0xff]
    %v3017 = vld [vmem:[#allocation3 + $0x40] sm:$0xff]
    %v3018 = vld [vmem:[#allocation3 + $0x48] sm:$0xff]
    %v3019 = vld [vmem:[#allocation3 + $0x50] sm:$0xff]
    %v3020 = vld [vmem:[#allocation3 + $0x58] sm:$0xff]
    %v3021 = vld [vmem:[#allocation3 + $0x60] sm:$0xff]
    %v3022 = vld [vmem:[#allocation3 + $0x68] sm:$0xff]
    %v3023 = vld [vmem:[#allocation3 + $0x70] sm:$0xff]
    %v3024 = vld [vmem:[#allocation3 + $0x78] sm:$0xff]
    %v3025 = vmul.f32 %v3009, %v2978
    %v3026 = vmul.f32 %v3010, %v2979
    %v3027 = vmul.f32 %v3011, %v2980
    %v3028 = vmul.f32 %v3012, %v2981
    %v3029 = vmul.f32 %v3013, %v2982
    %v3030 = vmul.f32 %v3014, %v2983
    %v3031 = vmul.f32 %v3015, %v2984
    %v3032 = vmul.f32 %v3016, 0.0
    %v3033 = vmul.f32 %v3017, %v2986
    %v3034 = vmul.f32 %v3018, %v2987
    %v3035 = vmul.f32 %v3019, %v2988
    %v3036 = vmul.f32 %v3020, %v2989
    %v3037 = vmul.f32 %v3021, %v2990
    %v3038 = vmul.f32 %v3022, %v2991
    %v3039 = vmul.f32 %v3023, %v2992
    %v3040 = vmul.f32 %v3024, 0.0
    %v3041 = vadd.f32 %v2993, %v3025
    %v3042 = vadd.f32 %v2994, %v3026
    %v3043 = vadd.f32 %v2995, %v3027
    %v3044 = vadd.f32 %v2996, %v3028
    %v3045 = vadd.f32 %v2997, %v3029
    %v3046 = vadd.f32 %v2998, %v3030
    %v3047 = vadd.f32 %v2999, %v3031
    %v3048 = vadd.f32 %v3000, %v3032
    %v3049 = vadd.f32 %v3001, %v3033
    %v3050 = vadd.f32 %v3002, %v3034
    %v3051 = vadd.f32 %v3003, %v3035
    %v3052 = vadd.f32 %v3004, %v3036
    %v3053 = vadd.f32 %v3005, %v3037
    %v3054 = vadd.f32 %v3006, %v3038
    %v3055 = vadd.f32 %v3007, %v3039
    %v3056 = vadd.f32 %v3008, %v3040
    %v3057 = vld [vmem:[#allocation6] sm:$0xff]
    %v3058 = vld [vmem:[#allocation6 + $0x8] sm:$0xff]
    %v3059 = vld [vmem:[#allocation6 + $0x10] sm:$0xff]
    %v3060 = vld [vmem:[#allocation6 + $0x18] sm:$0xff]
    %v3061 = vld [vmem:[#allocation6 + $0x20] sm:$0xff]
    %v3062 = vld [vmem:[#allocation6 + $0x28] sm:$0xff]
    %v3063 = vld [vmem:[#allocation6 + $0x30] sm:$0xff]
    %v3064 = vld [vmem:[#allocation6 + $0x38] sm:$0xff]
    %v3065 = vld [vmem:[#allocation6 + $0x40] sm:$0xff]
    %v3066 = vld [vmem:[#allocation6 + $0x48] sm:$0xff]
    %v3067 = vld [vmem:[#allocation6 + $0x50] sm:$0xff]
    %v3068 = vld [vmem:[#allocation6 + $0x58] sm:$0xff]
    %v3069 = vld [vmem:[#allocation6 + $0x60] sm:$0xff]
    %v3070 = vld [vmem:[#allocation6 + $0x68] sm:$0xff]
    %v3071 = vld [vmem:[#allocation6 + $0x70] sm:$0xff]
    %v3072 = vld [vmem:[#allocation6 + $0x78] sm:$0xff]
    %v3073 = vmul.f32 %v3057, 0.0
    %v3074 = vmul.f32 %v3058, %v2977
    %v3075 = vmul.f32 %v3059, %v2978
    %v3076 = vmul.f32 %v3060, %v2979
    %v3077 = vmul.f32 %v3061, %v2980
    %v3078 = vmul.f32 %v3062, %v2981
    %v3079 = vmul.f32 %v3063, %v2982
    %v3080 = vmul.f32 %v3064, %v2983
    %v3081 = vmul.f32 %v3065, 0.0
    %v3082 = vmul.f32 %v3066, %v2985
    %v3083 = vmul.f32 %v3067, %v2986
    %v3084 = vmul.f32 %v3068, %v2987
    %v3085 = vmul.f32 %v3069, %v2988
    %v3086 = vmul.f32 %v3070, %v2989
    %v3087 = vmul.f32 %v3071, %v2990
    %v3088 = vmul.f32 %v3072, %v2991
    %v3089 = vadd.f32 %v3041, %v3073
    %v3090 = vadd.f32 %v3042, %v3074
    %v3091 = vadd.f32 %v3043, %v3075
    %v3092 = vadd.f32 %v3044, %v3076
    %v3093 = vadd.f32 %v3045, %v3077
    %v3094 = vadd.f32 %v3046, %v3078
    %v3095 = vadd.f32 %v3047, %v3079
    %v3096 = vadd.f32 %v3048, %v3080
    %v3097 = vadd.f32 %v3049, %v3081
    %v3098 = vadd.f32 %v3050, %v3082
    %v3099 = vadd.f32 %v3051, %v3083
    %v3100 = vadd.f32 %v3052, %v3084
    %v3101 = vadd.f32 %v3053, %v3085
    %v3102 = vadd.f32 %v3054, %v3086
    %v3103 = vadd.f32 %v3055, %v3087
    %v3104 = vadd.f32 %v3056, %v3088
    %v3105 = vld [vmem:[#allocation7] sm:$0xff]
    %v3106 = vld [vmem:[#allocation7 + $0x8] sm:$0xff]
    %v3107 = vld [vmem:[#allocation7 + $0x10] sm:$0xff]
    %v3108 = vld [vmem:[#allocation7 + $0x18] sm:$0xff]
    %v3109 = vld [vmem:[#allocation7 + $0x20] sm:$0xff]
    %v3110 = vld [vmem:[#allocation7 + $0x28] sm:$0xff]
    %v3111 = vld [vmem:[#allocation7 + $0x30] sm:$0xff]
    %v3112 = vld [vmem:[#allocation7 + $0x38] sm:$0xff]
    %v3113 = vld [vmem:[#allocation7 + $0x40] sm:$0xff]
    %v3114 = vld [vmem:[#allocation7 + $0x48] sm:$0xff]
    %v3115 = vld [vmem:[#allocation7 + $0x50] sm:$0xff]
    %v3116 = vld [vmem:[#allocation7 + $0x58] sm:$0xff]
    %v3117 = vld [vmem:[#allocation7 + $0x60] sm:$0xff]
    %v3118 = vld [vmem:[#allocation7 + $0x68] sm:$0xff]
    %v3119 = vld [vmem:[#allocation7 + $0x70] sm:$0xff]
    %v3120 = vld [vmem:[#allocation7 + $0x78] sm:$0xff]
    %v3121 = vrot.slane %v2977, 1
    %v3122 = vrot.slane %v2978, 1
    %v3123 = vrot.slane %v2979, 1
    %v3124 = vrot.slane %v2980, 1
    %v3125 = vrot.slane %v2981, 1
    %v3126 = vrot.slane %v2982, 1
    %v3127 = vrot.slane %v2983, 1
    %v3128 = vrot.slane %v2984, 1
    %v3129 = vrot.slane %v2985, 1
    %v3130 = vrot.slane %v2986, 1
    %v3131 = vrot.slane %v2987, 1
    %v3132 = vrot.slane %v2988, 1
    %v3133 = vrot.slane %v2989, 1
    %v3134 = vrot.slane %v2990, 1
    %v3135 = vrot.slane %v2991, 1
    %v3136 = vrot.slane %v2992, 1
    %v3137 = vmul.f32 %v3105, %v3121
    %v3138 = vmul.f32 %v3106, %v3122
    %v3139 = vmul.f32 %v3107, %v3123
    %v3140 = vmul.f32 %v3108, %v3124
    %v3141 = vmul.f32 %v3109, %v3125
    %v3142 = vmul.f32 %v3110, %v3126
    %v3143 = vmul.f32 %v3111, %v3127
    %v3144 = vmul.f32 %v3112, %v3128
    %v3145 = vmul.f32 %v3113, %v3129
    %v3146 = vmul.f32 %v3114, %v3130
    %v3147 = vmul.f32 %v3115, %v3131
    %v3148 = vmul.f32 %v3116, %v3132
    %v3149 = vmul.f32 %v3117, %v3133
    %v3150 = vmul.f32 %v3118, %v3134
    %v3151 = vmul.f32 %v3119, %v3135
    %v3152 = vmul.f32 %v3120, %v3136
    %v3153 = vadd.f32 %v3089, %v3137
    %v3154 = vadd.f32 %v3090, %v3138
    %v3155 = vadd.f32 %v3091, %v3139
    %v3156 = vadd.f32 %v3092, %v3140
    %v3157 = vadd.f32 %v3093, %v3141
    %v3158 = vadd.f32 %v3094, %v3142
    %v3159 = vadd.f32 %v3095, %v3143
    %v3160 = vadd.f32 %v3096, %v3144
    %v3161 = vadd.f32 %v3097, %v3145
    %v3162 = vadd.f32 %v3098, %v3146
    %v3163 = vadd.f32 %v3099, %v3147
    %v3164 = vadd.f32 %v3100, %v3148
    %v3165 = vadd.f32 %v3101, %v3149
    %v3166 = vadd.f32 %v3102, %v3150
    %v3167 = vadd.f32 %v3103, %v3151
    %v3168 = vadd.f32 %v3104, %v3152
    %v3169 = vld [vmem:[#allocation8] sm:$0xff]
    %v3170 = vld [vmem:[#allocation8 + $0x8] sm:$0xff]
    %v3171 = vld [vmem:[#allocation8 + $0x10] sm:$0xff]
    %v3172 = vld [vmem:[#allocation8 + $0x18] sm:$0xff]
    %v3173 = vld [vmem:[#allocation8 + $0x20] sm:$0xff]
    %v3174 = vld [vmem:[#allocation8 + $0x28] sm:$0xff]
    %v3175 = vld [vmem:[#allocation8 + $0x30] sm:$0xff]
    %v3176 = vld [vmem:[#allocation8 + $0x38] sm:$0xff]
    %v3177 = vld [vmem:[#allocation8 + $0x40] sm:$0xff]
    %v3178 = vld [vmem:[#allocation8 + $0x48] sm:$0xff]
    %v3179 = vld [vmem:[#allocation8 + $0x50] sm:$0xff]
    %v3180 = vld [vmem:[#allocation8 + $0x58] sm:$0xff]
    %v3181 = vld [vmem:[#allocation8 + $0x60] sm:$0xff]
    %v3182 = vld [vmem:[#allocation8 + $0x68] sm:$0xff]
    %v3183 = vld [vmem:[#allocation8 + $0x70] sm:$0xff]
    %v3184 = vld [vmem:[#allocation8 + $0x78] sm:$0xff]
    %v3185 = vrot.slane %v2977, 7
    %v3186 = vrot.slane %v2978, 7
    %v3187 = vrot.slane %v2979, 7
    %v3188 = vrot.slane %v2980, 7
    %v3189 = vrot.slane %v2981, 7
    %v3190 = vrot.slane %v2982, 7
    %v3191 = vrot.slane %v2983, 7
    %v3192 = vrot.slane %v2984, 7
    %v3193 = vrot.slane %v2985, 7
    %v3194 = vrot.slane %v2986, 7
    %v3195 = vrot.slane %v2987, 7
    %v3196 = vrot.slane %v2988, 7
    %v3197 = vrot.slane %v2989, 7
    %v3198 = vrot.slane %v2990, 7
    %v3199 = vrot.slane %v2991, 7
    %v3200 = vrot.slane %v2992, 7
    %v3201 = vmul.f32 %v3169, %v3185
    %v3202 = vmul.f32 %v3170, %v3186
    %v3203 = vmul.f32 %v3171, %v3187
    %v3204 = vmul.f32 %v3172, %v3188
    %v3205 = vmul.f32 %v3173, %v3189
    %v3206 = vmul.f32 %v3174, %v3190
    %v3207 = vmul.f32 %v3175, %v3191
    %v3208 = vmul.f32 %v3176, %v3192
    %v3209 = vmul.f32 %v3177, %v3193
    %v3210 = vmul.f32 %v3178, %v3194
    %v3211 = vmul.f32 %v3179, %v3195
    %v3212 = vmul.f32 %v3180, %v3196
    %v3213 = vmul.f32 %v3181, %v3197
    %v3214 = vmul.f32 %v3182, %v3198
    %v3215 = vmul.f32 %v3183, %v3199
    %v3216 = vmul.f32 %v3184, %v3200
    %v3217 = vadd.f32 %v3153, %v3201
    %v3218 = vadd.f32 %v3154, %v3202
    %v3219 = vadd.f32 %v3155, %v3203
    %v3220 = vadd.f32 %v3156, %v3204
    %v3221 = vadd.f32 %v3157, %v3205
    %v3222 = vadd.f32 %v3158, %v3206
    %v3223 = vadd.f32 %v3159, %v3207
    %v3224 = vadd.f32 %v3160, %v3208
    %v3225 = vadd.f32 %v3161, %v3209
    %v3226 = vadd.f32 %v3162, %v3210
    %v3227 = vadd.f32 %v3163, %v3211
    %v3228 = vadd.f32 %v3164, %v3212
    %v3229 = vadd.f32 %v3165, %v3213
    %v3230 = vadd.f32 %v3166, %v3214
    %v3231 = vadd.f32 %v3167, %v3215
    %v3232 = vadd.f32 %v3168, %v3216
    %v3233 = vld [vmem:[#allocation9] sm:$0xff]
    %v3234 = vld [vmem:[#allocation9 + $0x8] sm:$0xff]
    %v3235 = vld [vmem:[#allocation9 + $0x10] sm:$0xff]
    %v3236 = vld [vmem:[#allocation9 + $0x18] sm:$0xff]
    %v3237 = vld [vmem:[#allocation9 + $0x20] sm:$0xff]
    %v3238 = vld [vmem:[#allocation9 + $0x28] sm:$0xff]
    %v3239 = vld [vmem:[#allocation9 + $0x30] sm:$0xff]
    %v3240 = vld [vmem:[#allocation9 + $0x38] sm:$0xff]
    %v3241 = vld [vmem:[#allocation9 + $0x40] sm:$0xff]
    %v3242 = vld [vmem:[#allocation9 + $0x48] sm:$0xff]
    %v3243 = vld [vmem:[#allocation9 + $0x50] sm:$0xff]
    %v3244 = vld [vmem:[#allocation9 + $0x58] sm:$0xff]
    %v3245 = vld [vmem:[#allocation9 + $0x60] sm:$0xff]
    %v3246 = vld [vmem:[#allocation9 + $0x68] sm:$0xff]
    %v3247 = vld [vmem:[#allocation9 + $0x70] sm:$0xff]
    %v3248 = vld [vmem:[#allocation9 + $0x78] sm:$0xff]
    %3249 = vrot.lane.b32.xlu0 %v2977, 127
    %v3250 = vpop.permute.xlu0 %3249
    %3251 = vrot.lane.b32.xlu0 %v2978, 127
    %v3252 = vpop.permute.xlu0 %3251
    %3253 = vrot.lane.b32.xlu0 %v2979, 127
    %v3254 = vpop.permute.xlu0 %3253
    %3255 = vrot.lane.b32.xlu0 %v2980, 127
    %v3256 = vpop.permute.xlu0 %3255
    %3257 = vrot.lane.b32.xlu0 %v2981, 127
    %v3258 = vpop.permute.xlu0 %3257
    %3259 = vrot.lane.b32.xlu0 %v2982, 127
    %v3260 = vpop.permute.xlu0 %3259
    %3261 = vrot.lane.b32.xlu0 %v2983, 127
    %v3262 = vpop.permute.xlu0 %3261
    %3263 = vrot.lane.b32.xlu0 %v2984, 127
    %v3264 = vpop.permute.xlu0 %3263
    %3265 = vrot.lane.b32.xlu0 %v2985, 127
    %v3266 = vpop.permute.xlu0 %3265
    %3267 = vrot.lane.b32.xlu0 %v2986, 127
    %v3268 = vpop.permute.xlu0 %3267
    %3269 = vrot.lane.b32.xlu0 %v2987, 127
    %v3270 = vpop.permute.xlu0 %3269
    %3271 = vrot.lane.b32.xlu0 %v2988, 127
    %v3272 = vpop.permute.xlu0 %3271
    %3273 = vrot.lane.b32.xlu0 %v2989, 127
    %v3274 = vpop.permute.xlu0 %3273
    %3275 = vrot.lane.b32.xlu0 %v2990, 127
    %v3276 = vpop.permute.xlu0 %3275
    %3277 = vrot.lane.b32.xlu0 %v2991, 127
    %v3278 = vpop.permute.xlu0 %3277
    %3279 = vrot.lane.b32.xlu0 %v2992, 127
    %v3280 = vpop.permute.xlu0 %3279
    %v3281 = vmul.f32 %v3233, %v3250
    %v3282 = vmul.f32 %v3234, %v3252
    %v3283 = vmul.f32 %v3235, %v3254
    %v3284 = vmul.f32 %v3236, %v3256
    %v3285 = vmul.f32 %v3237, %v3258
    %v3286 = vmul.f32 %v3238, %v3260
    %v3287 = vmul.f32 %v3239, %v3262
    %v3288 = vmul.f32 %v3240, %v3264
    %v3289 = vmul.f32 %v3241, %v3266
    %v3290 = vmul.f32 %v3242, %v3268
    %v3291 = vmul.f32 %v3243, %v3270
    %v3292 = vmul.f32 %v3244, %v3272
    %v3293 = vmul.f32 %v3245, %v3274
    %v3294 = vmul.f32 %v3246, %v3276
    %v3295 = vmul.f32 %v3247, %v3278
    %v3296 = vmul.f32 %v3248, %v3280
    %v3297 = vadd.f32 %v3217, %v3281
    %v3298 = vadd.f32 %v3218, %v3282
    %v3299 = vadd.f32 %v3219, %v3283
    %v3300 = vadd.f32 %v3220, %v3284
    %v3301 = vadd.f32 %v3221, %v3285
    %v3302 = vadd.f32 %v3222, %v3286
    %v3303 = vadd.f32 %v3223, %v3287
    %v3304 = vadd.f32 %v3224, %v3288
    %v3305 = vadd.f32 %v3225, %v3289
    %v3306 = vadd.f32 %v3226, %v3290
    %v3307 = vadd.f32 %v3227, %v3291
    %v3308 = vadd.f32 %v3228, %v3292
    %v3309 = vadd.f32 %v3229, %v3293
    %v3310 = vadd.f32 %v3230, %v3294
    %v3311 = vadd.f32 %v3231, %v3295
    %v3312 = vadd.f32 %v3232, %v3296
    %v3313 = vld [vmem:[#allocation10] sm:$0xff]
    %v3314 = vld [vmem:[#allocation10 + $0x8] sm:$0xff]
    %v3315 = vld [vmem:[#allocation10 + $0x10] sm:$0xff]
    %v3316 = vld [vmem:[#allocation10 + $0x18] sm:$0xff]
    %v3317 = vld [vmem:[#allocation10 + $0x20] sm:$0xff]
    %v3318 = vld [vmem:[#allocation10 + $0x28] sm:$0xff]
    %v3319 = vld [vmem:[#allocation10 + $0x30] sm:$0xff]
    %v3320 = vld [vmem:[#allocation10 + $0x38] sm:$0xff]
    %v3321 = vld [vmem:[#allocation10 + $0x40] sm:$0xff]
    %v3322 = vld [vmem:[#allocation10 + $0x48] sm:$0xff]
    %v3323 = vld [vmem:[#allocation10 + $0x50] sm:$0xff]
    %v3324 = vld [vmem:[#allocation10 + $0x58] sm:$0xff]
    %v3325 = vld [vmem:[#allocation10 + $0x60] sm:$0xff]
    %v3326 = vld [vmem:[#allocation10 + $0x68] sm:$0xff]
    %v3327 = vld [vmem:[#allocation10 + $0x70] sm:$0xff]
    %v3328 = vld [vmem:[#allocation10 + $0x78] sm:$0xff]
    %3329 = vrot.lane.b32.xlu0 %v2977, 1
    %v3330 = vpop.permute.xlu0 %3329
    %3331 = vrot.lane.b32.xlu0 %v2978, 1
    %v3332 = vpop.permute.xlu0 %3331
    %3333 = vrot.lane.b32.xlu0 %v2979, 1
    %v3334 = vpop.permute.xlu0 %3333
    %3335 = vrot.lane.b32.xlu0 %v2980, 1
    %v3336 = vpop.permute.xlu0 %3335
    %3337 = vrot.lane.b32.xlu0 %v2981, 1
    %v3338 = vpop.permute.xlu0 %3337
    %3339 = vrot.lane.b32.xlu0 %v2982, 1
    %v3340 = vpop.permute.xlu0 %3339
    %3341 = vrot.lane.b32.xlu0 %v2983, 1
    %v3342 = vpop.permute.xlu0 %3341
    %3343 = vrot.lane.b32.xlu0 %v2984, 1
    %v3344 = vpop.permute.xlu0 %3343
    %3345 = vrot.lane.b32.xlu0 %v2985, 1
    %v3346 = vpop.permute.xlu0 %3345
    %3347 = vrot.lane.b32.xlu0 %v2986, 1
    %v3348 = vpop.permute.xlu0 %3347
    %3349 = vrot.lane.b32.xlu0 %v2987, 1
    %v3350 = vpop.permute.xlu0 %3349
    %3351 = vrot.lane.b32.xlu0 %v2988, 1
    %v3352 = vpop.permute.xlu0 %3351
    %3353 = vrot.lane.b32.xlu0 %v2989, 1
    %v3354 = vpop.permute.xlu0 %3353
    %3355 = vrot.lane.b32.xlu0 %v2990, 1
    %v3356 = vpop.permute.xlu0 %3355
    %3357 = vrot.lane.b32.xlu0 %v2991, 1
    %v3358 = vpop.permute.xlu0 %3357
    %3359 = vrot.lane.b32.xlu0 %v2992, 1
    %v3360 = vpop.permute.xlu0 %3359
    %v3361 = vmul.f32 %v3313, %v3330
    %v3362 = vmul.f32 %v3314, %v3332
    %v3363 = vmul.f32 %v3315, %v3334
    %v3364 = vmul.f32 %v3316, %v3336
    %v3365 = vmul.f32 %v3317, %v3338
    %v3366 = vmul.f32 %v3318, %v3340
    %v3367 = vmul.f32 %v3319, %v3342
    %v3368 = vmul.f32 %v3320, %v3344
    %v3369 = vmul.f32 %v3321, %v3346
    %v3370 = vmul.f32 %v3322, %v3348
    %v3371 = vmul.f32 %v3323, %v3350
    %v3372 = vmul.f32 %v3324, %v3352
    %v3373 = vmul.f32 %v3325, %v3354
    %v3374 = vmul.f32 %v3326, %v3356
    %v3375 = vmul.f32 %v3327, %v3358
    %v3376 = vmul.f32 %v3328, %v3360
    %v3377 = vadd.f32 %v3297, %v3361
    %v3378 = vadd.f32 %v3298, %v3362
    %v3379 = vadd.f32 %v3299, %v3363
    %v3380 = vadd.f32 %v3300, %v3364
    %v3381 = vadd.f32 %v3301, %v3365
    %v3382 = vadd.f32 %v3302, %v3366
    %v3383 = vadd.f32 %v3303, %v3367
    %v3384 = vadd.f32 %v3304, %v3368
    %v3385 = vadd.f32 %v3305, %v3369
    %v3386 = vadd.f32 %v3306, %v3370
    %v3387 = vadd.f32 %v3307, %v3371
    %v3388 = vadd.f32 %v3308, %v3372
    %v3389 = vadd.f32 %v3309, %v3373
    %v3390 = vadd.f32 %v3310, %v3374
    %v3391 = vadd.f32 %v3311, %v3375
    %v3392 = vadd.f32 %v3312, %v3376
    %3393 = vst [vmem:[#allocation19] sm:$0xff] %v3377
    %3394 = vst [vmem:[#allocation19 + $0x8] sm:$0xff] %v3378
    %3395 = vst [vmem:[#allocation19 + $0x10] sm:$0xff] %v3379
    %3396 = vst [vmem:[#allocation19 + $0x18] sm:$0xff] %v3380
    %3397 = vst [vmem:[#allocation19 + $0x20] sm:$0xff] %v3381
    %3398 = vst [vmem:[#allocation19 + $0x28] sm:$0xff] %v3382
    %3399 = vst [vmem:[#allocation19 + $0x30] sm:$0xff] %v3383
    %3400 = vst [vmem:[#allocation19 + $0x38] sm:$0xff] %v3384
    %3401 = vst [vmem:[#allocation19 + $0x40] sm:$0xff] %v3385
    %3402 = vst [vmem:[#allocation19 + $0x48] sm:$0xff] %v3386
    %3403 = vst [vmem:[#allocation19 + $0x50] sm:$0xff] %v3387
    %3404 = vst [vmem:[#allocation19 + $0x58] sm:$0xff] %v3388
    %3405 = vst [vmem:[#allocation19 + $0x60] sm:$0xff] %v3389
    %3406 = vst [vmem:[#allocation19 + $0x68] sm:$0xff] %v3390
    %3407 = vst [vmem:[#allocation19 + $0x70] sm:$0xff] %v3391
    %3408 = vst [vmem:[#allocation19 + $0x78] sm:$0xff] %v3392
    // Predicated region
    $region62: #{tpu_custom_call.1} parent=1 // pred_check
      _
    $region63: #{tpu_custom_call.1} parent=1 // pred_check_branch
      %3410 = sbr.rel (0) target = $region65
    $region64: #{tpu_custom_call.1} parent=1 // pred_region
      %3412 = vsyncadd [#allocation20], 0
      %s3413 = sshll.u32 [#allocation19], 4
      %s3414 = int_to_ptr.vmem [resolvable:$true] %s3413
      %s3415 = sshll.u32 %s4, 4
      %s3416 = int_to_ptr.hbm [resolvable:$true] %s3415
      %3421 = dma.vmem_to_hbm [thread:$0]  %s3414, 2048, %s3416, [#allocation20], 128, 128, 8
    $region65: #{tpu_custom_call.1} parent=1 // pred_fallthru
      _
    // Predicated region
    $region66: #{tpu_custom_call.1} parent=1 // pred_check
      _
    $region67: #{tpu_custom_call.1} parent=1 // pred_check_branch
      %3423 = sbr.rel (0) target = $region69
    $region68: #{tpu_custom_call.1} parent=1 // pred_region
      %3425 = dma.done [#allocation20], 2048
    $region69: #{tpu_custom_call.1} parent=1 // pred_fallthru
      _
    %3426 = vsyncpa [#allocation20], 1

</llo_original>
